<compile_context>
chip_gen: v7x
topology: tpu7x:2x2x1
jax: 0.10.0
libtpu: 0.0.40
codegen_flags: <defaults>
</compile_context>

<pallas_src>
import jax
import jax.numpy as jnp
import numpy as np
from jax.experimental import pallas as pl
from jax.experimental.pallas import tpu as pltpu

EPS = 1e-5  # nn.BatchNorm2d default eps


def make_resnet_block(N, H, W, C, params):
    """Build a fused ResNetBlock forward for fixed shapes + parameters."""
    w1, b1, g1, be1, w2, b2, g2, be2 = params

    Hp, Wp = H + 2, W + 2                 # spatially zero-padded grid
    R = N * Hp                            # packed rows  = batch * padded height
    Rpad = ((R + 7) // 8) * 8             # rows padded to a multiple of 8 (full vregs)
    L = Wp * C                            # packed lanes = padded width * channels
    Lpad = ((L + 127) // 128) * 128       # lanes padded to a multiple of 128
    count = float(N * H * W)              # BatchNorm per-channel element count

    # The lane-roll reduction tree needs Lpad to be a power-of-two multiple of C
    # so every lane of a channel's residue class is summed exactly once.
    q = Lpad // C
    assert Lpad % C == 0 and (q & (q - 1)) == 0, \
        "Lpad / C must be a power of two for the roll-tree channel reduction"

    # ---- host-side, build-once constants --------------------------------------
    # Column-shift matrices: S[kw][w+kw-1, w] = 1 for interior output columns w.
    S = np.zeros((3, Wp, Wp), np.float32)
    for kw in range(3):
        for w in range(1, Wp - 1):
            S[kw, w + kw - 1, w] = 1.0

    def band_weights(w_hwio):
        """[3,3,C,C] HWIO filter -> [3, Lpad, Lpad] banded column/channel-mix mats."""
        w_np = np.asarray(w_hwio, np.float32)
        mats = np.zeros((3, Lpad, Lpad), np.float32)
        for kh in range(3):
            m = np.zeros((L, L), np.float32)
            for kw in range(3):
                m += np.kron(S[kw], w_np[kh, kw])
            mats[kh, :L, :L] = m
        return jnp.asarray(mats)

    def lane_vec(v):
        """Per-channel vector [C] -> per-lane vector [Lpad] in the packed layout."""
        return np.pad(np.tile(np.asarray(v, np.float32), Wp), (0, Lpad - L))

    # Interior mask over the packed [Rpad, Lpad] layout (1 on real pixels only).
    m_np = np.zeros((N, Hp, Wp, C), np.float32)
    m_np[:, 1:H + 1, 1:W + 1, :] = 1.0
    mask_const = jnp.asarray(
        np.pad(m_np.reshape(R, L), ((0, Rpad - R), (0, Lpad - L))))

    w1_band = band_weights(w1)            # [3, Lpad, Lpad], ~192 KB
    w2_band = band_weights(w2)
    pv_const = jnp.asarray(np.stack(
        [lane_vec(b1), lane_vec(g1), lane_vec(be1),
         lane_vec(b2), lane_vec(g2), lane_vec(be2),
         np.zeros((Lpad,), np.float32),
         np.zeros((Lpad,), np.float32)]))                    # [8, Lpad]

    # ---- fused kernel ----------------------------------------------------------
    def kernel(x_ref, mask_ref, w1_ref, w2_ref, pv_ref, o_ref):
        x = x_ref[...]                    # [Rpad, Lpad]
        mask = mask_ref[...]              # [Rpad, Lpad]
        pv = pv_ref[...]                  # [8, Lpad]  (single load, value slices below)
        inv_count = 1.0 / count

        def conv(src, w_ref):
            # +-1 row taps via XLU sublane rotates.  Exact because every image has
            # a zero pad row above/below its interior rows and wrap-around only
            # touches rows the interior mask zeroes out.
            up = pltpu.roll(src, 1, axis=0)           # up[r] = src[r-1]
            dn = pltpu.roll(src, Rpad - 1, axis=0)    # dn[r] = src[r+1]
            acc = jnp.dot(up, w_ref[0], preferred_element_type=jnp.float32,
                          precision=jax.lax.Precision.HIGHEST)
            acc = acc + jnp.dot(src, w_ref[1], preferred_element_type=jnp.float32,
                                precision=jax.lax.Precision.HIGHEST)
            acc = acc + jnp.dot(dn, w_ref[2], preferred_element_type=jnp.float32,
                                precision=jax.lax.Precision.HIGHEST)
            return acc

        def bn_relu(v, g_row, be_row):
            # One-pass batch stats (sum, sum of squares).  Per-channel reduce AND
            # broadcast across the packed lanes via an exact lane-roll tree: after
            # log2(Lpad/C) doubling rolls every lane holds the total of its
            # channel's residue class (pad lanes contribute zeros).
            stats = jnp.concatenate(
                [jnp.sum(v, axis=0, keepdims=True),
                 jnp.sum(v * v, axis=0, keepdims=True)], axis=0)   # [2, Lpad]
            shift = C
            while shift < Lpad:
                stats = stats + pltpu.roll(stats, shift, axis=1)
                shift *= 2
            mean = stats[0:1, :] * inv_count
            var = jnp.maximum(stats[1:2, :] * inv_count - mean * mean, 0.0)
            out = (v - mean) * jax.lax.rsqrt(var + EPS) * g_row + be_row
            # Re-zero pad rows/cols: preserves the zero-pad invariant the rolled
            # conv taps rely on (and the final output padding).
            return jnp.maximum(out, 0.0) * mask

        # conv1 + BN1 + ReLU
        h = (conv(x, w1_ref) + pv[0:1, :]) * mask
        h = bn_relu(h, pv[1:2, :], pv[2:3, :])
        # conv2 + bias + residual, then BN2 + ReLU
        y = (conv(h, w2_ref) + pv[3:4, :] + x) * mask
        o_ref[...] = bn_relu(y, pv[4:5, :], pv[5:6, :])

    call = pl.pallas_call(
        kernel,
        out_shape=jax.ShapeDtypeStruct((Rpad, Lpad), jnp.float32),
        in_specs=[pl.BlockSpec(memory_space=pltpu.MemorySpace.VMEM)] * 5,
        out_specs=pl.BlockSpec(memory_space=pltpu.MemorySpace.VMEM),
    )

    @jax.jit
    def forward(x_nchw):
        # NCHW -> NHWC, spatial zero-pad, pack to [Rpad, Lpad] with zero pad rows/lanes.
        x = jnp.transpose(x_nchw, (0, 2, 3, 1))
        x = jnp.pad(x, ((0, 0), (1, 1), (1, 1), (0, 0))).reshape(R, L)
        x = jnp.pad(x, ((0, Rpad - R), (0, Lpad - L)))
        out = call(x, mask_const, w1_band, w2_band, pv_const)
        out = out[:R, :L].reshape(N, Hp, Wp, C)[:, 1:H + 1, 1:W + 1, :]
        return jnp.transpose(out, (0, 3, 1, 2))               # back to NCHW

    return forward


def reference(x_nchw, params):
    """Pure-JAX reference of ResNetBlock.forward (act='relu', training-mode BN)."""
    w1, b1, g1, be1, w2, b2, g2, be2 = params
    x = jnp.transpose(x_nchw, (0, 2, 3, 1))

    def conv(inp, w, b):
        y = jax.lax.conv_general_dilated(
            inp, w, (1, 1), 'SAME',
            dimension_numbers=('NHWC', 'HWIO', 'NHWC'),
            precision=jax.lax.Precision.HIGHEST)
        return y + b

    def bn(inp, g, be):
        m = jnp.mean(inp, axis=(0, 1, 2), keepdims=True)
        v = jnp.mean((inp - m) ** 2, axis=(0, 1, 2), keepdims=True)
        return (inp - m) * jax.lax.rsqrt(v + EPS) * g + be

    h = conv(x, w1, b1)
    h = jnp.maximum(bn(h, g1, be1), 0.0)
    y = conv(h, w2, b2) + x
    out = jnp.maximum(bn(y, g2, be2), 0.0)
    return jnp.transpose(out, (0, 3, 1, 2))


if __name__ == "__main__":
    # ResNetBlock(in_channels=4, out_channels=4, kernel_size=3, act='relu')
    # (residual add requires out_channels == in_channels)
    N, C, H, W = 2, 4, 16, 16

    key = jax.random.PRNGKey(0)
    ks = jax.random.split(key, 9)
    w1 = 0.2 * jax.random.normal(ks[0], (3, 3, C, C), jnp.float32)   # HWIO
    b1 = 0.1 * jax.random.normal(ks[1], (C,), jnp.float32)
    g1 = 1.0 + 0.1 * jax.random.normal(ks[2], (C,), jnp.float32)
    be1 = 0.1 * jax.random.normal(ks[3], (C,), jnp.float32)
    w2 = 0.2 * jax.random.normal(ks[4], (3, 3, C, C), jnp.float32)   # HWIO
    b2 = 0.1 * jax.random.normal(ks[5], (C,), jnp.float32)
    g2 = 1.0 + 0.1 * jax.random.normal(ks[6], (C,), jnp.float32)
    be2 = 0.1 * jax.random.normal(ks[7], (C,), jnp.float32)
    x = jax.random.normal(ks[8], (N, C, H, W), jnp.float32)          # NCHW like PyTorch

    params = (w1, b1, g1, be1, w2, b2, g2, be2)
    fwd = make_resnet_block(N, H, W, C, params)   # weight banding / constants built once here

    out = jax.block_until_ready(fwd(x))
    ref = jax.block_until_ready(reference(x, params))
    np.testing.assert_allclose(np.asarray(out), np.asarray(ref), atol=1e-4, rtol=1e-4)
    print("KERNEL_OK")
</pallas_src>

<mosaic_0001>
module attributes {stable_mosaic.version = 11 : i64} {
  func.func @kernel(%arg0: memref<40x128xf32, #tpu.memory_space<vmem>>, %arg1: memref<40x128xf32, #tpu.memory_space<vmem>>, %arg2: memref<3x128x128xf32, #tpu.memory_space<vmem>>, %arg3: memref<3x128x128xf32, #tpu.memory_space<vmem>>, %arg4: memref<8x128xf32, #tpu.memory_space<vmem>>, %arg5: memref<40x128xf32, #tpu.memory_space<vmem>>) attributes {dimension_semantics = [], scalar_prefetch = 0 : i64, scratch_operands = 0 : i64, tpu.core_type = #tpu.core_type<tc>} {
    %c0 = arith.constant 0 : index
    %c0_0 = arith.constant 0 : index
    %0 = vector.load %arg0[%c0, %c0_0] : memref<40x128xf32, #tpu.memory_space<vmem>>, vector<40x128xf32>
    %c0_1 = arith.constant 0 : index
    %c0_2 = arith.constant 0 : index
    %1 = vector.load %arg1[%c0_1, %c0_2] : memref<40x128xf32, #tpu.memory_space<vmem>>, vector<40x128xf32>
    %c0_3 = arith.constant 0 : index
    %c0_4 = arith.constant 0 : index
    %2 = vector.load %arg4[%c0_3, %c0_4] : memref<8x128xf32, #tpu.memory_space<vmem>>, vector<8x128xf32>
    %c1_i32 = arith.constant 1 : i32
    %3 = tpu.dynamic_rotate %0 by %c1_i32 dim 0 : vector<40x128xf32>, i32 -> vector<40x128xf32>
    %c39_i32 = arith.constant 39 : i32
    %4 = tpu.dynamic_rotate %0 by %c39_i32 dim 0 : vector<40x128xf32>, i32 -> vector<40x128xf32>
    %c0_5 = arith.constant 0 : index
    %c0_6 = arith.constant 0 : index
    %c0_7 = arith.constant 0 : index
    %5 = vector.load %arg2[%c0_5, %c0_6, %c0_7] : memref<3x128x128xf32, #tpu.memory_space<vmem>>, vector<1x128x128xf32>
    %6 = vector.shape_cast %5 : vector<1x128x128xf32> to vector<128x128xf32>
    %cst = arith.constant dense<0.000000e+00> : vector<40x128xf32>
    %7 = tpu.matmul %3, %6, %cst {dimension_numbers = #tpu.dot_dimension_numbers<[1], [0], [0], [1], [0, 0, 1, 1], [], []>, precision = #tpu.contract_precision<fp32>} : vector<40x128xf32>, vector<128x128xf32>, vector<40x128xf32> -> vector<40x128xf32>
    %c1 = arith.constant 1 : index
    %c0_8 = arith.constant 0 : index
    %c0_9 = arith.constant 0 : index
    %8 = vector.load %arg2[%c1, %c0_8, %c0_9] : memref<3x128x128xf32, #tpu.memory_space<vmem>>, vector<1x128x128xf32>
    %9 = vector.shape_cast %8 : vector<1x128x128xf32> to vector<128x128xf32>
    %cst_10 = arith.constant dense<0.000000e+00> : vector<40x128xf32>
    %10 = tpu.matmul %0, %9, %cst_10 {dimension_numbers = #tpu.dot_dimension_numbers<[1], [0], [0], [1], [0, 0, 1, 1], [], []>, precision = #tpu.contract_precision<fp32>} : vector<40x128xf32>, vector<128x128xf32>, vector<40x128xf32> -> vector<40x128xf32>
    %11 = arith.addf %7, %10 : vector<40x128xf32>
    %c2 = arith.constant 2 : index
    %c0_11 = arith.constant 0 : index
    %c0_12 = arith.constant 0 : index
    %12 = vector.load %arg2[%c2, %c0_11, %c0_12] : memref<3x128x128xf32, #tpu.memory_space<vmem>>, vector<1x128x128xf32>
    %13 = vector.shape_cast %12 : vector<1x128x128xf32> to vector<128x128xf32>
    %cst_13 = arith.constant dense<0.000000e+00> : vector<40x128xf32>
    %14 = tpu.matmul %4, %13, %cst_13 {dimension_numbers = #tpu.dot_dimension_numbers<[1], [0], [0], [1], [0, 0, 1, 1], [], []>, precision = #tpu.contract_precision<fp32>} : vector<40x128xf32>, vector<128x128xf32>, vector<40x128xf32> -> vector<40x128xf32>
    %15 = arith.addf %11, %14 : vector<40x128xf32>
    %16 = vector.extract_strided_slice %2 {offsets = [0, 0], sizes = [1, 128], strides = [1, 1]} : vector<8x128xf32> to vector<1x128xf32>
    %17 = vector.broadcast %16 : vector<1x128xf32> to vector<40x128xf32>
    %18 = arith.addf %15, %17 : vector<40x128xf32>
    %19 = arith.mulf %18, %1 : vector<40x128xf32>
    %20 = vector.extract_strided_slice %2 {offsets = [1, 0], sizes = [1, 128], strides = [1, 1]} : vector<8x128xf32> to vector<1x128xf32>
    %21 = vector.extract_strided_slice %2 {offsets = [2, 0], sizes = [1, 128], strides = [1, 1]} : vector<8x128xf32> to vector<1x128xf32>
    %cst_14 = arith.constant dense<0.000000e+00> : vector<128xf32>
    %22 = vector.multi_reduction <add>, %19, %cst_14 [0] : vector<40x128xf32> to vector<128xf32>
    %23 = vector.shape_cast %22 : vector<128xf32> to vector<1x128xf32>
    %24 = arith.mulf %19, %19 : vector<40x128xf32>
    %cst_15 = arith.constant dense<0.000000e+00> : vector<128xf32>
    %25 = vector.multi_reduction <add>, %24, %cst_15 [0] : vector<40x128xf32> to vector<128xf32>
    %26 = vector.shape_cast %25 : vector<128xf32> to vector<1x128xf32>
    %27 = tpu.concatenate %23, %26 in 0 : vector<1x128xf32>, vector<1x128xf32> -> vector<2x128xf32>
    %c4_i32 = arith.constant 4 : i32
    %28 = tpu.dynamic_rotate %27 by %c4_i32 dim 1 : vector<2x128xf32>, i32 -> vector<2x128xf32>
    %29 = arith.addf %27, %28 : vector<2x128xf32>
    %c8_i32 = arith.constant 8 : i32
    %30 = tpu.dynamic_rotate %29 by %c8_i32 dim 1 : vector<2x128xf32>, i32 -> vector<2x128xf32>
    %31 = arith.addf %29, %30 : vector<2x128xf32>
    %c16_i32 = arith.constant 16 : i32
    %32 = tpu.dynamic_rotate %31 by %c16_i32 dim 1 : vector<2x128xf32>, i32 -> vector<2x128xf32>
    %33 = arith.addf %31, %32 : vector<2x128xf32>
    %c32_i32 = arith.constant 32 : i32
    %34 = tpu.dynamic_rotate %33 by %c32_i32 dim 1 : vector<2x128xf32>, i32 -> vector<2x128xf32>
    %35 = arith.addf %33, %34 : vector<2x128xf32>
    %c64_i32 = arith.constant 64 : i32
    %36 = tpu.dynamic_rotate %35 by %c64_i32 dim 1 : vector<2x128xf32>, i32 -> vector<2x128xf32>
    %37 = arith.addf %35, %36 : vector<2x128xf32>
    %38 = vector.extract_strided_slice %37 {offsets = [0, 0], sizes = [1, 128], strides = [1, 1]} : vector<2x128xf32> to vector<1x128xf32>
    %cst_16 = arith.constant 0.001953125 : f32
    %39 = vector.broadcast %cst_16 : f32 to vector<1x128xf32>
    %40 = arith.mulf %38, %39 : vector<1x128xf32>
    %41 = vector.extract_strided_slice %37 {offsets = [1, 0], sizes = [1, 128], strides = [1, 1]} : vector<2x128xf32> to vector<1x128xf32>
    %cst_17 = arith.constant 0.001953125 : f32
    %42 = vector.broadcast %cst_17 : f32 to vector<1x128xf32>
    %43 = arith.mulf %41, %42 : vector<1x128xf32>
    %44 = arith.mulf %40, %40 : vector<1x128xf32>
    %45 = arith.subf %43, %44 : vector<1x128xf32>
    %cst_18 = arith.constant 0.000000e+00 : f32
    %46 = vector.broadcast %cst_18 : f32 to vector<1x128xf32>
    %47 = arith.maximumf %45, %46 : vector<1x128xf32>
    %48 = vector.broadcast %40 : vector<1x128xf32> to vector<40x128xf32>
    %49 = arith.subf %19, %48 : vector<40x128xf32>
    %cst_19 = arith.constant 9.99999974E-6 : f32
    %50 = vector.broadcast %cst_19 : f32 to vector<1x128xf32>
    %51 = arith.addf %47, %50 : vector<1x128xf32>
    %52 = math.rsqrt %51 : vector<1x128xf32>
    %53 = vector.broadcast %52 : vector<1x128xf32> to vector<40x128xf32>
    %54 = arith.mulf %49, %53 : vector<40x128xf32>
    %55 = vector.broadcast %20 : vector<1x128xf32> to vector<40x128xf32>
    %56 = arith.mulf %54, %55 : vector<40x128xf32>
    %57 = vector.broadcast %21 : vector<1x128xf32> to vector<40x128xf32>
    %58 = arith.addf %56, %57 : vector<40x128xf32>
    %cst_20 = arith.constant 0.000000e+00 : f32
    %59 = vector.broadcast %cst_20 : f32 to vector<40x128xf32>
    %60 = arith.maximumf %58, %59 : vector<40x128xf32>
    %61 = arith.mulf %60, %1 : vector<40x128xf32>
    %c1_i32_21 = arith.constant 1 : i32
    %62 = tpu.dynamic_rotate %61 by %c1_i32_21 dim 0 : vector<40x128xf32>, i32 -> vector<40x128xf32>
    %c39_i32_22 = arith.constant 39 : i32
    %63 = tpu.dynamic_rotate %61 by %c39_i32_22 dim 0 : vector<40x128xf32>, i32 -> vector<40x128xf32>
    %c0_23 = arith.constant 0 : index
    %c0_24 = arith.constant 0 : index
    %c0_25 = arith.constant 0 : index
    %64 = vector.load %arg3[%c0_23, %c0_24, %c0_25] : memref<3x128x128xf32, #tpu.memory_space<vmem>>, vector<1x128x128xf32>
    %65 = vector.shape_cast %64 : vector<1x128x128xf32> to vector<128x128xf32>
    %cst_26 = arith.constant dense<0.000000e+00> : vector<40x128xf32>
    %66 = tpu.matmul %62, %65, %cst_26 {dimension_numbers = #tpu.dot_dimension_numbers<[1], [0], [0], [1], [0, 0, 1, 1], [], []>, precision = #tpu.contract_precision<fp32>} : vector<40x128xf32>, vector<128x128xf32>, vector<40x128xf32> -> vector<40x128xf32>
    %c1_27 = arith.constant 1 : index
    %c0_28 = arith.constant 0 : index
    %c0_29 = arith.constant 0 : index
    %67 = vector.load %arg3[%c1_27, %c0_28, %c0_29] : memref<3x128x128xf32, #tpu.memory_space<vmem>>, vector<1x128x128xf32>
    %68 = vector.shape_cast %67 : vector<1x128x128xf32> to vector<128x128xf32>
    %cst_30 = arith.constant dense<0.000000e+00> : vector<40x128xf32>
    %69 = tpu.matmul %61, %68, %cst_30 {dimension_numbers = #tpu.dot_dimension_numbers<[1], [0], [0], [1], [0, 0, 1, 1], [], []>, precision = #tpu.contract_precision<fp32>} : vector<40x128xf32>, vector<128x128xf32>, vector<40x128xf32> -> vector<40x128xf32>
    %70 = arith.addf %66, %69 : vector<40x128xf32>
    %c2_31 = arith.constant 2 : index
    %c0_32 = arith.constant 0 : index
    %c0_33 = arith.constant 0 : index
    %71 = vector.load %arg3[%c2_31, %c0_32, %c0_33] : memref<3x128x128xf32, #tpu.memory_space<vmem>>, vector<1x128x128xf32>
    %72 = vector.shape_cast %71 : vector<1x128x128xf32> to vector<128x128xf32>
    %cst_34 = arith.constant dense<0.000000e+00> : vector<40x128xf32>
    %73 = tpu.matmul %63, %72, %cst_34 {dimension_numbers = #tpu.dot_dimension_numbers<[1], [0], [0], [1], [0, 0, 1, 1], [], []>, precision = #tpu.contract_precision<fp32>} : vector<40x128xf32>, vector<128x128xf32>, vector<40x128xf32> -> vector<40x128xf32>
    %74 = arith.addf %70, %73 : vector<40x128xf32>
    %75 = vector.extract_strided_slice %2 {offsets = [3, 0], sizes = [1, 128], strides = [1, 1]} : vector<8x128xf32> to vector<1x128xf32>
    %76 = vector.broadcast %75 : vector<1x128xf32> to vector<40x128xf32>
    %77 = arith.addf %74, %76 : vector<40x128xf32>
    %78 = arith.addf %77, %0 : vector<40x128xf32>
    %79 = arith.mulf %78, %1 : vector<40x128xf32>
    %80 = vector.extract_strided_slice %2 {offsets = [4, 0], sizes = [1, 128], strides = [1, 1]} : vector<8x128xf32> to vector<1x128xf32>
    %81 = vector.extract_strided_slice %2 {offsets = [5, 0], sizes = [1, 128], strides = [1, 1]} : vector<8x128xf32> to vector<1x128xf32>
    %cst_35 = arith.constant dense<0.000000e+00> : vector<128xf32>
    %82 = vector.multi_reduction <add>, %79, %cst_35 [0] : vector<40x128xf32> to vector<128xf32>
    %83 = vector.shape_cast %82 : vector<128xf32> to vector<1x128xf32>
    %84 = arith.mulf %79, %79 : vector<40x128xf32>
    %cst_36 = arith.constant dense<0.000000e+00> : vector<128xf32>
    %85 = vector.multi_reduction <add>, %84, %cst_36 [0] : vector<40x128xf32> to vector<128xf32>
    %86 = vector.shape_cast %85 : vector<128xf32> to vector<1x128xf32>
    %87 = tpu.concatenate %83, %86 in 0 : vector<1x128xf32>, vector<1x128xf32> -> vector<2x128xf32>
    %c4_i32_37 = arith.constant 4 : i32
    %88 = tpu.dynamic_rotate %87 by %c4_i32_37 dim 1 : vector<2x128xf32>, i32 -> vector<2x128xf32>
    %89 = arith.addf %87, %88 : vector<2x128xf32>
    %c8_i32_38 = arith.constant 8 : i32
    %90 = tpu.dynamic_rotate %89 by %c8_i32_38 dim 1 : vector<2x128xf32>, i32 -> vector<2x128xf32>
    %91 = arith.addf %89, %90 : vector<2x128xf32>
    %c16_i32_39 = arith.constant 16 : i32
    %92 = tpu.dynamic_rotate %91 by %c16_i32_39 dim 1 : vector<2x128xf32>, i32 -> vector<2x128xf32>
    %93 = arith.addf %91, %92 : vector<2x128xf32>
    %c32_i32_40 = arith.constant 32 : i32
    %94 = tpu.dynamic_rotate %93 by %c32_i32_40 dim 1 : vector<2x128xf32>, i32 -> vector<2x128xf32>
    %95 = arith.addf %93, %94 : vector<2x128xf32>
    %c64_i32_41 = arith.constant 64 : i32
    %96 = tpu.dynamic_rotate %95 by %c64_i32_41 dim 1 : vector<2x128xf32>, i32 -> vector<2x128xf32>
    %97 = arith.addf %95, %96 : vector<2x128xf32>
    %98 = vector.extract_strided_slice %97 {offsets = [0, 0], sizes = [1, 128], strides = [1, 1]} : vector<2x128xf32> to vector<1x128xf32>
    %cst_42 = arith.constant 0.001953125 : f32
    %99 = vector.broadcast %cst_42 : f32 to vector<1x128xf32>
    %100 = arith.mulf %98, %99 : vector<1x128xf32>
    %101 = vector.extract_strided_slice %97 {offsets = [1, 0], sizes = [1, 128], strides = [1, 1]} : vector<2x128xf32> to vector<1x128xf32>
    %cst_43 = arith.constant 0.001953125 : f32
    %102 = vector.broadcast %cst_43 : f32 to vector<1x128xf32>
    %103 = arith.mulf %101, %102 : vector<1x128xf32>
    %104 = arith.mulf %100, %100 : vector<1x128xf32>
    %105 = arith.subf %103, %104 : vector<1x128xf32>
    %cst_44 = arith.constant 0.000000e+00 : f32
    %106 = vector.broadcast %cst_44 : f32 to vector<1x128xf32>
    %107 = arith.maximumf %105, %106 : vector<1x128xf32>
    %108 = vector.broadcast %100 : vector<1x128xf32> to vector<40x128xf32>
    %109 = arith.subf %79, %108 : vector<40x128xf32>
    %cst_45 = arith.constant 9.99999974E-6 : f32
    %110 = vector.broadcast %cst_45 : f32 to vector<1x128xf32>
    %111 = arith.addf %107, %110 : vector<1x128xf32>
    %112 = math.rsqrt %111 : vector<1x128xf32>
    %113 = vector.broadcast %112 : vector<1x128xf32> to vector<40x128xf32>
    %114 = arith.mulf %109, %113 : vector<40x128xf32>
    %115 = vector.broadcast %80 : vector<1x128xf32> to vector<40x128xf32>
    %116 = arith.mulf %114, %115 : vector<40x128xf32>
    %117 = vector.broadcast %81 : vector<1x128xf32> to vector<40x128xf32>
    %118 = arith.addf %116, %117 : vector<40x128xf32>
    %cst_46 = arith.constant 0.000000e+00 : f32
    %119 = vector.broadcast %cst_46 : f32 to vector<40x128xf32>
    %120 = arith.maximumf %118, %119 : vector<40x128xf32>
    %121 = arith.mulf %120, %1 : vector<40x128xf32>
    %c0_47 = arith.constant 0 : index
    %c0_48 = arith.constant 0 : index
    %122 = vector.load %arg5[%c0_47, %c0_48] : memref<40x128xf32, #tpu.memory_space<vmem>>, vector<40x128xf32>
    tpu.vector_store %arg5[%c0_47, %c0_48], %121 {strides = array<i32>} : memref<40x128xf32, #tpu.memory_space<vmem>>, vector<40x128xf32>,
    return
  }
}

</mosaic_0001>

<llo_original>
// kernel: forward.1
$region0: #{forward.1}
  #allocation0 [shape = 'u32[]', space=smem, size = 0x4, offset = 0x4, fixed_abs, tag = 'smem constant byte address 0x4 - core index']
  #allocation1 [shape = 'u32[144,128]{1,0:T(1,128)}', space=vmem, size = 0x12000, scoped, tag = 'internal scratch']
  %s0 = inlined_call_operand.vmem [shape: f32[40,128], index: 0, kind: input, shape index: {}]
  %s1 = inlined_call_operand.vmem [shape: f32[40,128], index: 1, kind: input, shape index: {}]
  %s2 = inlined_call_operand.vmem [shape: f32[3,128,128], index: 2, kind: input, shape index: {}]
  %s3 = inlined_call_operand.vmem [shape: f32[3,128,128], index: 3, kind: input, shape index: {}]
  %s4 = inlined_call_operand.vmem [shape: f32[8,128], index: 4, kind: input, shape index: {}]
  %s5 = inlined_call_operand.vmem [shape: f32[40,128], index: 5, kind: output, shape index: {}]
  %s6 = sld [smem:[#allocation0]]
  $region30: #{forward.1} parent=0
    _
  %s8 = ssub.s32 1, %s6
  %s9 = scalar_select 0, %s8, %s6
  // Predicated region
  $region2: #{forward.1} parent=0 // pred_check
    _
  $region3: #{forward.1} parent=0 // pred_check_branch
    %11 = sbr.rel (0) target = $region5
  $region4: #{forward.1} parent=0 // pred_region
    _
  $region5: #{forward.1} parent=0 // pred_fallthru
    _
  // Predicated region
  $region6: #{forward.1} parent=0 // pred_check
    _
  $region7: #{forward.1} parent=0 // pred_check_branch
    %13 = sbr.rel (0) target = $region9
  $region8: #{forward.1} parent=0 // pred_region
    _
  $region9: #{forward.1} parent=0 // pred_fallthru
    _
  // Predicated region
  $region10: #{forward.1} parent=0 // pred_check
    _
  $region11: #{forward.1} parent=0 // pred_check_branch
    %15 = sbr.rel (0) target = $region13
  $region12: #{forward.1} parent=0 // pred_region
    _
  $region13: #{forward.1} parent=0 // pred_fallthru
    _
  // Predicated region
  $region14: #{forward.1} parent=0 // pred_check
    _
  $region15: #{forward.1} parent=0 // pred_check_branch
    %17 = sbr.rel (0) target = $region17
  $region16: #{forward.1} parent=0 // pred_region
    _
  $region17: #{forward.1} parent=0 // pred_fallthru
    _
  // Predicated region
  $region18: #{forward.1} parent=0 // pred_check
    _
  $region19: #{forward.1} parent=0 // pred_check_branch
    %19 = sbr.rel (0) target = $region21
  $region20: #{forward.1} parent=0 // pred_region
    _
  $region21: #{forward.1} parent=0 // pred_fallthru
    _
  %v20 = vld [vmem:[%s0] sm:$0xff]
  %v21 = vld [vmem:[%s0 + $0x8] sm:$0xff]
  %v22 = vld [vmem:[%s0 + $0x10] sm:$0xff]
  %v23 = vld [vmem:[%s0 + $0x18] sm:$0xff]
  %v24 = vld [vmem:[%s0 + $0x20] sm:$0xff]
  %v25 = vld [vmem:[%s1] sm:$0xff]
  %v26 = vld [vmem:[%s1 + $0x8] sm:$0xff]
  %v27 = vld [vmem:[%s1 + $0x10] sm:$0xff]
  %v28 = vld [vmem:[%s1 + $0x18] sm:$0xff]
  %v29 = vld [vmem:[%s1 + $0x20] sm:$0xff]
  %v30 = vld [vmem:[%s4] sm:$0xff]
  %v31 = vrot.slane %v20, 7
  %v32 = vrot.slane %v21, 7
  %v33 = vrot.slane %v22, 7
  %v34 = vrot.slane %v23, 7
  %v35 = vrot.slane %v24, 7
  %v36 = vlaneseq
  %v37 = vshrl.u32 %v36, 7
  %vm38 = vcmp.lt.s32.totalorder %v37, 1
  %v39 = vsel %vm38, %v34, %v35
  %v40 = vsel %vm38, %v33, %v34
  %v41 = vsel %vm38, %v32, %v33
  %v42 = vsel %vm38, %v31, %v32
  %v43 = vsel %vm38, %v35, %v31
  %v44 = vrot.slane %v20, 1
  %v45 = vrot.slane %v21, 1
  %v46 = vrot.slane %v22, 1
  %v47 = vrot.slane %v23, 1
  %v48 = vrot.slane %v24, 1
  %vm49 = vcmp.lt.s32.totalorder %v37, 7
  %v50 = vsel %vm49, %v47, %v48
  %v51 = vsel %vm49, %v46, %v47
  %v52 = vsel %vm49, %v45, %v46
  %v53 = vsel %vm49, %v44, %v45
  %v54 = vsel %vm49, %v48, %v44
  %v55 = vld [vmem:[%s2] sm:$0xff]
  %v56 = vld [vmem:[%s2 + $0x8] sm:$0xff]
  %v57 = vld [vmem:[%s2 + $0x10] sm:$0xff]
  %v58 = vld [vmem:[%s2 + $0x18] sm:$0xff]
  %v59 = vld [vmem:[%s2 + $0x20] sm:$0xff]
  %v60 = vld [vmem:[%s2 + $0x28] sm:$0xff]
  %v61 = vld [vmem:[%s2 + $0x30] sm:$0xff]
  %v62 = vld [vmem:[%s2 + $0x38] sm:$0xff]
  %v63 = vld [vmem:[%s2 + $0x40] sm:$0xff]
  %v64 = vld [vmem:[%s2 + $0x48] sm:$0xff]
  %v65 = vld [vmem:[%s2 + $0x50] sm:$0xff]
  %v66 = vld [vmem:[%s2 + $0x58] sm:$0xff]
  %v67 = vld [vmem:[%s2 + $0x60] sm:$0xff]
  %v68 = vld [vmem:[%s2 + $0x68] sm:$0xff]
  %v69 = vld [vmem:[%s2 + $0x70] sm:$0xff]
  %v70 = vld [vmem:[%s2 + $0x78] sm:$0xff]
  %s71 = scalar_lea.vmem %s2, 128
  %v72 = vld [vmem:[%s71] sm:$0xff]
  %v73 = vld [vmem:[%s71 + $0x8] sm:$0xff]
  %v74 = vld [vmem:[%s71 + $0x10] sm:$0xff]
  %v75 = vld [vmem:[%s71 + $0x18] sm:$0xff]
  %v76 = vld [vmem:[%s71 + $0x20] sm:$0xff]
  %v77 = vld [vmem:[%s71 + $0x28] sm:$0xff]
  %v78 = vld [vmem:[%s71 + $0x30] sm:$0xff]
  %v79 = vld [vmem:[%s71 + $0x38] sm:$0xff]
  %v80 = vld [vmem:[%s71 + $0x40] sm:$0xff]
  %v81 = vld [vmem:[%s71 + $0x48] sm:$0xff]
  %v82 = vld [vmem:[%s71 + $0x50] sm:$0xff]
  %v83 = vld [vmem:[%s71 + $0x58] sm:$0xff]
  %v84 = vld [vmem:[%s71 + $0x60] sm:$0xff]
  %v85 = vld [vmem:[%s71 + $0x68] sm:$0xff]
  %v86 = vld [vmem:[%s71 + $0x70] sm:$0xff]
  %v87 = vld [vmem:[%s71 + $0x78] sm:$0xff]
  %88 = vmatprep.subr.mxu0 0.0
  %v89 = vand.u32 %v72, 4294901760
  %90 = vmatpush1.msra.mxu0 %v89
  %91 = vmatprep.subr.mxu0 0.0
  %v92 = vand.u32 %v73, 4294901760
  %93 = vmatpush1.msra.mxu0 %v92
  %94 = vmatprep.subr.mxu0 0.0
  %v95 = vand.u32 %v74, 4294901760
  %96 = vmatpush1.msra.mxu0 %v95
  %97 = vmatprep.subr.mxu0 0.0
  %v98 = vand.u32 %v75, 4294901760
  %99 = vmatpush1.msra.mxu0 %v98
  %100 = vmatprep.subr.mxu0 0.0
  %v101 = vand.u32 %v76, 4294901760
  %102 = vmatpush1.msra.mxu0 %v101
  %103 = vmatprep.subr.mxu0 0.0
  %v104 = vand.u32 %v77, 4294901760
  %105 = vmatpush1.msra.mxu0 %v104
  %106 = vmatprep.subr.mxu0 0.0
  %v107 = vand.u32 %v78, 4294901760
  %108 = vmatpush1.msra.mxu0 %v107
  %109 = vmatprep.subr.mxu0 0.0
  %v110 = vand.u32 %v79, 4294901760
  %111 = vmatpush1.msra.mxu0 %v110
  %112 = vmatprep.subr.mxu0 0.0
  %v113 = vand.u32 %v80, 4294901760
  %114 = vmatpush1.msra.mxu0 %v113
  %115 = vmatprep.subr.mxu0 0.0
  %v116 = vand.u32 %v81, 4294901760
  %117 = vmatpush1.msra.mxu0 %v116
  %118 = vmatprep.subr.mxu0 0.0
  %v119 = vand.u32 %v82, 4294901760
  %120 = vmatpush1.msra.mxu0 %v119
  %121 = vmatprep.subr.mxu0 0.0
  %v122 = vand.u32 %v83, 4294901760
  %123 = vmatpush1.msra.mxu0 %v122
  %124 = vmatprep.subr.mxu0 0.0
  %v125 = vand.u32 %v84, 4294901760
  %126 = vmatpush1.msra.mxu0 %v125
  %127 = vmatprep.subr.mxu0 0.0
  %v128 = vand.u32 %v85, 4294901760
  %129 = vmatpush1.msra.mxu0 %v128
  %130 = vmatprep.subr.mxu0 0.0
  %v131 = vand.u32 %v86, 4294901760
  %132 = vmatpush1.msra.mxu0 %v131
  %133 = vmatprep.subr.mxu0 0.0
  %v134 = vand.u32 %v87, 4294901760
  %135 = vmatpush1.msra.mxu0 %v134
  %136 = vmatprep.subr.mxu0 0.0
  %137 = vmatpush1.msra.mxu0 0.0
  %138 = vmatprep.subr.mxu0 0.0
  %139 = vmatpush1.msra.mxu0 0.0
  %140 = vmatprep.subr.mxu0 0.0
  %141 = vmatpush1.msra.mxu0 0.0
  %142 = vmatprep.subr.mxu0 0.0
  %143 = vmatpush1.msra.mxu0 0.0
  %144 = vmatprep.subr.mxu0 0.0
  %145 = vmatpush1.msra.mxu0 0.0
  %146 = vmatprep.subr.mxu0 0.0
  %147 = vmatpush1.msra.mxu0 0.0
  %148 = vmatprep.subr.mxu0 0.0
  %149 = vmatpush1.msra.mxu0 0.0
  %150 = vmatprep.subr.mxu0 0.0
  %151 = vmatpush1.msra.mxu0 0.0
  %152 = vmatprep.subr.mxu0 0.0
  %153 = vmatpush1.msra.mxu0 0.0
  %154 = vmatprep.subr.mxu0 0.0
  %155 = vmatpush1.msra.mxu0 0.0
  %156 = vmatprep.subr.mxu0 0.0
  %157 = vmatpush1.msra.mxu0 0.0
  %158 = vmatprep.subr.mxu0 0.0
  %159 = vmatpush1.msra.mxu0 0.0
  %160 = vmatprep.subr.mxu0 0.0
  %161 = vmatpush1.msra.mxu0 0.0
  %162 = vmatprep.subr.mxu0 0.0
  %163 = vmatpush1.msra.mxu0 0.0
  %164 = vmatprep.subr.mxu0 0.0
  %165 = vmatpush1.msra.mxu0 0.0
  %166 = vmatprep.subr.mxu0 0.0
  %167 = vmatpush1.msra.mxu0 0.0
  %168 = vmatprep.mubr.f32.mxu0 0.0
  %v169 = vand.u32 %v20, 4294901760
  %v170 = vsub.f32 %v20, %v169
  %v171 = vand.u32 %v170, 4294901760
  %v172 = vsub.f32 %v170, %v171
  %v173 = vand.u32 %v172, 4294901760
  %174 = vmatmul.mubr.f32.gmra.mrb[0].mxu0 %v173
  %v175 = vpop.f32.mrb[0].mxu0
  %v176 = vadd.f32 0.0, %v175
  %v177 = vpop.f32.mrb[0].mxu0
  %178 = vmatprep.mubr.f32.mxu0 0.0
  %v179 = vand.u32 %v21, 4294901760
  %v180 = vsub.f32 %v21, %v179
  %v181 = vand.u32 %v180, 4294901760
  %v182 = vsub.f32 %v180, %v181
  %v183 = vand.u32 %v182, 4294901760
  %184 = vmatmul.mubr.f32.gmra.mrb[0].mxu0 %v183
  %v185 = vpop.f32.mrb[0].mxu0
  %v186 = vadd.f32 0.0, %v185
  %v187 = vpop.f32.mrb[0].mxu0
  %188 = vmatprep.mubr.f32.mxu0 0.0
  %v189 = vand.u32 %v22, 4294901760
  %v190 = vsub.f32 %v22, %v189
  %v191 = vand.u32 %v190, 4294901760
  %v192 = vsub.f32 %v190, %v191
  %v193 = vand.u32 %v192, 4294901760
  %194 = vmatmul.mubr.f32.gmra.mrb[0].mxu0 %v193
  %v195 = vpop.f32.mrb[0].mxu0
  %v196 = vadd.f32 0.0, %v195
  %v197 = vpop.f32.mrb[0].mxu0
  %198 = vmatprep.mubr.f32.mxu0 0.0
  %v199 = vand.u32 %v23, 4294901760
  %v200 = vsub.f32 %v23, %v199
  %v201 = vand.u32 %v200, 4294901760
  %v202 = vsub.f32 %v200, %v201
  %v203 = vand.u32 %v202, 4294901760
  %204 = vmatmul.mubr.f32.gmra.mrb[0].mxu0 %v203
  %v205 = vpop.f32.mrb[0].mxu0
  %v206 = vadd.f32 0.0, %v205
  %v207 = vpop.f32.mrb[0].mxu0
  %208 = vmatprep.mubr.f32.mxu0 0.0
  %v209 = vand.u32 %v24, 4294901760
  %v210 = vsub.f32 %v24, %v209
  %v211 = vand.u32 %v210, 4294901760
  %v212 = vsub.f32 %v210, %v211
  %v213 = vand.u32 %v212, 4294901760
  %214 = vmatmul.mubr.f32.gmra.mrb[0].mxu0 %v213
  %v215 = vpop.f32.mrb[0].mxu0
  %v216 = vadd.f32 0.0, %v215
  %v217 = vpop.f32.mrb[0].mxu0
  %218 = vdwg.mxu0
  %219 = vmatprep.subr.mxu0 0.0
  %v220 = vand.u32 %v72, 4294901760
  %v221 = vsub.f32 %v72, %v220
  %v222 = vand.u32 %v221, 4294901760
  %v223 = vsub.f32 %v221, %v222
  %v224 = vand.u32 %v223, 4294901760
  %225 = vmatpush1.msra.mxu0 %v224
  %226 = vmatprep.subr.mxu0 0.0
  %v227 = vand.u32 %v73, 4294901760
  %v228 = vsub.f32 %v73, %v227
  %v229 = vand.u32 %v228, 4294901760
  %v230 = vsub.f32 %v228, %v229
  %v231 = vand.u32 %v230, 4294901760
  %232 = vmatpush1.msra.mxu0 %v231
  %233 = vmatprep.subr.mxu0 0.0
  %v234 = vand.u32 %v74, 4294901760
  %v235 = vsub.f32 %v74, %v234
  %v236 = vand.u32 %v235, 4294901760
  %v237 = vsub.f32 %v235, %v236
  %v238 = vand.u32 %v237, 4294901760
  %239 = vmatpush1.msra.mxu0 %v238
  %240 = vmatprep.subr.mxu0 0.0
  %v241 = vand.u32 %v75, 4294901760
  %v242 = vsub.f32 %v75, %v241
  %v243 = vand.u32 %v242, 4294901760
  %v244 = vsub.f32 %v242, %v243
  %v245 = vand.u32 %v244, 4294901760
  %246 = vmatpush1.msra.mxu0 %v245
  %247 = vmatprep.subr.mxu0 0.0
  %v248 = vand.u32 %v76, 4294901760
  %v249 = vsub.f32 %v76, %v248
  %v250 = vand.u32 %v249, 4294901760
  %v251 = vsub.f32 %v249, %v250
  %v252 = vand.u32 %v251, 4294901760
  %253 = vmatpush1.msra.mxu0 %v252
  %254 = vmatprep.subr.mxu0 0.0
  %v255 = vand.u32 %v77, 4294901760
  %v256 = vsub.f32 %v77, %v255
  %v257 = vand.u32 %v256, 4294901760
  %v258 = vsub.f32 %v256, %v257
  %v259 = vand.u32 %v258, 4294901760
  %260 = vmatpush1.msra.mxu0 %v259
  %261 = vmatprep.subr.mxu0 0.0
  %v262 = vand.u32 %v78, 4294901760
  %v263 = vsub.f32 %v78, %v262
  %v264 = vand.u32 %v263, 4294901760
  %v265 = vsub.f32 %v263, %v264
  %v266 = vand.u32 %v265, 4294901760
  %267 = vmatpush1.msra.mxu0 %v266
  %268 = vmatprep.subr.mxu0 0.0
  %v269 = vand.u32 %v79, 4294901760
  %v270 = vsub.f32 %v79, %v269
  %v271 = vand.u32 %v270, 4294901760
  %v272 = vsub.f32 %v270, %v271
  %v273 = vand.u32 %v272, 4294901760
  %274 = vmatpush1.msra.mxu0 %v273
  %275 = vmatprep.subr.mxu0 0.0
  %v276 = vand.u32 %v80, 4294901760
  %v277 = vsub.f32 %v80, %v276
  %v278 = vand.u32 %v277, 4294901760
  %v279 = vsub.f32 %v277, %v278
  %v280 = vand.u32 %v279, 4294901760
  %281 = vmatpush1.msra.mxu0 %v280
  %282 = vmatprep.subr.mxu0 0.0
  %v283 = vand.u32 %v81, 4294901760
  %v284 = vsub.f32 %v81, %v283
  %v285 = vand.u32 %v284, 4294901760
  %v286 = vsub.f32 %v284, %v285
  %v287 = vand.u32 %v286, 4294901760
  %288 = vmatpush1.msra.mxu0 %v287
  %289 = vmatprep.subr.mxu0 0.0
  %v290 = vand.u32 %v82, 4294901760
  %v291 = vsub.f32 %v82, %v290
  %v292 = vand.u32 %v291, 4294901760
  %v293 = vsub.f32 %v291, %v292
  %v294 = vand.u32 %v293, 4294901760
  %295 = vmatpush1.msra.mxu0 %v294
  %296 = vmatprep.subr.mxu0 0.0
  %v297 = vand.u32 %v83, 4294901760
  %v298 = vsub.f32 %v83, %v297
  %v299 = vand.u32 %v298, 4294901760
  %v300 = vsub.f32 %v298, %v299
  %v301 = vand.u32 %v300, 4294901760
  %302 = vmatpush1.msra.mxu0 %v301
  %303 = vmatprep.subr.mxu0 0.0
  %v304 = vand.u32 %v84, 4294901760
  %v305 = vsub.f32 %v84, %v304
  %v306 = vand.u32 %v305, 4294901760
  %v307 = vsub.f32 %v305, %v306
  %v308 = vand.u32 %v307, 4294901760
  %309 = vmatpush1.msra.mxu0 %v308
  %310 = vmatprep.subr.mxu0 0.0
  %v311 = vand.u32 %v85, 4294901760
  %v312 = vsub.f32 %v85, %v311
  %v313 = vand.u32 %v312, 4294901760
  %v314 = vsub.f32 %v312, %v313
  %v315 = vand.u32 %v314, 4294901760
  %316 = vmatpush1.msra.mxu0 %v315
  %317 = vmatprep.subr.mxu0 0.0
  %v318 = vand.u32 %v86, 4294901760
  %v319 = vsub.f32 %v86, %v318
  %v320 = vand.u32 %v319, 4294901760
  %v321 = vsub.f32 %v319, %v320
  %v322 = vand.u32 %v321, 4294901760
  %323 = vmatpush1.msra.mxu0 %v322
  %324 = vmatprep.subr.mxu0 0.0
  %v325 = vand.u32 %v87, 4294901760
  %v326 = vsub.f32 %v87, %v325
  %v327 = vand.u32 %v326, 4294901760
  %v328 = vsub.f32 %v326, %v327
  %v329 = vand.u32 %v328, 4294901760
  %330 = vmatpush1.msra.mxu0 %v329
  %331 = vmatprep.subr.mxu0 0.0
  %332 = vmatpush1.msra.mxu0 0.0
  %333 = vmatprep.subr.mxu0 0.0
  %334 = vmatpush1.msra.mxu0 0.0
  %335 = vmatprep.subr.mxu0 0.0
  %336 = vmatpush1.msra.mxu0 0.0
  %337 = vmatprep.subr.mxu0 0.0
  %338 = vmatpush1.msra.mxu0 0.0
  %339 = vmatprep.subr.mxu0 0.0
  %340 = vmatpush1.msra.mxu0 0.0
  %341 = vmatprep.subr.mxu0 0.0
  %342 = vmatpush1.msra.mxu0 0.0
  %343 = vmatprep.subr.mxu0 0.0
  %344 = vmatpush1.msra.mxu0 0.0
  %345 = vmatprep.subr.mxu0 0.0
  %346 = vmatpush1.msra.mxu0 0.0
  %347 = vmatprep.subr.mxu0 0.0
  %348 = vmatpush1.msra.mxu0 0.0
  %349 = vmatprep.subr.mxu0 0.0
  %350 = vmatpush1.msra.mxu0 0.0
  %351 = vmatprep.subr.mxu0 0.0
  %352 = vmatpush1.msra.mxu0 0.0
  %353 = vmatprep.subr.mxu0 0.0
  %354 = vmatpush1.msra.mxu0 0.0
  %355 = vmatprep.subr.mxu0 0.0
  %356 = vmatpush1.msra.mxu0 0.0
  %357 = vmatprep.subr.mxu0 0.0
  %358 = vmatpush1.msra.mxu0 0.0
  %359 = vmatprep.subr.mxu0 0.0
  %360 = vmatpush1.msra.mxu0 0.0
  %361 = vmatprep.subr.mxu0 0.0
  %362 = vmatpush1.msra.mxu0 0.0
  %363 = vmatprep.mubr.f32.mxu0 0.0
  %v364 = vand.u32 %v20, 4294901760
  %365 = vmatmul.mubr.f32.gmra.mrb[0].mxu0 %v364
  %v366 = vpop.f32.mrb[0].mxu0
  %v367 = vadd.f32 %v176, %v366
  %v368 = vpop.f32.mrb[0].mxu0
  %369 = vmatprep.mubr.f32.mxu0 0.0
  %v370 = vand.u32 %v21, 4294901760
  %371 = vmatmul.mubr.f32.gmra.mrb[0].mxu0 %v370
  %v372 = vpop.f32.mrb[0].mxu0
  %v373 = vadd.f32 %v186, %v372
  %v374 = vpop.f32.mrb[0].mxu0
  %375 = vmatprep.mubr.f32.mxu0 0.0
  %v376 = vand.u32 %v22, 4294901760
  %377 = vmatmul.mubr.f32.gmra.mrb[0].mxu0 %v376
  %v378 = vpop.f32.mrb[0].mxu0
  %v379 = vadd.f32 %v196, %v378
  %v380 = vpop.f32.mrb[0].mxu0
  %381 = vmatprep.mubr.f32.mxu0 0.0
  %v382 = vand.u32 %v23, 4294901760
  %383 = vmatmul.mubr.f32.gmra.mrb[0].mxu0 %v382
  %v384 = vpop.f32.mrb[0].mxu0
  %v385 = vadd.f32 %v206, %v384
  %v386 = vpop.f32.mrb[0].mxu0
  %387 = vmatprep.mubr.f32.mxu0 0.0
  %v388 = vand.u32 %v24, 4294901760
  %389 = vmatmul.mubr.f32.gmra.mrb[0].mxu0 %v388
  %v390 = vpop.f32.mrb[0].mxu0
  %v391 = vadd.f32 %v216, %v390
  %v392 = vpop.f32.mrb[0].mxu0
  %393 = vdwg.mxu0
  %394 = vmatprep.subr.mxu0 0.0
  %v395 = vand.u32 %v72, 4294901760
  %v396 = vsub.f32 %v72, %v395
  %397 = vmatpush1.msra.mxu0 %v396
  %398 = vmatprep.subr.mxu0 0.0
  %v399 = vand.u32 %v73, 4294901760
  %v400 = vsub.f32 %v73, %v399
  %401 = vmatpush1.msra.mxu0 %v400
  %402 = vmatprep.subr.mxu0 0.0
  %v403 = vand.u32 %v74, 4294901760
  %v404 = vsub.f32 %v74, %v403
  %405 = vmatpush1.msra.mxu0 %v404
  %406 = vmatprep.subr.mxu0 0.0
  %v407 = vand.u32 %v75, 4294901760
  %v408 = vsub.f32 %v75, %v407
  %409 = vmatpush1.msra.mxu0 %v408
  %410 = vmatprep.subr.mxu0 0.0
  %v411 = vand.u32 %v76, 4294901760
  %v412 = vsub.f32 %v76, %v411
  %413 = vmatpush1.msra.mxu0 %v412
  %414 = vmatprep.subr.mxu0 0.0
  %v415 = vand.u32 %v77, 4294901760
  %v416 = vsub.f32 %v77, %v415
  %417 = vmatpush1.msra.mxu0 %v416
  %418 = vmatprep.subr.mxu0 0.0
  %v419 = vand.u32 %v78, 4294901760
  %v420 = vsub.f32 %v78, %v419
  %421 = vmatpush1.msra.mxu0 %v420
  %422 = vmatprep.subr.mxu0 0.0
  %v423 = vand.u32 %v79, 4294901760
  %v424 = vsub.f32 %v79, %v423
  %425 = vmatpush1.msra.mxu0 %v424
  %426 = vmatprep.subr.mxu0 0.0
  %v427 = vand.u32 %v80, 4294901760
  %v428 = vsub.f32 %v80, %v427
  %429 = vmatpush1.msra.mxu0 %v428
  %430 = vmatprep.subr.mxu0 0.0
  %v431 = vand.u32 %v81, 4294901760
  %v432 = vsub.f32 %v81, %v431
  %433 = vmatpush1.msra.mxu0 %v432
  %434 = vmatprep.subr.mxu0 0.0
  %v435 = vand.u32 %v82, 4294901760
  %v436 = vsub.f32 %v82, %v435
  %437 = vmatpush1.msra.mxu0 %v436
  %438 = vmatprep.subr.mxu0 0.0
  %v439 = vand.u32 %v83, 4294901760
  %v440 = vsub.f32 %v83, %v439
  %441 = vmatpush1.msra.mxu0 %v440
  %442 = vmatprep.subr.mxu0 0.0
  %v443 = vand.u32 %v84, 4294901760
  %v444 = vsub.f32 %v84, %v443
  %445 = vmatpush1.msra.mxu0 %v444
  %446 = vmatprep.subr.mxu0 0.0
  %v447 = vand.u32 %v85, 4294901760
  %v448 = vsub.f32 %v85, %v447
  %449 = vmatpush1.msra.mxu0 %v448
  %450 = vmatprep.subr.mxu0 0.0
  %v451 = vand.u32 %v86, 4294901760
  %v452 = vsub.f32 %v86, %v451
  %453 = vmatpush1.msra.mxu0 %v452
  %454 = vmatprep.subr.mxu0 0.0
  %v455 = vand.u32 %v87, 4294901760
  %v456 = vsub.f32 %v87, %v455
  %457 = vmatpush1.msra.mxu0 %v456
  %458 = vmatprep.subr.mxu0 0.0
  %459 = vmatpush1.msra.mxu0 0.0
  %460 = vmatprep.subr.mxu0 0.0
  %461 = vmatpush1.msra.mxu0 0.0
  %462 = vmatprep.subr.mxu0 0.0
  %463 = vmatpush1.msra.mxu0 0.0
  %464 = vmatprep.subr.mxu0 0.0
  %465 = vmatpush1.msra.mxu0 0.0
  %466 = vmatprep.subr.mxu0 0.0
  %467 = vmatpush1.msra.mxu0 0.0
  %468 = vmatprep.subr.mxu0 0.0
  %469 = vmatpush1.msra.mxu0 0.0
  %470 = vmatprep.subr.mxu0 0.0
  %471 = vmatpush1.msra.mxu0 0.0
  %472 = vmatprep.subr.mxu0 0.0
  %473 = vmatpush1.msra.mxu0 0.0
  %474 = vmatprep.subr.mxu0 0.0
  %475 = vmatpush1.msra.mxu0 0.0
  %476 = vmatprep.subr.mxu0 0.0
  %477 = vmatpush1.msra.mxu0 0.0
  %478 = vmatprep.subr.mxu0 0.0
  %479 = vmatpush1.msra.mxu0 0.0
  %480 = vmatprep.subr.mxu0 0.0
  %481 = vmatpush1.msra.mxu0 0.0
  %482 = vmatprep.subr.mxu0 0.0
  %483 = vmatpush1.msra.mxu0 0.0
  %484 = vmatprep.subr.mxu0 0.0
  %485 = vmatpush1.msra.mxu0 0.0
  %486 = vmatprep.subr.mxu0 0.0
  %487 = vmatpush1.msra.mxu0 0.0
  %488 = vmatprep.subr.mxu0 0.0
  %489 = vmatpush1.msra.mxu0 0.0
  %490 = vmatprep.mubr.f32.mxu0 0.0
  %v491 = vand.u32 %v20, 4294901760
  %v492 = vsub.f32 %v20, %v491
  %493 = vmatmul.mubr.f32.gmra.mrb[0].mxu0 %v492
  %v494 = vpop.f32.mrb[0].mxu0
  %v495 = vadd.f32 %v367, %v494
  %v496 = vpop.f32.mrb[0].mxu0
  %497 = vmatprep.mubr.f32.mxu0 0.0
  %v498 = vand.u32 %v21, 4294901760
  %v499 = vsub.f32 %v21, %v498
  %500 = vmatmul.mubr.f32.gmra.mrb[0].mxu0 %v499
  %v501 = vpop.f32.mrb[0].mxu0
  %v502 = vadd.f32 %v373, %v501
  %v503 = vpop.f32.mrb[0].mxu0
  %504 = vmatprep.mubr.f32.mxu0 0.0
  %v505 = vand.u32 %v22, 4294901760
  %v506 = vsub.f32 %v22, %v505
  %507 = vmatmul.mubr.f32.gmra.mrb[0].mxu0 %v506
  %v508 = vpop.f32.mrb[0].mxu0
  %v509 = vadd.f32 %v379, %v508
  %v510 = vpop.f32.mrb[0].mxu0
  %511 = vmatprep.mubr.f32.mxu0 0.0
  %v512 = vand.u32 %v23, 4294901760
  %v513 = vsub.f32 %v23, %v512
  %514 = vmatmul.mubr.f32.gmra.mrb[0].mxu0 %v513
  %v515 = vpop.f32.mrb[0].mxu0
  %v516 = vadd.f32 %v385, %v515
  %v517 = vpop.f32.mrb[0].mxu0
  %518 = vmatprep.mubr.f32.mxu0 0.0
  %v519 = vand.u32 %v24, 4294901760
  %v520 = vsub.f32 %v24, %v519
  %521 = vmatmul.mubr.f32.gmra.mrb[0].mxu0 %v520
  %v522 = vpop.f32.mrb[0].mxu0
  %v523 = vadd.f32 %v391, %v522
  %v524 = vpop.f32.mrb[0].mxu0
  %525 = vdwg.mxu0
  %526 = vmatprep.subr.mxu0 0.0
  %v527 = vand.u32 %v72, 4294901760
  %528 = vmatpush1.msra.mxu0 %v527
  %529 = vmatprep.subr.mxu0 0.0
  %v530 = vand.u32 %v73, 4294901760
  %531 = vmatpush1.msra.mxu0 %v530
  %532 = vmatprep.subr.mxu0 0.0
  %v533 = vand.u32 %v74, 4294901760
  %534 = vmatpush1.msra.mxu0 %v533
  %535 = vmatprep.subr.mxu0 0.0
  %v536 = vand.u32 %v75, 4294901760
  %537 = vmatpush1.msra.mxu0 %v536
  %538 = vmatprep.subr.mxu0 0.0
  %v539 = vand.u32 %v76, 4294901760
  %540 = vmatpush1.msra.mxu0 %v539
  %541 = vmatprep.subr.mxu0 0.0
  %v542 = vand.u32 %v77, 4294901760
  %543 = vmatpush1.msra.mxu0 %v542
  %544 = vmatprep.subr.mxu0 0.0
  %v545 = vand.u32 %v78, 4294901760
  %546 = vmatpush1.msra.mxu0 %v545
  %547 = vmatprep.subr.mxu0 0.0
  %v548 = vand.u32 %v79, 4294901760
  %549 = vmatpush1.msra.mxu0 %v548
  %550 = vmatprep.subr.mxu0 0.0
  %v551 = vand.u32 %v80, 4294901760
  %552 = vmatpush1.msra.mxu0 %v551
  %553 = vmatprep.subr.mxu0 0.0
  %v554 = vand.u32 %v81, 4294901760
  %555 = vmatpush1.msra.mxu0 %v554
  %556 = vmatprep.subr.mxu0 0.0
  %v557 = vand.u32 %v82, 4294901760
  %558 = vmatpush1.msra.mxu0 %v557
  %559 = vmatprep.subr.mxu0 0.0
  %v560 = vand.u32 %v83, 4294901760
  %561 = vmatpush1.msra.mxu0 %v560
  %562 = vmatprep.subr.mxu0 0.0
  %v563 = vand.u32 %v84, 4294901760
  %564 = vmatpush1.msra.mxu0 %v563
  %565 = vmatprep.subr.mxu0 0.0
  %v566 = vand.u32 %v85, 4294901760
  %567 = vmatpush1.msra.mxu0 %v566
  %568 = vmatprep.subr.mxu0 0.0
  %v569 = vand.u32 %v86, 4294901760
  %570 = vmatpush1.msra.mxu0 %v569
  %571 = vmatprep.subr.mxu0 0.0
  %v572 = vand.u32 %v87, 4294901760
  %573 = vmatpush1.msra.mxu0 %v572
  %574 = vmatprep.subr.mxu0 0.0
  %575 = vmatpush1.msra.mxu0 0.0
  %576 = vmatprep.subr.mxu0 0.0
  %577 = vmatpush1.msra.mxu0 0.0
  %578 = vmatprep.subr.mxu0 0.0
  %579 = vmatpush1.msra.mxu0 0.0
  %580 = vmatprep.subr.mxu0 0.0
  %581 = vmatpush1.msra.mxu0 0.0
  %582 = vmatprep.subr.mxu0 0.0
  %583 = vmatpush1.msra.mxu0 0.0
  %584 = vmatprep.subr.mxu0 0.0
  %585 = vmatpush1.msra.mxu0 0.0
  %586 = vmatprep.subr.mxu0 0.0
  %587 = vmatpush1.msra.mxu0 0.0
  %588 = vmatprep.subr.mxu0 0.0
  %589 = vmatpush1.msra.mxu0 0.0
  %590 = vmatprep.subr.mxu0 0.0
  %591 = vmatpush1.msra.mxu0 0.0
  %592 = vmatprep.subr.mxu0 0.0
  %593 = vmatpush1.msra.mxu0 0.0
  %594 = vmatprep.subr.mxu0 0.0
  %595 = vmatpush1.msra.mxu0 0.0
  %596 = vmatprep.subr.mxu0 0.0
  %597 = vmatpush1.msra.mxu0 0.0
  %598 = vmatprep.subr.mxu0 0.0
  %599 = vmatpush1.msra.mxu0 0.0
  %600 = vmatprep.subr.mxu0 0.0
  %601 = vmatpush1.msra.mxu0 0.0
  %602 = vmatprep.subr.mxu0 0.0
  %603 = vmatpush1.msra.mxu0 0.0
  %604 = vmatprep.subr.mxu0 0.0
  %605 = vmatpush1.msra.mxu0 0.0
  %606 = vmatprep.mubr.f32.mxu0 0.0
  %v607 = vand.u32 %v20, 4294901760
  %v608 = vsub.f32 %v20, %v607
  %v609 = vand.u32 %v608, 4294901760
  %610 = vmatmul.mubr.f32.gmra.mrb[0].mxu0 %v609
  %v611 = vpop.f32.mrb[0].mxu0
  %v612 = vadd.f32 %v495, %v611
  %v613 = vpop.f32.mrb[0].mxu0
  %614 = vmatprep.mubr.f32.mxu0 0.0
  %v615 = vand.u32 %v21, 4294901760
  %v616 = vsub.f32 %v21, %v615
  %v617 = vand.u32 %v616, 4294901760
  %618 = vmatmul.mubr.f32.gmra.mrb[0].mxu0 %v617
  %v619 = vpop.f32.mrb[0].mxu0
  %v620 = vadd.f32 %v502, %v619
  %v621 = vpop.f32.mrb[0].mxu0
  %622 = vmatprep.mubr.f32.mxu0 0.0
  %v623 = vand.u32 %v22, 4294901760
  %v624 = vsub.f32 %v22, %v623
  %v625 = vand.u32 %v624, 4294901760
  %626 = vmatmul.mubr.f32.gmra.mrb[0].mxu0 %v625
  %v627 = vpop.f32.mrb[0].mxu0
  %v628 = vadd.f32 %v509, %v627
  %v629 = vpop.f32.mrb[0].mxu0
  %630 = vmatprep.mubr.f32.mxu0 0.0
  %v631 = vand.u32 %v23, 4294901760
  %v632 = vsub.f32 %v23, %v631
  %v633 = vand.u32 %v632, 4294901760
  %634 = vmatmul.mubr.f32.gmra.mrb[0].mxu0 %v633
  %v635 = vpop.f32.mrb[0].mxu0
  %v636 = vadd.f32 %v516, %v635
  %v637 = vpop.f32.mrb[0].mxu0
  %638 = vmatprep.mubr.f32.mxu0 0.0
  %v639 = vand.u32 %v24, 4294901760
  %v640 = vsub.f32 %v24, %v639
  %v641 = vand.u32 %v640, 4294901760
  %642 = vmatmul.mubr.f32.gmra.mrb[0].mxu0 %v641
  %v643 = vpop.f32.mrb[0].mxu0
  %v644 = vadd.f32 %v523, %v643
  %v645 = vpop.f32.mrb[0].mxu0
  %646 = vdwg.mxu0
  %647 = vmatprep.subr.mxu0 0.0
  %v648 = vand.u32 %v72, 4294901760
  %v649 = vsub.f32 %v72, %v648
  %v650 = vand.u32 %v649, 4294901760
  %651 = vmatpush1.msra.mxu0 %v650
  %652 = vmatprep.subr.mxu0 0.0
  %v653 = vand.u32 %v73, 4294901760
  %v654 = vsub.f32 %v73, %v653
  %v655 = vand.u32 %v654, 4294901760
  %656 = vmatpush1.msra.mxu0 %v655
  %657 = vmatprep.subr.mxu0 0.0
  %v658 = vand.u32 %v74, 4294901760
  %v659 = vsub.f32 %v74, %v658
  %v660 = vand.u32 %v659, 4294901760
  %661 = vmatpush1.msra.mxu0 %v660
  %662 = vmatprep.subr.mxu0 0.0
  %v663 = vand.u32 %v75, 4294901760
  %v664 = vsub.f32 %v75, %v663
  %v665 = vand.u32 %v664, 4294901760
  %666 = vmatpush1.msra.mxu0 %v665
  %667 = vmatprep.subr.mxu0 0.0
  %v668 = vand.u32 %v76, 4294901760
  %v669 = vsub.f32 %v76, %v668
  %v670 = vand.u32 %v669, 4294901760
  %671 = vmatpush1.msra.mxu0 %v670
  %672 = vmatprep.subr.mxu0 0.0
  %v673 = vand.u32 %v77, 4294901760
  %v674 = vsub.f32 %v77, %v673
  %v675 = vand.u32 %v674, 4294901760
  %676 = vmatpush1.msra.mxu0 %v675
  %677 = vmatprep.subr.mxu0 0.0
  %v678 = vand.u32 %v78, 4294901760
  %v679 = vsub.f32 %v78, %v678
  %v680 = vand.u32 %v679, 4294901760
  %681 = vmatpush1.msra.mxu0 %v680
  %682 = vmatprep.subr.mxu0 0.0
  %v683 = vand.u32 %v79, 4294901760
  %v684 = vsub.f32 %v79, %v683
  %v685 = vand.u32 %v684, 4294901760
  %686 = vmatpush1.msra.mxu0 %v685
  %687 = vmatprep.subr.mxu0 0.0
  %v688 = vand.u32 %v80, 4294901760
  %v689 = vsub.f32 %v80, %v688
  %v690 = vand.u32 %v689, 4294901760
  %691 = vmatpush1.msra.mxu0 %v690
  %692 = vmatprep.subr.mxu0 0.0
  %v693 = vand.u32 %v81, 4294901760
  %v694 = vsub.f32 %v81, %v693
  %v695 = vand.u32 %v694, 4294901760
  %696 = vmatpush1.msra.mxu0 %v695
  %697 = vmatprep.subr.mxu0 0.0
  %v698 = vand.u32 %v82, 4294901760
  %v699 = vsub.f32 %v82, %v698
  %v700 = vand.u32 %v699, 4294901760
  %701 = vmatpush1.msra.mxu0 %v700
  %702 = vmatprep.subr.mxu0 0.0
  %v703 = vand.u32 %v83, 4294901760
  %v704 = vsub.f32 %v83, %v703
  %v705 = vand.u32 %v704, 4294901760
  %706 = vmatpush1.msra.mxu0 %v705
  %707 = vmatprep.subr.mxu0 0.0
  %v708 = vand.u32 %v84, 4294901760
  %v709 = vsub.f32 %v84, %v708
  %v710 = vand.u32 %v709, 4294901760
  %711 = vmatpush1.msra.mxu0 %v710
  %712 = vmatprep.subr.mxu0 0.0
  %v713 = vand.u32 %v85, 4294901760
  %v714 = vsub.f32 %v85, %v713
  %v715 = vand.u32 %v714, 4294901760
  %716 = vmatpush1.msra.mxu0 %v715
  %717 = vmatprep.subr.mxu0 0.0
  %v718 = vand.u32 %v86, 4294901760
  %v719 = vsub.f32 %v86, %v718
  %v720 = vand.u32 %v719, 4294901760
  %721 = vmatpush1.msra.mxu0 %v720
  %722 = vmatprep.subr.mxu0 0.0
  %v723 = vand.u32 %v87, 4294901760
  %v724 = vsub.f32 %v87, %v723
  %v725 = vand.u32 %v724, 4294901760
  %726 = vmatpush1.msra.mxu0 %v725
  %727 = vmatprep.subr.mxu0 0.0
  %728 = vmatpush1.msra.mxu0 0.0
  %729 = vmatprep.subr.mxu0 0.0
  %730 = vmatpush1.msra.mxu0 0.0
  %731 = vmatprep.subr.mxu0 0.0
  %732 = vmatpush1.msra.mxu0 0.0
  %733 = vmatprep.subr.mxu0 0.0
  %734 = vmatpush1.msra.mxu0 0.0
  %735 = vmatprep.subr.mxu0 0.0
  %736 = vmatpush1.msra.mxu0 0.0
  %737 = vmatprep.subr.mxu0 0.0
  %738 = vmatpush1.msra.mxu0 0.0
  %739 = vmatprep.subr.mxu0 0.0
  %740 = vmatpush1.msra.mxu0 0.0
  %741 = vmatprep.subr.mxu0 0.0
  %742 = vmatpush1.msra.mxu0 0.0
  %743 = vmatprep.subr.mxu0 0.0
  %744 = vmatpush1.msra.mxu0 0.0
  %745 = vmatprep.subr.mxu0 0.0
  %746 = vmatpush1.msra.mxu0 0.0
  %747 = vmatprep.subr.mxu0 0.0
  %748 = vmatpush1.msra.mxu0 0.0
  %749 = vmatprep.subr.mxu0 0.0
  %750 = vmatpush1.msra.mxu0 0.0
  %751 = vmatprep.subr.mxu0 0.0
  %752 = vmatpush1.msra.mxu0 0.0
  %753 = vmatprep.subr.mxu0 0.0
  %754 = vmatpush1.msra.mxu0 0.0
  %755 = vmatprep.subr.mxu0 0.0
  %756 = vmatpush1.msra.mxu0 0.0
  %757 = vmatprep.subr.mxu0 0.0
  %758 = vmatpush1.msra.mxu0 0.0
  %759 = vmatprep.mubr.f32.mxu0 0.0
  %v760 = vand.u32 %v20, 4294901760
  %761 = vmatmul.mubr.f32.gmra.mrb[0].mxu0 %v760
  %v762 = vpop.f32.mrb[0].mxu0
  %v763 = vadd.f32 %v612, %v762
  %v764 = vpop.f32.mrb[0].mxu0
  %765 = vmatprep.mubr.f32.mxu0 0.0
  %v766 = vand.u32 %v21, 4294901760
  %767 = vmatmul.mubr.f32.gmra.mrb[0].mxu0 %v766
  %v768 = vpop.f32.mrb[0].mxu0
  %v769 = vadd.f32 %v620, %v768
  %v770 = vpop.f32.mrb[0].mxu0
  %771 = vmatprep.mubr.f32.mxu0 0.0
  %v772 = vand.u32 %v22, 4294901760
  %773 = vmatmul.mubr.f32.gmra.mrb[0].mxu0 %v772
  %v774 = vpop.f32.mrb[0].mxu0
  %v775 = vadd.f32 %v628, %v774
  %v776 = vpop.f32.mrb[0].mxu0
  %777 = vmatprep.mubr.f32.mxu0 0.0
  %v778 = vand.u32 %v23, 4294901760
  %779 = vmatmul.mubr.f32.gmra.mrb[0].mxu0 %v778
  %v780 = vpop.f32.mrb[0].mxu0
  %v781 = vadd.f32 %v636, %v780
  %v782 = vpop.f32.mrb[0].mxu0
  %783 = vmatprep.mubr.f32.mxu0 0.0
  %v784 = vand.u32 %v24, 4294901760
  %785 = vmatmul.mubr.f32.gmra.mrb[0].mxu0 %v784
  %v786 = vpop.f32.mrb[0].mxu0
  %v787 = vadd.f32 %v644, %v786
  %v788 = vpop.f32.mrb[0].mxu0
  %789 = vdwg.mxu0
  %790 = vmatprep.subr.mxu0 0.0
  %v791 = vand.u32 %v72, 4294901760
  %792 = vmatpush1.msra.mxu0 %v791
  %793 = vmatprep.subr.mxu0 0.0
  %v794 = vand.u32 %v73, 4294901760
  %795 = vmatpush1.msra.mxu0 %v794
  %796 = vmatprep.subr.mxu0 0.0
  %v797 = vand.u32 %v74, 4294901760
  %798 = vmatpush1.msra.mxu0 %v797
  %799 = vmatprep.subr.mxu0 0.0
  %v800 = vand.u32 %v75, 4294901760
  %801 = vmatpush1.msra.mxu0 %v800
  %802 = vmatprep.subr.mxu0 0.0
  %v803 = vand.u32 %v76, 4294901760
  %804 = vmatpush1.msra.mxu0 %v803
  %805 = vmatprep.subr.mxu0 0.0
  %v806 = vand.u32 %v77, 4294901760
  %807 = vmatpush1.msra.mxu0 %v806
  %808 = vmatprep.subr.mxu0 0.0
  %v809 = vand.u32 %v78, 4294901760
  %810 = vmatpush1.msra.mxu0 %v809
  %811 = vmatprep.subr.mxu0 0.0
  %v812 = vand.u32 %v79, 4294901760
  %813 = vmatpush1.msra.mxu0 %v812
  %814 = vmatprep.subr.mxu0 0.0
  %v815 = vand.u32 %v80, 4294901760
  %816 = vmatpush1.msra.mxu0 %v815
  %817 = vmatprep.subr.mxu0 0.0
  %v818 = vand.u32 %v81, 4294901760
  %819 = vmatpush1.msra.mxu0 %v818
  %820 = vmatprep.subr.mxu0 0.0
  %v821 = vand.u32 %v82, 4294901760
  %822 = vmatpush1.msra.mxu0 %v821
  %823 = vmatprep.subr.mxu0 0.0
  %v824 = vand.u32 %v83, 4294901760
  %825 = vmatpush1.msra.mxu0 %v824
  %826 = vmatprep.subr.mxu0 0.0
  %v827 = vand.u32 %v84, 4294901760
  %828 = vmatpush1.msra.mxu0 %v827
  %829 = vmatprep.subr.mxu0 0.0
  %v830 = vand.u32 %v85, 4294901760
  %831 = vmatpush1.msra.mxu0 %v830
  %832 = vmatprep.subr.mxu0 0.0
  %v833 = vand.u32 %v86, 4294901760
  %834 = vmatpush1.msra.mxu0 %v833
  %835 = vmatprep.subr.mxu0 0.0
  %v836 = vand.u32 %v87, 4294901760
  %837 = vmatpush1.msra.mxu0 %v836
  %838 = vmatprep.subr.mxu0 0.0
  %839 = vmatpush1.msra.mxu0 0.0
  %840 = vmatprep.subr.mxu0 0.0
  %841 = vmatpush1.msra.mxu0 0.0
  %842 = vmatprep.subr.mxu0 0.0
  %843 = vmatpush1.msra.mxu0 0.0
  %844 = vmatprep.subr.mxu0 0.0
  %845 = vmatpush1.msra.mxu0 0.0
  %846 = vmatprep.subr.mxu0 0.0
  %847 = vmatpush1.msra.mxu0 0.0
  %848 = vmatprep.subr.mxu0 0.0
  %849 = vmatpush1.msra.mxu0 0.0
  %850 = vmatprep.subr.mxu0 0.0
  %851 = vmatpush1.msra.mxu0 0.0
  %852 = vmatprep.subr.mxu0 0.0
  %853 = vmatpush1.msra.mxu0 0.0
  %854 = vmatprep.subr.mxu0 0.0
  %855 = vmatpush1.msra.mxu0 0.0
  %856 = vmatprep.subr.mxu0 0.0
  %857 = vmatpush1.msra.mxu0 0.0
  %858 = vmatprep.subr.mxu0 0.0
  %859 = vmatpush1.msra.mxu0 0.0
  %860 = vmatprep.subr.mxu0 0.0
  %861 = vmatpush1.msra.mxu0 0.0
  %862 = vmatprep.subr.mxu0 0.0
  %863 = vmatpush1.msra.mxu0 0.0
  %864 = vmatprep.subr.mxu0 0.0
  %865 = vmatpush1.msra.mxu0 0.0
  %866 = vmatprep.subr.mxu0 0.0
  %867 = vmatpush1.msra.mxu0 0.0
  %868 = vmatprep.subr.mxu0 0.0
  %869 = vmatpush1.msra.mxu0 0.0
  %870 = vmatprep.mubr.f32.mxu0 0.0
  %v871 = vand.u32 %v20, 4294901760
  %872 = vmatmul.mubr.f32.gmra.mrb[0].mxu0 %v871
  %v873 = vpop.f32.mrb[0].mxu0
  %v874 = vadd.f32 %v763, %v873
  %v875 = vpop.f32.mrb[0].mxu0
  %876 = vmatprep.mubr.f32.mxu0 0.0
  %v877 = vand.u32 %v21, 4294901760
  %878 = vmatmul.mubr.f32.gmra.mrb[0].mxu0 %v877
  %v879 = vpop.f32.mrb[0].mxu0
  %v880 = vadd.f32 %v769, %v879
  %v881 = vpop.f32.mrb[0].mxu0
  %882 = vmatprep.mubr.f32.mxu0 0.0
  %v883 = vand.u32 %v22, 4294901760
  %884 = vmatmul.mubr.f32.gmra.mrb[0].mxu0 %v883
  %v885 = vpop.f32.mrb[0].mxu0
  %v886 = vadd.f32 %v775, %v885
  %v887 = vpop.f32.mrb[0].mxu0
  %888 = vmatprep.mubr.f32.mxu0 0.0
  %v889 = vand.u32 %v23, 4294901760
  %890 = vmatmul.mubr.f32.gmra.mrb[0].mxu0 %v889
  %v891 = vpop.f32.mrb[0].mxu0
  %v892 = vadd.f32 %v781, %v891
  %v893 = vpop.f32.mrb[0].mxu0
  %894 = vmatprep.mubr.f32.mxu0 0.0
  %v895 = vand.u32 %v24, 4294901760
  %896 = vmatmul.mubr.f32.gmra.mrb[0].mxu0 %v895
  %v897 = vpop.f32.mrb[0].mxu0
  %v898 = vadd.f32 %v787, %v897
  %v899 = vpop.f32.mrb[0].mxu0
  %900 = vdwg.mxu0
  %901 = vmatprep.subr.mxu0 0.0
  %v902 = vand.u32 %v55, 4294901760
  %903 = vmatpush1.msra.mxu0 %v902
  %904 = vmatprep.subr.mxu0 0.0
  %v905 = vand.u32 %v56, 4294901760
  %906 = vmatpush1.msra.mxu0 %v905
  %907 = vmatprep.subr.mxu0 0.0
  %v908 = vand.u32 %v57, 4294901760
  %909 = vmatpush1.msra.mxu0 %v908
  %910 = vmatprep.subr.mxu0 0.0
  %v911 = vand.u32 %v58, 4294901760
  %912 = vmatpush1.msra.mxu0 %v911
  %913 = vmatprep.subr.mxu0 0.0
  %v914 = vand.u32 %v59, 4294901760
  %915 = vmatpush1.msra.mxu0 %v914
  %916 = vmatprep.subr.mxu0 0.0
  %v917 = vand.u32 %v60, 4294901760
  %918 = vmatpush1.msra.mxu0 %v917
  %919 = vmatprep.subr.mxu0 0.0
  %v920 = vand.u32 %v61, 4294901760
  %921 = vmatpush1.msra.mxu0 %v920
  %922 = vmatprep.subr.mxu0 0.0
  %v923 = vand.u32 %v62, 4294901760
  %924 = vmatpush1.msra.mxu0 %v923
  %925 = vmatprep.subr.mxu0 0.0
  %v926 = vand.u32 %v63, 4294901760
  %927 = vmatpush1.msra.mxu0 %v926
  %928 = vmatprep.subr.mxu0 0.0
  %v929 = vand.u32 %v64, 4294901760
  %930 = vmatpush1.msra.mxu0 %v929
  %931 = vmatprep.subr.mxu0 0.0
  %v932 = vand.u32 %v65, 4294901760
  %933 = vmatpush1.msra.mxu0 %v932
  %934 = vmatprep.subr.mxu0 0.0
  %v935 = vand.u32 %v66, 4294901760
  %936 = vmatpush1.msra.mxu0 %v935
  %937 = vmatprep.subr.mxu0 0.0
  %v938 = vand.u32 %v67, 4294901760
  %939 = vmatpush1.msra.mxu0 %v938
  %940 = vmatprep.subr.mxu0 0.0
  %v941 = vand.u32 %v68, 4294901760
  %942 = vmatpush1.msra.mxu0 %v941
  %943 = vmatprep.subr.mxu0 0.0
  %v944 = vand.u32 %v69, 4294901760
  %945 = vmatpush1.msra.mxu0 %v944
  %946 = vmatprep.subr.mxu0 0.0
  %v947 = vand.u32 %v70, 4294901760
  %948 = vmatpush1.msra.mxu0 %v947
  %949 = vmatprep.subr.mxu0 0.0
  %950 = vmatpush1.msra.mxu0 0.0
  %951 = vmatprep.subr.mxu0 0.0
  %952 = vmatpush1.msra.mxu0 0.0
  %953 = vmatprep.subr.mxu0 0.0
  %954 = vmatpush1.msra.mxu0 0.0
  %955 = vmatprep.subr.mxu0 0.0
  %956 = vmatpush1.msra.mxu0 0.0
  %957 = vmatprep.subr.mxu0 0.0
  %958 = vmatpush1.msra.mxu0 0.0
  %959 = vmatprep.subr.mxu0 0.0
  %960 = vmatpush1.msra.mxu0 0.0
  %961 = vmatprep.subr.mxu0 0.0
  %962 = vmatpush1.msra.mxu0 0.0
  %963 = vmatprep.subr.mxu0 0.0
  %964 = vmatpush1.msra.mxu0 0.0
  %965 = vmatprep.subr.mxu0 0.0
  %966 = vmatpush1.msra.mxu0 0.0
  %967 = vmatprep.subr.mxu0 0.0
  %968 = vmatpush1.msra.mxu0 0.0
  %969 = vmatprep.subr.mxu0 0.0
  %970 = vmatpush1.msra.mxu0 0.0
  %971 = vmatprep.subr.mxu0 0.0
  %972 = vmatpush1.msra.mxu0 0.0
  %973 = vmatprep.subr.mxu0 0.0
  %974 = vmatpush1.msra.mxu0 0.0
  %975 = vmatprep.subr.mxu0 0.0
  %976 = vmatpush1.msra.mxu0 0.0
  %977 = vmatprep.subr.mxu0 0.0
  %978 = vmatpush1.msra.mxu0 0.0
  %979 = vmatprep.subr.mxu0 0.0
  %980 = vmatpush1.msra.mxu0 0.0
  %981 = vmatprep.mubr.f32.mxu0 0.0
  %v982 = vand.u32 %v43, 4294901760
  %v983 = vsub.f32 %v43, %v982
  %v984 = vand.u32 %v983, 4294901760
  %v985 = vsub.f32 %v983, %v984
  %v986 = vand.u32 %v985, 4294901760
  %987 = vmatmul.mubr.f32.gmra.mrb[0].mxu0 %v986
  %v988 = vpop.f32.mrb[0].mxu0
  %v989 = vadd.f32 %v874, %v988
  %v990 = vpop.f32.mrb[0].mxu0
  %991 = vmatprep.mubr.f32.mxu0 0.0
  %v992 = vand.u32 %v42, 4294901760
  %v993 = vsub.f32 %v42, %v992
  %v994 = vand.u32 %v993, 4294901760
  %v995 = vsub.f32 %v993, %v994
  %v996 = vand.u32 %v995, 4294901760
  %997 = vmatmul.mubr.f32.gmra.mrb[0].mxu0 %v996
  %v998 = vpop.f32.mrb[0].mxu0
  %v999 = vadd.f32 %v880, %v998
  %v1000 = vpop.f32.mrb[0].mxu0
  %1001 = vmatprep.mubr.f32.mxu0 0.0
  %v1002 = vand.u32 %v41, 4294901760
  %v1003 = vsub.f32 %v41, %v1002
  %v1004 = vand.u32 %v1003, 4294901760
  %v1005 = vsub.f32 %v1003, %v1004
  %v1006 = vand.u32 %v1005, 4294901760
  %1007 = vmatmul.mubr.f32.gmra.mrb[0].mxu0 %v1006
  %v1008 = vpop.f32.mrb[0].mxu0
  %v1009 = vadd.f32 %v886, %v1008
  %v1010 = vpop.f32.mrb[0].mxu0
  %1011 = vmatprep.mubr.f32.mxu0 0.0
  %v1012 = vand.u32 %v40, 4294901760
  %v1013 = vsub.f32 %v40, %v1012
  %v1014 = vand.u32 %v1013, 4294901760
  %v1015 = vsub.f32 %v1013, %v1014
  %v1016 = vand.u32 %v1015, 4294901760
  %1017 = vmatmul.mubr.f32.gmra.mrb[0].mxu0 %v1016
  %v1018 = vpop.f32.mrb[0].mxu0
  %v1019 = vadd.f32 %v892, %v1018
  %v1020 = vpop.f32.mrb[0].mxu0
  %1021 = vmatprep.mubr.f32.mxu0 0.0
  %v1022 = vand.u32 %v39, 4294901760
  %v1023 = vsub.f32 %v39, %v1022
  %v1024 = vand.u32 %v1023, 4294901760
  %v1025 = vsub.f32 %v1023, %v1024
  %v1026 = vand.u32 %v1025, 4294901760
  %1027 = vmatmul.mubr.f32.gmra.mrb[0].mxu0 %v1026
  %v1028 = vpop.f32.mrb[0].mxu0
  %v1029 = vadd.f32 %v898, %v1028
  %v1030 = vpop.f32.mrb[0].mxu0
  %1031 = vdwg.mxu0
  %1032 = vmatprep.subr.mxu0 0.0
  %v1033 = vand.u32 %v55, 4294901760
  %v1034 = vsub.f32 %v55, %v1033
  %v1035 = vand.u32 %v1034, 4294901760
  %v1036 = vsub.f32 %v1034, %v1035
  %v1037 = vand.u32 %v1036, 4294901760
  %1038 = vmatpush1.msra.mxu0 %v1037
  %1039 = vmatprep.subr.mxu0 0.0
  %v1040 = vand.u32 %v56, 4294901760
  %v1041 = vsub.f32 %v56, %v1040
  %v1042 = vand.u32 %v1041, 4294901760
  %v1043 = vsub.f32 %v1041, %v1042
  %v1044 = vand.u32 %v1043, 4294901760
  %1045 = vmatpush1.msra.mxu0 %v1044
  %1046 = vmatprep.subr.mxu0 0.0
  %v1047 = vand.u32 %v57, 4294901760
  %v1048 = vsub.f32 %v57, %v1047
  %v1049 = vand.u32 %v1048, 4294901760
  %v1050 = vsub.f32 %v1048, %v1049
  %v1051 = vand.u32 %v1050, 4294901760
  %1052 = vmatpush1.msra.mxu0 %v1051
  %1053 = vmatprep.subr.mxu0 0.0
  %v1054 = vand.u32 %v58, 4294901760
  %v1055 = vsub.f32 %v58, %v1054
  %v1056 = vand.u32 %v1055, 4294901760
  %v1057 = vsub.f32 %v1055, %v1056
  %v1058 = vand.u32 %v1057, 4294901760
  %1059 = vmatpush1.msra.mxu0 %v1058
  %1060 = vmatprep.subr.mxu0 0.0
  %v1061 = vand.u32 %v59, 4294901760
  %v1062 = vsub.f32 %v59, %v1061
  %v1063 = vand.u32 %v1062, 4294901760
  %v1064 = vsub.f32 %v1062, %v1063
  %v1065 = vand.u32 %v1064, 4294901760
  %1066 = vmatpush1.msra.mxu0 %v1065
  %1067 = vmatprep.subr.mxu0 0.0
  %v1068 = vand.u32 %v60, 4294901760
  %v1069 = vsub.f32 %v60, %v1068
  %v1070 = vand.u32 %v1069, 4294901760
  %v1071 = vsub.f32 %v1069, %v1070
  %v1072 = vand.u32 %v1071, 4294901760
  %1073 = vmatpush1.msra.mxu0 %v1072
  %1074 = vmatprep.subr.mxu0 0.0
  %v1075 = vand.u32 %v61, 4294901760
  %v1076 = vsub.f32 %v61, %v1075
  %v1077 = vand.u32 %v1076, 4294901760
  %v1078 = vsub.f32 %v1076, %v1077
  %v1079 = vand.u32 %v1078, 4294901760
  %1080 = vmatpush1.msra.mxu0 %v1079
  %1081 = vmatprep.subr.mxu0 0.0
  %v1082 = vand.u32 %v62, 4294901760
  %v1083 = vsub.f32 %v62, %v1082
  %v1084 = vand.u32 %v1083, 4294901760
  %v1085 = vsub.f32 %v1083, %v1084
  %v1086 = vand.u32 %v1085, 4294901760
  %1087 = vmatpush1.msra.mxu0 %v1086
  %1088 = vmatprep.subr.mxu0 0.0
  %v1089 = vand.u32 %v63, 4294901760
  %v1090 = vsub.f32 %v63, %v1089
  %v1091 = vand.u32 %v1090, 4294901760
  %v1092 = vsub.f32 %v1090, %v1091
  %v1093 = vand.u32 %v1092, 4294901760
  %1094 = vmatpush1.msra.mxu0 %v1093
  %1095 = vmatprep.subr.mxu0 0.0
  %v1096 = vand.u32 %v64, 4294901760
  %v1097 = vsub.f32 %v64, %v1096
  %v1098 = vand.u32 %v1097, 4294901760
  %v1099 = vsub.f32 %v1097, %v1098
  %v1100 = vand.u32 %v1099, 4294901760
  %1101 = vmatpush1.msra.mxu0 %v1100
  %1102 = vmatprep.subr.mxu0 0.0
  %v1103 = vand.u32 %v65, 4294901760
  %v1104 = vsub.f32 %v65, %v1103
  %v1105 = vand.u32 %v1104, 4294901760
  %v1106 = vsub.f32 %v1104, %v1105
  %v1107 = vand.u32 %v1106, 4294901760
  %1108 = vmatpush1.msra.mxu0 %v1107
  %1109 = vmatprep.subr.mxu0 0.0
  %v1110 = vand.u32 %v66, 4294901760
  %v1111 = vsub.f32 %v66, %v1110
  %v1112 = vand.u32 %v1111, 4294901760
  %v1113 = vsub.f32 %v1111, %v1112
  %v1114 = vand.u32 %v1113, 4294901760
  %1115 = vmatpush1.msra.mxu0 %v1114
  %1116 = vmatprep.subr.mxu0 0.0
  %v1117 = vand.u32 %v67, 4294901760
  %v1118 = vsub.f32 %v67, %v1117
  %v1119 = vand.u32 %v1118, 4294901760
  %v1120 = vsub.f32 %v1118, %v1119
  %v1121 = vand.u32 %v1120, 4294901760
  %1122 = vmatpush1.msra.mxu0 %v1121
  %1123 = vmatprep.subr.mxu0 0.0
  %v1124 = vand.u32 %v68, 4294901760
  %v1125 = vsub.f32 %v68, %v1124
  %v1126 = vand.u32 %v1125, 4294901760
  %v1127 = vsub.f32 %v1125, %v1126
  %v1128 = vand.u32 %v1127, 4294901760
  %1129 = vmatpush1.msra.mxu0 %v1128
  %1130 = vmatprep.subr.mxu0 0.0
  %v1131 = vand.u32 %v69, 4294901760
  %v1132 = vsub.f32 %v69, %v1131
  %v1133 = vand.u32 %v1132, 4294901760
  %v1134 = vsub.f32 %v1132, %v1133
  %v1135 = vand.u32 %v1134, 4294901760
  %1136 = vmatpush1.msra.mxu0 %v1135
  %1137 = vmatprep.subr.mxu0 0.0
  %v1138 = vand.u32 %v70, 4294901760
  %v1139 = vsub.f32 %v70, %v1138
  %v1140 = vand.u32 %v1139, 4294901760
  %v1141 = vsub.f32 %v1139, %v1140
  %v1142 = vand.u32 %v1141, 4294901760
  %1143 = vmatpush1.msra.mxu0 %v1142
  %1144 = vmatprep.subr.mxu0 0.0
  %1145 = vmatpush1.msra.mxu0 0.0
  %1146 = vmatprep.subr.mxu0 0.0
  %1147 = vmatpush1.msra.mxu0 0.0
  %1148 = vmatprep.subr.mxu0 0.0
  %1149 = vmatpush1.msra.mxu0 0.0
  %1150 = vmatprep.subr.mxu0 0.0
  %1151 = vmatpush1.msra.mxu0 0.0
  %1152 = vmatprep.subr.mxu0 0.0
  %1153 = vmatpush1.msra.mxu0 0.0
  %1154 = vmatprep.subr.mxu0 0.0
  %1155 = vmatpush1.msra.mxu0 0.0
  %1156 = vmatprep.subr.mxu0 0.0
  %1157 = vmatpush1.msra.mxu0 0.0
  %1158 = vmatprep.subr.mxu0 0.0
  %1159 = vmatpush1.msra.mxu0 0.0
  %1160 = vmatprep.subr.mxu0 0.0
  %1161 = vmatpush1.msra.mxu0 0.0
  %1162 = vmatprep.subr.mxu0 0.0
  %1163 = vmatpush1.msra.mxu0 0.0
  %1164 = vmatprep.subr.mxu0 0.0
  %1165 = vmatpush1.msra.mxu0 0.0
  %1166 = vmatprep.subr.mxu0 0.0
  %1167 = vmatpush1.msra.mxu0 0.0
  %1168 = vmatprep.subr.mxu0 0.0
  %1169 = vmatpush1.msra.mxu0 0.0
  %1170 = vmatprep.subr.mxu0 0.0
  %1171 = vmatpush1.msra.mxu0 0.0
  %1172 = vmatprep.subr.mxu0 0.0
  %1173 = vmatpush1.msra.mxu0 0.0
  %1174 = vmatprep.subr.mxu0 0.0
  %1175 = vmatpush1.msra.mxu0 0.0
  %1176 = vmatprep.mubr.f32.mxu0 0.0
  %v1177 = vand.u32 %v43, 4294901760
  %1178 = vmatmul.mubr.f32.gmra.mrb[0].mxu0 %v1177
  %v1179 = vpop.f32.mrb[0].mxu0
  %v1180 = vadd.f32 %v989, %v1179
  %v1181 = vpop.f32.mrb[0].mxu0
  %1182 = vmatprep.mubr.f32.mxu0 0.0
  %v1183 = vand.u32 %v42, 4294901760
  %1184 = vmatmul.mubr.f32.gmra.mrb[0].mxu0 %v1183
  %v1185 = vpop.f32.mrb[0].mxu0
  %v1186 = vadd.f32 %v999, %v1185
  %v1187 = vpop.f32.mrb[0].mxu0
  %1188 = vmatprep.mubr.f32.mxu0 0.0
  %v1189 = vand.u32 %v41, 4294901760
  %1190 = vmatmul.mubr.f32.gmra.mrb[0].mxu0 %v1189
  %v1191 = vpop.f32.mrb[0].mxu0
  %v1192 = vadd.f32 %v1009, %v1191
  %v1193 = vpop.f32.mrb[0].mxu0
  %1194 = vmatprep.mubr.f32.mxu0 0.0
  %v1195 = vand.u32 %v40, 4294901760
  %1196 = vmatmul.mubr.f32.gmra.mrb[0].mxu0 %v1195
  %v1197 = vpop.f32.mrb[0].mxu0
  %v1198 = vadd.f32 %v1019, %v1197
  %v1199 = vpop.f32.mrb[0].mxu0
  %1200 = vmatprep.mubr.f32.mxu0 0.0
  %v1201 = vand.u32 %v39, 4294901760
  %1202 = vmatmul.mubr.f32.gmra.mrb[0].mxu0 %v1201
  %v1203 = vpop.f32.mrb[0].mxu0
  %v1204 = vadd.f32 %v1029, %v1203
  %v1205 = vpop.f32.mrb[0].mxu0
  %1206 = vdwg.mxu0
  %1207 = vmatprep.subr.mxu0 0.0
  %v1208 = vand.u32 %v55, 4294901760
  %v1209 = vsub.f32 %v55, %v1208
  %1210 = vmatpush1.msra.mxu0 %v1209
  %1211 = vmatprep.subr.mxu0 0.0
  %v1212 = vand.u32 %v56, 4294901760
  %v1213 = vsub.f32 %v56, %v1212
  %1214 = vmatpush1.msra.mxu0 %v1213
  %1215 = vmatprep.subr.mxu0 0.0
  %v1216 = vand.u32 %v57, 4294901760
  %v1217 = vsub.f32 %v57, %v1216
  %1218 = vmatpush1.msra.mxu0 %v1217
  %1219 = vmatprep.subr.mxu0 0.0
  %v1220 = vand.u32 %v58, 4294901760
  %v1221 = vsub.f32 %v58, %v1220
  %1222 = vmatpush1.msra.mxu0 %v1221
  %1223 = vmatprep.subr.mxu0 0.0
  %v1224 = vand.u32 %v59, 4294901760
  %v1225 = vsub.f32 %v59, %v1224
  %1226 = vmatpush1.msra.mxu0 %v1225
  %1227 = vmatprep.subr.mxu0 0.0
  %v1228 = vand.u32 %v60, 4294901760
  %v1229 = vsub.f32 %v60, %v1228
  %1230 = vmatpush1.msra.mxu0 %v1229
  %1231 = vmatprep.subr.mxu0 0.0
  %v1232 = vand.u32 %v61, 4294901760
  %v1233 = vsub.f32 %v61, %v1232
  %1234 = vmatpush1.msra.mxu0 %v1233
  %1235 = vmatprep.subr.mxu0 0.0
  %v1236 = vand.u32 %v62, 4294901760
  %v1237 = vsub.f32 %v62, %v1236
  %1238 = vmatpush1.msra.mxu0 %v1237
  %1239 = vmatprep.subr.mxu0 0.0
  %v1240 = vand.u32 %v63, 4294901760
  %v1241 = vsub.f32 %v63, %v1240
  %1242 = vmatpush1.msra.mxu0 %v1241
  %1243 = vmatprep.subr.mxu0 0.0
  %v1244 = vand.u32 %v64, 4294901760
  %v1245 = vsub.f32 %v64, %v1244
  %1246 = vmatpush1.msra.mxu0 %v1245
  %1247 = vmatprep.subr.mxu0 0.0
  %v1248 = vand.u32 %v65, 4294901760
  %v1249 = vsub.f32 %v65, %v1248
  %1250 = vmatpush1.msra.mxu0 %v1249
  %1251 = vmatprep.subr.mxu0 0.0
  %v1252 = vand.u32 %v66, 4294901760
  %v1253 = vsub.f32 %v66, %v1252
  %1254 = vmatpush1.msra.mxu0 %v1253
  %1255 = vmatprep.subr.mxu0 0.0
  %v1256 = vand.u32 %v67, 4294901760
  %v1257 = vsub.f32 %v67, %v1256
  %1258 = vmatpush1.msra.mxu0 %v1257
  %1259 = vmatprep.subr.mxu0 0.0
  %v1260 = vand.u32 %v68, 4294901760
  %v1261 = vsub.f32 %v68, %v1260
  %1262 = vmatpush1.msra.mxu0 %v1261
  %1263 = vmatprep.subr.mxu0 0.0
  %v1264 = vand.u32 %v69, 4294901760
  %v1265 = vsub.f32 %v69, %v1264
  %1266 = vmatpush1.msra.mxu0 %v1265
  %1267 = vmatprep.subr.mxu0 0.0
  %v1268 = vand.u32 %v70, 4294901760
  %v1269 = vsub.f32 %v70, %v1268
  %1270 = vmatpush1.msra.mxu0 %v1269
  %1271 = vmatprep.subr.mxu0 0.0
  %1272 = vmatpush1.msra.mxu0 0.0
  %1273 = vmatprep.subr.mxu0 0.0
  %1274 = vmatpush1.msra.mxu0 0.0
  %1275 = vmatprep.subr.mxu0 0.0
  %1276 = vmatpush1.msra.mxu0 0.0
  %1277 = vmatprep.subr.mxu0 0.0
  %1278 = vmatpush1.msra.mxu0 0.0
  %1279 = vmatprep.subr.mxu0 0.0
  %1280 = vmatpush1.msra.mxu0 0.0
  %1281 = vmatprep.subr.mxu0 0.0
  %1282 = vmatpush1.msra.mxu0 0.0
  %1283 = vmatprep.subr.mxu0 0.0
  %1284 = vmatpush1.msra.mxu0 0.0
  %1285 = vmatprep.subr.mxu0 0.0
  %1286 = vmatpush1.msra.mxu0 0.0
  %1287 = vmatprep.subr.mxu0 0.0
  %1288 = vmatpush1.msra.mxu0 0.0
  %1289 = vmatprep.subr.mxu0 0.0
  %1290 = vmatpush1.msra.mxu0 0.0
  %1291 = vmatprep.subr.mxu0 0.0
  %1292 = vmatpush1.msra.mxu0 0.0
  %1293 = vmatprep.subr.mxu0 0.0
  %1294 = vmatpush1.msra.mxu0 0.0
  %1295 = vmatprep.subr.mxu0 0.0
  %1296 = vmatpush1.msra.mxu0 0.0
  %1297 = vmatprep.subr.mxu0 0.0
  %1298 = vmatpush1.msra.mxu0 0.0
  %1299 = vmatprep.subr.mxu0 0.0
  %1300 = vmatpush1.msra.mxu0 0.0
  %1301 = vmatprep.subr.mxu0 0.0
  %1302 = vmatpush1.msra.mxu0 0.0
  %1303 = vmatprep.mubr.f32.mxu0 0.0
  %v1304 = vand.u32 %v43, 4294901760
  %v1305 = vsub.f32 %v43, %v1304
  %1306 = vmatmul.mubr.f32.gmra.mrb[0].mxu0 %v1305
  %v1307 = vpop.f32.mrb[0].mxu0
  %v1308 = vadd.f32 %v1180, %v1307
  %v1309 = vpop.f32.mrb[0].mxu0
  %1310 = vmatprep.mubr.f32.mxu0 0.0
  %v1311 = vand.u32 %v42, 4294901760
  %v1312 = vsub.f32 %v42, %v1311
  %1313 = vmatmul.mubr.f32.gmra.mrb[0].mxu0 %v1312
  %v1314 = vpop.f32.mrb[0].mxu0
  %v1315 = vadd.f32 %v1186, %v1314
  %v1316 = vpop.f32.mrb[0].mxu0
  %1317 = vmatprep.mubr.f32.mxu0 0.0
  %v1318 = vand.u32 %v41, 4294901760
  %v1319 = vsub.f32 %v41, %v1318
  %1320 = vmatmul.mubr.f32.gmra.mrb[0].mxu0 %v1319
  %v1321 = vpop.f32.mrb[0].mxu0
  %v1322 = vadd.f32 %v1192, %v1321
  %v1323 = vpop.f32.mrb[0].mxu0
  %1324 = vmatprep.mubr.f32.mxu0 0.0
  %v1325 = vand.u32 %v40, 4294901760
  %v1326 = vsub.f32 %v40, %v1325
  %1327 = vmatmul.mubr.f32.gmra.mrb[0].mxu0 %v1326
  %v1328 = vpop.f32.mrb[0].mxu0
  %v1329 = vadd.f32 %v1198, %v1328
  %v1330 = vpop.f32.mrb[0].mxu0
  %1331 = vmatprep.mubr.f32.mxu0 0.0
  %v1332 = vand.u32 %v39, 4294901760
  %v1333 = vsub.f32 %v39, %v1332
  %1334 = vmatmul.mubr.f32.gmra.mrb[0].mxu0 %v1333
  %v1335 = vpop.f32.mrb[0].mxu0
  %v1336 = vadd.f32 %v1204, %v1335
  %v1337 = vpop.f32.mrb[0].mxu0
  %1338 = vdwg.mxu0
  %1339 = vmatprep.subr.mxu0 0.0
  %v1340 = vand.u32 %v55, 4294901760
  %1341 = vmatpush1.msra.mxu0 %v1340
  %1342 = vmatprep.subr.mxu0 0.0
  %v1343 = vand.u32 %v56, 4294901760
  %1344 = vmatpush1.msra.mxu0 %v1343
  %1345 = vmatprep.subr.mxu0 0.0
  %v1346 = vand.u32 %v57, 4294901760
  %1347 = vmatpush1.msra.mxu0 %v1346
  %1348 = vmatprep.subr.mxu0 0.0
  %v1349 = vand.u32 %v58, 4294901760
  %1350 = vmatpush1.msra.mxu0 %v1349
  %1351 = vmatprep.subr.mxu0 0.0
  %v1352 = vand.u32 %v59, 4294901760
  %1353 = vmatpush1.msra.mxu0 %v1352
  %1354 = vmatprep.subr.mxu0 0.0
  %v1355 = vand.u32 %v60, 4294901760
  %1356 = vmatpush1.msra.mxu0 %v1355
  %1357 = vmatprep.subr.mxu0 0.0
  %v1358 = vand.u32 %v61, 4294901760
  %1359 = vmatpush1.msra.mxu0 %v1358
  %1360 = vmatprep.subr.mxu0 0.0
  %v1361 = vand.u32 %v62, 4294901760
  %1362 = vmatpush1.msra.mxu0 %v1361
  %1363 = vmatprep.subr.mxu0 0.0
  %v1364 = vand.u32 %v63, 4294901760
  %1365 = vmatpush1.msra.mxu0 %v1364
  %1366 = vmatprep.subr.mxu0 0.0
  %v1367 = vand.u32 %v64, 4294901760
  %1368 = vmatpush1.msra.mxu0 %v1367
  %1369 = vmatprep.subr.mxu0 0.0
  %v1370 = vand.u32 %v65, 4294901760
  %1371 = vmatpush1.msra.mxu0 %v1370
  %1372 = vmatprep.subr.mxu0 0.0
  %v1373 = vand.u32 %v66, 4294901760
  %1374 = vmatpush1.msra.mxu0 %v1373
  %1375 = vmatprep.subr.mxu0 0.0
  %v1376 = vand.u32 %v67, 4294901760
  %1377 = vmatpush1.msra.mxu0 %v1376
  %1378 = vmatprep.subr.mxu0 0.0
  %v1379 = vand.u32 %v68, 4294901760
  %1380 = vmatpush1.msra.mxu0 %v1379
  %1381 = vmatprep.subr.mxu0 0.0
  %v1382 = vand.u32 %v69, 4294901760
  %1383 = vmatpush1.msra.mxu0 %v1382
  %1384 = vmatprep.subr.mxu0 0.0
  %v1385 = vand.u32 %v70, 4294901760
  %1386 = vmatpush1.msra.mxu0 %v1385
  %1387 = vmatprep.subr.mxu0 0.0
  %1388 = vmatpush1.msra.mxu0 0.0
  %1389 = vmatprep.subr.mxu0 0.0
  %1390 = vmatpush1.msra.mxu0 0.0
  %1391 = vmatprep.subr.mxu0 0.0
  %1392 = vmatpush1.msra.mxu0 0.0
  %1393 = vmatprep.subr.mxu0 0.0
  %1394 = vmatpush1.msra.mxu0 0.0
  %1395 = vmatprep.subr.mxu0 0.0
  %1396 = vmatpush1.msra.mxu0 0.0
  %1397 = vmatprep.subr.mxu0 0.0
  %1398 = vmatpush1.msra.mxu0 0.0
  %1399 = vmatprep.subr.mxu0 0.0
  %1400 = vmatpush1.msra.mxu0 0.0
  %1401 = vmatprep.subr.mxu0 0.0
  %1402 = vmatpush1.msra.mxu0 0.0
  %1403 = vmatprep.subr.mxu0 0.0
  %1404 = vmatpush1.msra.mxu0 0.0
  %1405 = vmatprep.subr.mxu0 0.0
  %1406 = vmatpush1.msra.mxu0 0.0
  %1407 = vmatprep.subr.mxu0 0.0
  %1408 = vmatpush1.msra.mxu0 0.0
  %1409 = vmatprep.subr.mxu0 0.0
  %1410 = vmatpush1.msra.mxu0 0.0
  %1411 = vmatprep.subr.mxu0 0.0
  %1412 = vmatpush1.msra.mxu0 0.0
  %1413 = vmatprep.subr.mxu0 0.0
  %1414 = vmatpush1.msra.mxu0 0.0
  %1415 = vmatprep.subr.mxu0 0.0
  %1416 = vmatpush1.msra.mxu0 0.0
  %1417 = vmatprep.subr.mxu0 0.0
  %1418 = vmatpush1.msra.mxu0 0.0
  %1419 = vmatprep.mubr.f32.mxu0 0.0
  %v1420 = vand.u32 %v43, 4294901760
  %v1421 = vsub.f32 %v43, %v1420
  %v1422 = vand.u32 %v1421, 4294901760
  %1423 = vmatmul.mubr.f32.gmra.mrb[0].mxu0 %v1422
  %v1424 = vpop.f32.mrb[0].mxu0
  %v1425 = vadd.f32 %v1308, %v1424
  %v1426 = vpop.f32.mrb[0].mxu0
  %1427 = vmatprep.mubr.f32.mxu0 0.0
  %v1428 = vand.u32 %v42, 4294901760
  %v1429 = vsub.f32 %v42, %v1428
  %v1430 = vand.u32 %v1429, 4294901760
  %1431 = vmatmul.mubr.f32.gmra.mrb[0].mxu0 %v1430
  %v1432 = vpop.f32.mrb[0].mxu0
  %v1433 = vadd.f32 %v1315, %v1432
  %v1434 = vpop.f32.mrb[0].mxu0
  %1435 = vmatprep.mubr.f32.mxu0 0.0
  %v1436 = vand.u32 %v41, 4294901760
  %v1437 = vsub.f32 %v41, %v1436
  %v1438 = vand.u32 %v1437, 4294901760
  %1439 = vmatmul.mubr.f32.gmra.mrb[0].mxu0 %v1438
  %v1440 = vpop.f32.mrb[0].mxu0
  %v1441 = vadd.f32 %v1322, %v1440
  %v1442 = vpop.f32.mrb[0].mxu0
  %1443 = vmatprep.mubr.f32.mxu0 0.0
  %v1444 = vand.u32 %v40, 4294901760
  %v1445 = vsub.f32 %v40, %v1444
  %v1446 = vand.u32 %v1445, 4294901760
  %1447 = vmatmul.mubr.f32.gmra.mrb[0].mxu0 %v1446
  %v1448 = vpop.f32.mrb[0].mxu0
  %v1449 = vadd.f32 %v1329, %v1448
  %v1450 = vpop.f32.mrb[0].mxu0
  %1451 = vmatprep.mubr.f32.mxu0 0.0
  %v1452 = vand.u32 %v39, 4294901760
  %v1453 = vsub.f32 %v39, %v1452
  %v1454 = vand.u32 %v1453, 4294901760
  %1455 = vmatmul.mubr.f32.gmra.mrb[0].mxu0 %v1454
  %v1456 = vpop.f32.mrb[0].mxu0
  %v1457 = vadd.f32 %v1336, %v1456
  %v1458 = vpop.f32.mrb[0].mxu0
  %1459 = vdwg.mxu0
  %1460 = vmatprep.subr.mxu0 0.0
  %v1461 = vand.u32 %v55, 4294901760
  %v1462 = vsub.f32 %v55, %v1461
  %v1463 = vand.u32 %v1462, 4294901760
  %1464 = vmatpush1.msra.mxu0 %v1463
  %1465 = vmatprep.subr.mxu0 0.0
  %v1466 = vand.u32 %v56, 4294901760
  %v1467 = vsub.f32 %v56, %v1466
  %v1468 = vand.u32 %v1467, 4294901760
  %1469 = vmatpush1.msra.mxu0 %v1468
  %1470 = vmatprep.subr.mxu0 0.0
  %v1471 = vand.u32 %v57, 4294901760
  %v1472 = vsub.f32 %v57, %v1471
  %v1473 = vand.u32 %v1472, 4294901760
  %1474 = vmatpush1.msra.mxu0 %v1473
  %1475 = vmatprep.subr.mxu0 0.0
  %v1476 = vand.u32 %v58, 4294901760
  %v1477 = vsub.f32 %v58, %v1476
  %v1478 = vand.u32 %v1477, 4294901760
  %1479 = vmatpush1.msra.mxu0 %v1478
  %1480 = vmatprep.subr.mxu0 0.0
  %v1481 = vand.u32 %v59, 4294901760
  %v1482 = vsub.f32 %v59, %v1481
  %v1483 = vand.u32 %v1482, 4294901760
  %1484 = vmatpush1.msra.mxu0 %v1483
  %1485 = vmatprep.subr.mxu0 0.0
  %v1486 = vand.u32 %v60, 4294901760
  %v1487 = vsub.f32 %v60, %v1486
  %v1488 = vand.u32 %v1487, 4294901760
  %1489 = vmatpush1.msra.mxu0 %v1488
  %1490 = vmatprep.subr.mxu0 0.0
  %v1491 = vand.u32 %v61, 4294901760
  %v1492 = vsub.f32 %v61, %v1491
  %v1493 = vand.u32 %v1492, 4294901760
  %1494 = vmatpush1.msra.mxu0 %v1493
  %1495 = vmatprep.subr.mxu0 0.0
  %v1496 = vand.u32 %v62, 4294901760
  %v1497 = vsub.f32 %v62, %v1496
  %v1498 = vand.u32 %v1497, 4294901760
  %1499 = vmatpush1.msra.mxu0 %v1498
  %1500 = vmatprep.subr.mxu0 0.0
  %v1501 = vand.u32 %v63, 4294901760
  %v1502 = vsub.f32 %v63, %v1501
  %v1503 = vand.u32 %v1502, 4294901760
  %1504 = vmatpush1.msra.mxu0 %v1503
  %1505 = vmatprep.subr.mxu0 0.0
  %v1506 = vand.u32 %v64, 4294901760
  %v1507 = vsub.f32 %v64, %v1506
  %v1508 = vand.u32 %v1507, 4294901760
  %1509 = vmatpush1.msra.mxu0 %v1508
  %1510 = vmatprep.subr.mxu0 0.0
  %v1511 = vand.u32 %v65, 4294901760
  %v1512 = vsub.f32 %v65, %v1511
  %v1513 = vand.u32 %v1512, 4294901760
  %1514 = vmatpush1.msra.mxu0 %v1513
  %1515 = vmatprep.subr.mxu0 0.0
  %v1516 = vand.u32 %v66, 4294901760
  %v1517 = vsub.f32 %v66, %v1516
  %v1518 = vand.u32 %v1517, 4294901760
  %1519 = vmatpush1.msra.mxu0 %v1518
  %1520 = vmatprep.subr.mxu0 0.0
  %v1521 = vand.u32 %v67, 4294901760
  %v1522 = vsub.f32 %v67, %v1521
  %v1523 = vand.u32 %v1522, 4294901760
  %1524 = vmatpush1.msra.mxu0 %v1523
  %1525 = vmatprep.subr.mxu0 0.0
  %v1526 = vand.u32 %v68, 4294901760
  %v1527 = vsub.f32 %v68, %v1526
  %v1528 = vand.u32 %v1527, 4294901760
  %1529 = vmatpush1.msra.mxu0 %v1528
  %1530 = vmatprep.subr.mxu0 0.0
  %v1531 = vand.u32 %v69, 4294901760
  %v1532 = vsub.f32 %v69, %v1531
  %v1533 = vand.u32 %v1532, 4294901760
  %1534 = vmatpush1.msra.mxu0 %v1533
  %1535 = vmatprep.subr.mxu0 0.0
  %v1536 = vand.u32 %v70, 4294901760
  %v1537 = vsub.f32 %v70, %v1536
  %v1538 = vand.u32 %v1537, 4294901760
  %1539 = vmatpush1.msra.mxu0 %v1538
  %1540 = vmatprep.subr.mxu0 0.0
  %1541 = vmatpush1.msra.mxu0 0.0
  %1542 = vmatprep.subr.mxu0 0.0
  %1543 = vmatpush1.msra.mxu0 0.0
  %1544 = vmatprep.subr.mxu0 0.0
  %1545 = vmatpush1.msra.mxu0 0.0
  %1546 = vmatprep.subr.mxu0 0.0
  %1547 = vmatpush1.msra.mxu0 0.0
  %1548 = vmatprep.subr.mxu0 0.0
  %1549 = vmatpush1.msra.mxu0 0.0
  %1550 = vmatprep.subr.mxu0 0.0
  %1551 = vmatpush1.msra.mxu0 0.0
  %1552 = vmatprep.subr.mxu0 0.0
  %1553 = vmatpush1.msra.mxu0 0.0
  %1554 = vmatprep.subr.mxu0 0.0
  %1555 = vmatpush1.msra.mxu0 0.0
  %1556 = vmatprep.subr.mxu0 0.0
  %1557 = vmatpush1.msra.mxu0 0.0
  %1558 = vmatprep.subr.mxu0 0.0
  %1559 = vmatpush1.msra.mxu0 0.0
  %1560 = vmatprep.subr.mxu0 0.0
  %1561 = vmatpush1.msra.mxu0 0.0
  %1562 = vmatprep.subr.mxu0 0.0
  %1563 = vmatpush1.msra.mxu0 0.0
  %1564 = vmatprep.subr.mxu0 0.0
  %1565 = vmatpush1.msra.mxu0 0.0
  %1566 = vmatprep.subr.mxu0 0.0
  %1567 = vmatpush1.msra.mxu0 0.0
  %1568 = vmatprep.subr.mxu0 0.0
  %1569 = vmatpush1.msra.mxu0 0.0
  %1570 = vmatprep.subr.mxu0 0.0
  %1571 = vmatpush1.msra.mxu0 0.0
  %1572 = vmatprep.mubr.f32.mxu0 0.0
  %v1573 = vand.u32 %v43, 4294901760
  %1574 = vmatmul.mubr.f32.gmra.mrb[0].mxu0 %v1573
  %v1575 = vpop.f32.mrb[0].mxu0
  %v1576 = vadd.f32 %v1425, %v1575
  %v1577 = vpop.f32.mrb[0].mxu0
  %1578 = vmatprep.mubr.f32.mxu0 0.0
  %v1579 = vand.u32 %v42, 4294901760
  %1580 = vmatmul.mubr.f32.gmra.mrb[0].mxu0 %v1579
  %v1581 = vpop.f32.mrb[0].mxu0
  %v1582 = vadd.f32 %v1433, %v1581
  %v1583 = vpop.f32.mrb[0].mxu0
  %1584 = vmatprep.mubr.f32.mxu0 0.0
  %v1585 = vand.u32 %v41, 4294901760
  %1586 = vmatmul.mubr.f32.gmra.mrb[0].mxu0 %v1585
  %v1587 = vpop.f32.mrb[0].mxu0
  %v1588 = vadd.f32 %v1441, %v1587
  %v1589 = vpop.f32.mrb[0].mxu0
  %1590 = vmatprep.mubr.f32.mxu0 0.0
  %v1591 = vand.u32 %v40, 4294901760
  %1592 = vmatmul.mubr.f32.gmra.mrb[0].mxu0 %v1591
  %v1593 = vpop.f32.mrb[0].mxu0
  %v1594 = vadd.f32 %v1449, %v1593
  %v1595 = vpop.f32.mrb[0].mxu0
  %1596 = vmatprep.mubr.f32.mxu0 0.0
  %v1597 = vand.u32 %v39, 4294901760
  %1598 = vmatmul.mubr.f32.gmra.mrb[0].mxu0 %v1597
  %v1599 = vpop.f32.mrb[0].mxu0
  %v1600 = vadd.f32 %v1457, %v1599
  %v1601 = vpop.f32.mrb[0].mxu0
  %1602 = vdwg.mxu0
  %1603 = vmatprep.subr.mxu0 0.0
  %v1604 = vand.u32 %v55, 4294901760
  %1605 = vmatpush1.msra.mxu0 %v1604
  %1606 = vmatprep.subr.mxu0 0.0
  %v1607 = vand.u32 %v56, 4294901760
  %1608 = vmatpush1.msra.mxu0 %v1607
  %1609 = vmatprep.subr.mxu0 0.0
  %v1610 = vand.u32 %v57, 4294901760
  %1611 = vmatpush1.msra.mxu0 %v1610
  %1612 = vmatprep.subr.mxu0 0.0
  %v1613 = vand.u32 %v58, 4294901760
  %1614 = vmatpush1.msra.mxu0 %v1613
  %1615 = vmatprep.subr.mxu0 0.0
  %v1616 = vand.u32 %v59, 4294901760
  %1617 = vmatpush1.msra.mxu0 %v1616
  %1618 = vmatprep.subr.mxu0 0.0
  %v1619 = vand.u32 %v60, 4294901760
  %1620 = vmatpush1.msra.mxu0 %v1619
  %1621 = vmatprep.subr.mxu0 0.0
  %v1622 = vand.u32 %v61, 4294901760
  %1623 = vmatpush1.msra.mxu0 %v1622
  %1624 = vmatprep.subr.mxu0 0.0
  %v1625 = vand.u32 %v62, 4294901760
  %1626 = vmatpush1.msra.mxu0 %v1625
  %1627 = vmatprep.subr.mxu0 0.0
  %v1628 = vand.u32 %v63, 4294901760
  %1629 = vmatpush1.msra.mxu0 %v1628
  %1630 = vmatprep.subr.mxu0 0.0
  %v1631 = vand.u32 %v64, 4294901760
  %1632 = vmatpush1.msra.mxu0 %v1631
  %1633 = vmatprep.subr.mxu0 0.0
  %v1634 = vand.u32 %v65, 4294901760
  %1635 = vmatpush1.msra.mxu0 %v1634
  %1636 = vmatprep.subr.mxu0 0.0
  %v1637 = vand.u32 %v66, 4294901760
  %1638 = vmatpush1.msra.mxu0 %v1637
  %1639 = vmatprep.subr.mxu0 0.0
  %v1640 = vand.u32 %v67, 4294901760
  %1641 = vmatpush1.msra.mxu0 %v1640
  %1642 = vmatprep.subr.mxu0 0.0
  %v1643 = vand.u32 %v68, 4294901760
  %1644 = vmatpush1.msra.mxu0 %v1643
  %1645 = vmatprep.subr.mxu0 0.0
  %v1646 = vand.u32 %v69, 4294901760
  %1647 = vmatpush1.msra.mxu0 %v1646
  %1648 = vmatprep.subr.mxu0 0.0
  %v1649 = vand.u32 %v70, 4294901760
  %1650 = vmatpush1.msra.mxu0 %v1649
  %1651 = vmatprep.subr.mxu0 0.0
  %1652 = vmatpush1.msra.mxu0 0.0
  %1653 = vmatprep.subr.mxu0 0.0
  %1654 = vmatpush1.msra.mxu0 0.0
  %1655 = vmatprep.subr.mxu0 0.0
  %1656 = vmatpush1.msra.mxu0 0.0
  %1657 = vmatprep.subr.mxu0 0.0
  %1658 = vmatpush1.msra.mxu0 0.0
  %1659 = vmatprep.subr.mxu0 0.0
  %1660 = vmatpush1.msra.mxu0 0.0
  %1661 = vmatprep.subr.mxu0 0.0
  %1662 = vmatpush1.msra.mxu0 0.0
  %1663 = vmatprep.subr.mxu0 0.0
  %1664 = vmatpush1.msra.mxu0 0.0
  %1665 = vmatprep.subr.mxu0 0.0
  %1666 = vmatpush1.msra.mxu0 0.0
  %1667 = vmatprep.subr.mxu0 0.0
  %1668 = vmatpush1.msra.mxu0 0.0
  %1669 = vmatprep.subr.mxu0 0.0
  %1670 = vmatpush1.msra.mxu0 0.0
  %1671 = vmatprep.subr.mxu0 0.0
  %1672 = vmatpush1.msra.mxu0 0.0
  %1673 = vmatprep.subr.mxu0 0.0
  %1674 = vmatpush1.msra.mxu0 0.0
  %1675 = vmatprep.subr.mxu0 0.0
  %1676 = vmatpush1.msra.mxu0 0.0
  %1677 = vmatprep.subr.mxu0 0.0
  %1678 = vmatpush1.msra.mxu0 0.0
  %1679 = vmatprep.subr.mxu0 0.0
  %1680 = vmatpush1.msra.mxu0 0.0
  %1681 = vmatprep.subr.mxu0 0.0
  %1682 = vmatpush1.msra.mxu0 0.0
  %1683 = vmatprep.mubr.f32.mxu0 0.0
  %v1684 = vand.u32 %v43, 4294901760
  %1685 = vmatmul.mubr.f32.gmra.mrb[0].mxu0 %v1684
  %v1686 = vpop.f32.mrb[0].mxu0
  %v1687 = vadd.f32 %v1576, %v1686
  %v1688 = vpop.f32.mrb[0].mxu0
  %1689 = vmatprep.mubr.f32.mxu0 0.0
  %v1690 = vand.u32 %v42, 4294901760
  %1691 = vmatmul.mubr.f32.gmra.mrb[0].mxu0 %v1690
  %v1692 = vpop.f32.mrb[0].mxu0
  %v1693 = vadd.f32 %v1582, %v1692
  %v1694 = vpop.f32.mrb[0].mxu0
  %1695 = vmatprep.mubr.f32.mxu0 0.0
  %v1696 = vand.u32 %v41, 4294901760
  %1697 = vmatmul.mubr.f32.gmra.mrb[0].mxu0 %v1696
  %v1698 = vpop.f32.mrb[0].mxu0
  %v1699 = vadd.f32 %v1588, %v1698
  %v1700 = vpop.f32.mrb[0].mxu0
  %1701 = vmatprep.mubr.f32.mxu0 0.0
  %v1702 = vand.u32 %v40, 4294901760
  %1703 = vmatmul.mubr.f32.gmra.mrb[0].mxu0 %v1702
  %v1704 = vpop.f32.mrb[0].mxu0
  %v1705 = vadd.f32 %v1594, %v1704
  %v1706 = vpop.f32.mrb[0].mxu0
  %1707 = vmatprep.mubr.f32.mxu0 0.0
  %v1708 = vand.u32 %v39, 4294901760
  %1709 = vmatmul.mubr.f32.gmra.mrb[0].mxu0 %v1708
  %v1710 = vpop.f32.mrb[0].mxu0
  %v1711 = vadd.f32 %v1600, %v1710
  %v1712 = vpop.f32.mrb[0].mxu0
  %1713 = vdwg.mxu0
  %s1714 = scalar_lea.vmem %s2, 256
  %v1715 = vld [vmem:[%s1714] sm:$0xff]
  %v1716 = vld [vmem:[%s1714 + $0x8] sm:$0xff]
  %v1717 = vld [vmem:[%s1714 + $0x10] sm:$0xff]
  %v1718 = vld [vmem:[%s1714 + $0x18] sm:$0xff]
  %v1719 = vld [vmem:[%s1714 + $0x20] sm:$0xff]
  %v1720 = vld [vmem:[%s1714 + $0x28] sm:$0xff]
  %v1721 = vld [vmem:[%s1714 + $0x30] sm:$0xff]
  %v1722 = vld [vmem:[%s1714 + $0x38] sm:$0xff]
  %v1723 = vld [vmem:[%s1714 + $0x40] sm:$0xff]
  %v1724 = vld [vmem:[%s1714 + $0x48] sm:$0xff]
  %v1725 = vld [vmem:[%s1714 + $0x50] sm:$0xff]
  %v1726 = vld [vmem:[%s1714 + $0x58] sm:$0xff]
  %v1727 = vld [vmem:[%s1714 + $0x60] sm:$0xff]
  %v1728 = vld [vmem:[%s1714 + $0x68] sm:$0xff]
  %v1729 = vld [vmem:[%s1714 + $0x70] sm:$0xff]
  %v1730 = vld [vmem:[%s1714 + $0x78] sm:$0xff]
  %1731 = vmatprep.subr.mxu0 0.0
  %v1732 = vand.u32 %v1715, 4294901760
  %1733 = vmatpush1.msra.mxu0 %v1732
  %1734 = vmatprep.subr.mxu0 0.0
  %v1735 = vand.u32 %v1716, 4294901760
  %1736 = vmatpush1.msra.mxu0 %v1735
  %1737 = vmatprep.subr.mxu0 0.0
  %v1738 = vand.u32 %v1717, 4294901760
  %1739 = vmatpush1.msra.mxu0 %v1738
  %1740 = vmatprep.subr.mxu0 0.0
  %v1741 = vand.u32 %v1718, 4294901760
  %1742 = vmatpush1.msra.mxu0 %v1741
  %1743 = vmatprep.subr.mxu0 0.0
  %v1744 = vand.u32 %v1719, 4294901760
  %1745 = vmatpush1.msra.mxu0 %v1744
  %1746 = vmatprep.subr.mxu0 0.0
  %v1747 = vand.u32 %v1720, 4294901760
  %1748 = vmatpush1.msra.mxu0 %v1747
  %1749 = vmatprep.subr.mxu0 0.0
  %v1750 = vand.u32 %v1721, 4294901760
  %1751 = vmatpush1.msra.mxu0 %v1750
  %1752 = vmatprep.subr.mxu0 0.0
  %v1753 = vand.u32 %v1722, 4294901760
  %1754 = vmatpush1.msra.mxu0 %v1753
  %1755 = vmatprep.subr.mxu0 0.0
  %v1756 = vand.u32 %v1723, 4294901760
  %1757 = vmatpush1.msra.mxu0 %v1756
  %1758 = vmatprep.subr.mxu0 0.0
  %v1759 = vand.u32 %v1724, 4294901760
  %1760 = vmatpush1.msra.mxu0 %v1759
  %1761 = vmatprep.subr.mxu0 0.0
  %v1762 = vand.u32 %v1725, 4294901760
  %1763 = vmatpush1.msra.mxu0 %v1762
  %1764 = vmatprep.subr.mxu0 0.0
  %v1765 = vand.u32 %v1726, 4294901760
  %1766 = vmatpush1.msra.mxu0 %v1765
  %1767 = vmatprep.subr.mxu0 0.0
  %v1768 = vand.u32 %v1727, 4294901760
  %1769 = vmatpush1.msra.mxu0 %v1768
  %1770 = vmatprep.subr.mxu0 0.0
  %v1771 = vand.u32 %v1728, 4294901760
  %1772 = vmatpush1.msra.mxu0 %v1771
  %1773 = vmatprep.subr.mxu0 0.0
  %v1774 = vand.u32 %v1729, 4294901760
  %1775 = vmatpush1.msra.mxu0 %v1774
  %1776 = vmatprep.subr.mxu0 0.0
  %v1777 = vand.u32 %v1730, 4294901760
  %1778 = vmatpush1.msra.mxu0 %v1777
  %1779 = vmatprep.subr.mxu0 0.0
  %1780 = vmatpush1.msra.mxu0 0.0
  %1781 = vmatprep.subr.mxu0 0.0
  %1782 = vmatpush1.msra.mxu0 0.0
  %1783 = vmatprep.subr.mxu0 0.0
  %1784 = vmatpush1.msra.mxu0 0.0
  %1785 = vmatprep.subr.mxu0 0.0
  %1786 = vmatpush1.msra.mxu0 0.0
  %1787 = vmatprep.subr.mxu0 0.0
  %1788 = vmatpush1.msra.mxu0 0.0
  %1789 = vmatprep.subr.mxu0 0.0
  %1790 = vmatpush1.msra.mxu0 0.0
  %1791 = vmatprep.subr.mxu0 0.0
  %1792 = vmatpush1.msra.mxu0 0.0
  %1793 = vmatprep.subr.mxu0 0.0
  %1794 = vmatpush1.msra.mxu0 0.0
  %1795 = vmatprep.subr.mxu0 0.0
  %1796 = vmatpush1.msra.mxu0 0.0
  %1797 = vmatprep.subr.mxu0 0.0
  %1798 = vmatpush1.msra.mxu0 0.0
  %1799 = vmatprep.subr.mxu0 0.0
  %1800 = vmatpush1.msra.mxu0 0.0
  %1801 = vmatprep.subr.mxu0 0.0
  %1802 = vmatpush1.msra.mxu0 0.0
  %1803 = vmatprep.subr.mxu0 0.0
  %1804 = vmatpush1.msra.mxu0 0.0
  %1805 = vmatprep.subr.mxu0 0.0
  %1806 = vmatpush1.msra.mxu0 0.0
  %1807 = vmatprep.subr.mxu0 0.0
  %1808 = vmatpush1.msra.mxu0 0.0
  %1809 = vmatprep.subr.mxu0 0.0
  %1810 = vmatpush1.msra.mxu0 0.0
  %1811 = vmatprep.mubr.f32.mxu0 0.0
  %v1812 = vand.u32 %v53, 4294901760
  %v1813 = vsub.f32 %v53, %v1812
  %v1814 = vand.u32 %v1813, 4294901760
  %v1815 = vsub.f32 %v1813, %v1814
  %v1816 = vand.u32 %v1815, 4294901760
  %1817 = vmatmul.mubr.f32.gmra.mrb[0].mxu0 %v1816
  %v1818 = vpop.f32.mrb[0].mxu0
  %v1819 = vadd.f32 0.0, %v1818
  %v1820 = vpop.f32.mrb[0].mxu0
  %1821 = vmatprep.mubr.f32.mxu0 0.0
  %v1822 = vand.u32 %v52, 4294901760
  %v1823 = vsub.f32 %v52, %v1822
  %v1824 = vand.u32 %v1823, 4294901760
  %v1825 = vsub.f32 %v1823, %v1824
  %v1826 = vand.u32 %v1825, 4294901760
  %1827 = vmatmul.mubr.f32.gmra.mrb[0].mxu0 %v1826
  %v1828 = vpop.f32.mrb[0].mxu0
  %v1829 = vadd.f32 0.0, %v1828
  %v1830 = vpop.f32.mrb[0].mxu0
  %1831 = vmatprep.mubr.f32.mxu0 0.0
  %v1832 = vand.u32 %v51, 4294901760
  %v1833 = vsub.f32 %v51, %v1832
  %v1834 = vand.u32 %v1833, 4294901760
  %v1835 = vsub.f32 %v1833, %v1834
  %v1836 = vand.u32 %v1835, 4294901760
  %1837 = vmatmul.mubr.f32.gmra.mrb[0].mxu0 %v1836
  %v1838 = vpop.f32.mrb[0].mxu0
  %v1839 = vadd.f32 0.0, %v1838
  %v1840 = vpop.f32.mrb[0].mxu0
  %1841 = vmatprep.mubr.f32.mxu0 0.0
  %v1842 = vand.u32 %v50, 4294901760
  %v1843 = vsub.f32 %v50, %v1842
  %v1844 = vand.u32 %v1843, 4294901760
  %v1845 = vsub.f32 %v1843, %v1844
  %v1846 = vand.u32 %v1845, 4294901760
  %1847 = vmatmul.mubr.f32.gmra.mrb[0].mxu0 %v1846
  %v1848 = vpop.f32.mrb[0].mxu0
  %v1849 = vadd.f32 0.0, %v1848
  %v1850 = vpop.f32.mrb[0].mxu0
  %1851 = vmatprep.mubr.f32.mxu0 0.0
  %v1852 = vand.u32 %v54, 4294901760
  %v1853 = vsub.f32 %v54, %v1852
  %v1854 = vand.u32 %v1853, 4294901760
  %v1855 = vsub.f32 %v1853, %v1854
  %v1856 = vand.u32 %v1855, 4294901760
  %1857 = vmatmul.mubr.f32.gmra.mrb[0].mxu0 %v1856
  %v1858 = vpop.f32.mrb[0].mxu0
  %v1859 = vadd.f32 0.0, %v1858
  %v1860 = vpop.f32.mrb[0].mxu0
  %1861 = vdwg.mxu0
  %1862 = vmatprep.subr.mxu0 0.0
  %v1863 = vand.u32 %v1715, 4294901760
  %v1864 = vsub.f32 %v1715, %v1863
  %v1865 = vand.u32 %v1864, 4294901760
  %v1866 = vsub.f32 %v1864, %v1865
  %v1867 = vand.u32 %v1866, 4294901760
  %1868 = vmatpush1.msra.mxu0 %v1867
  %1869 = vmatprep.subr.mxu0 0.0
  %v1870 = vand.u32 %v1716, 4294901760
  %v1871 = vsub.f32 %v1716, %v1870
  %v1872 = vand.u32 %v1871, 4294901760
  %v1873 = vsub.f32 %v1871, %v1872
  %v1874 = vand.u32 %v1873, 4294901760
  %1875 = vmatpush1.msra.mxu0 %v1874
  %1876 = vmatprep.subr.mxu0 0.0
  %v1877 = vand.u32 %v1717, 4294901760
  %v1878 = vsub.f32 %v1717, %v1877
  %v1879 = vand.u32 %v1878, 4294901760
  %v1880 = vsub.f32 %v1878, %v1879
  %v1881 = vand.u32 %v1880, 4294901760
  %1882 = vmatpush1.msra.mxu0 %v1881
  %1883 = vmatprep.subr.mxu0 0.0
  %v1884 = vand.u32 %v1718, 4294901760
  %v1885 = vsub.f32 %v1718, %v1884
  %v1886 = vand.u32 %v1885, 4294901760
  %v1887 = vsub.f32 %v1885, %v1886
  %v1888 = vand.u32 %v1887, 4294901760
  %1889 = vmatpush1.msra.mxu0 %v1888
  %1890 = vmatprep.subr.mxu0 0.0
  %v1891 = vand.u32 %v1719, 4294901760
  %v1892 = vsub.f32 %v1719, %v1891
  %v1893 = vand.u32 %v1892, 4294901760
  %v1894 = vsub.f32 %v1892, %v1893
  %v1895 = vand.u32 %v1894, 4294901760
  %1896 = vmatpush1.msra.mxu0 %v1895
  %1897 = vmatprep.subr.mxu0 0.0
  %v1898 = vand.u32 %v1720, 4294901760
  %v1899 = vsub.f32 %v1720, %v1898
  %v1900 = vand.u32 %v1899, 4294901760
  %v1901 = vsub.f32 %v1899, %v1900
  %v1902 = vand.u32 %v1901, 4294901760
  %1903 = vmatpush1.msra.mxu0 %v1902
  %1904 = vmatprep.subr.mxu0 0.0
  %v1905 = vand.u32 %v1721, 4294901760
  %v1906 = vsub.f32 %v1721, %v1905
  %v1907 = vand.u32 %v1906, 4294901760
  %v1908 = vsub.f32 %v1906, %v1907
  %v1909 = vand.u32 %v1908, 4294901760
  %1910 = vmatpush1.msra.mxu0 %v1909
  %1911 = vmatprep.subr.mxu0 0.0
  %v1912 = vand.u32 %v1722, 4294901760
  %v1913 = vsub.f32 %v1722, %v1912
  %v1914 = vand.u32 %v1913, 4294901760
  %v1915 = vsub.f32 %v1913, %v1914
  %v1916 = vand.u32 %v1915, 4294901760
  %1917 = vmatpush1.msra.mxu0 %v1916
  %1918 = vmatprep.subr.mxu0 0.0
  %v1919 = vand.u32 %v1723, 4294901760
  %v1920 = vsub.f32 %v1723, %v1919
  %v1921 = vand.u32 %v1920, 4294901760
  %v1922 = vsub.f32 %v1920, %v1921
  %v1923 = vand.u32 %v1922, 4294901760
  %1924 = vmatpush1.msra.mxu0 %v1923
  %1925 = vmatprep.subr.mxu0 0.0
  %v1926 = vand.u32 %v1724, 4294901760
  %v1927 = vsub.f32 %v1724, %v1926
  %v1928 = vand.u32 %v1927, 4294901760
  %v1929 = vsub.f32 %v1927, %v1928
  %v1930 = vand.u32 %v1929, 4294901760
  %1931 = vmatpush1.msra.mxu0 %v1930
  %1932 = vmatprep.subr.mxu0 0.0
  %v1933 = vand.u32 %v1725, 4294901760
  %v1934 = vsub.f32 %v1725, %v1933
  %v1935 = vand.u32 %v1934, 4294901760
  %v1936 = vsub.f32 %v1934, %v1935
  %v1937 = vand.u32 %v1936, 4294901760
  %1938 = vmatpush1.msra.mxu0 %v1937
  %1939 = vmatprep.subr.mxu0 0.0
  %v1940 = vand.u32 %v1726, 4294901760
  %v1941 = vsub.f32 %v1726, %v1940
  %v1942 = vand.u32 %v1941, 4294901760
  %v1943 = vsub.f32 %v1941, %v1942
  %v1944 = vand.u32 %v1943, 4294901760
  %1945 = vmatpush1.msra.mxu0 %v1944
  %1946 = vmatprep.subr.mxu0 0.0
  %v1947 = vand.u32 %v1727, 4294901760
  %v1948 = vsub.f32 %v1727, %v1947
  %v1949 = vand.u32 %v1948, 4294901760
  %v1950 = vsub.f32 %v1948, %v1949
  %v1951 = vand.u32 %v1950, 4294901760
  %1952 = vmatpush1.msra.mxu0 %v1951
  %1953 = vmatprep.subr.mxu0 0.0
  %v1954 = vand.u32 %v1728, 4294901760
  %v1955 = vsub.f32 %v1728, %v1954
  %v1956 = vand.u32 %v1955, 4294901760
  %v1957 = vsub.f32 %v1955, %v1956
  %v1958 = vand.u32 %v1957, 4294901760
  %1959 = vmatpush1.msra.mxu0 %v1958
  %1960 = vmatprep.subr.mxu0 0.0
  %v1961 = vand.u32 %v1729, 4294901760
  %v1962 = vsub.f32 %v1729, %v1961
  %v1963 = vand.u32 %v1962, 4294901760
  %v1964 = vsub.f32 %v1962, %v1963
  %v1965 = vand.u32 %v1964, 4294901760
  %1966 = vmatpush1.msra.mxu0 %v1965
  %1967 = vmatprep.subr.mxu0 0.0
  %v1968 = vand.u32 %v1730, 4294901760
  %v1969 = vsub.f32 %v1730, %v1968
  %v1970 = vand.u32 %v1969, 4294901760
  %v1971 = vsub.f32 %v1969, %v1970
  %v1972 = vand.u32 %v1971, 4294901760
  %1973 = vmatpush1.msra.mxu0 %v1972
  %1974 = vmatprep.subr.mxu0 0.0
  %1975 = vmatpush1.msra.mxu0 0.0
  %1976 = vmatprep.subr.mxu0 0.0
  %1977 = vmatpush1.msra.mxu0 0.0
  %1978 = vmatprep.subr.mxu0 0.0
  %1979 = vmatpush1.msra.mxu0 0.0
  %1980 = vmatprep.subr.mxu0 0.0
  %1981 = vmatpush1.msra.mxu0 0.0
  %1982 = vmatprep.subr.mxu0 0.0
  %1983 = vmatpush1.msra.mxu0 0.0
  %1984 = vmatprep.subr.mxu0 0.0
  %1985 = vmatpush1.msra.mxu0 0.0
  %1986 = vmatprep.subr.mxu0 0.0
  %1987 = vmatpush1.msra.mxu0 0.0
  %1988 = vmatprep.subr.mxu0 0.0
  %1989 = vmatpush1.msra.mxu0 0.0
  %1990 = vmatprep.subr.mxu0 0.0
  %1991 = vmatpush1.msra.mxu0 0.0
  %1992 = vmatprep.subr.mxu0 0.0
  %1993 = vmatpush1.msra.mxu0 0.0
  %1994 = vmatprep.subr.mxu0 0.0
  %1995 = vmatpush1.msra.mxu0 0.0
  %1996 = vmatprep.subr.mxu0 0.0
  %1997 = vmatpush1.msra.mxu0 0.0
  %1998 = vmatprep.subr.mxu0 0.0
  %1999 = vmatpush1.msra.mxu0 0.0
  %2000 = vmatprep.subr.mxu0 0.0
  %2001 = vmatpush1.msra.mxu0 0.0
  %2002 = vmatprep.subr.mxu0 0.0
  %2003 = vmatpush1.msra.mxu0 0.0
  %2004 = vmatprep.subr.mxu0 0.0
  %2005 = vmatpush1.msra.mxu0 0.0
  %2006 = vmatprep.mubr.f32.mxu0 0.0
  %v2007 = vand.u32 %v53, 4294901760
  %2008 = vmatmul.mubr.f32.gmra.mrb[0].mxu0 %v2007
  %v2009 = vpop.f32.mrb[0].mxu0
  %v2010 = vadd.f32 %v1819, %v2009
  %v2011 = vpop.f32.mrb[0].mxu0
  %2012 = vmatprep.mubr.f32.mxu0 0.0
  %v2013 = vand.u32 %v52, 4294901760
  %2014 = vmatmul.mubr.f32.gmra.mrb[0].mxu0 %v2013
  %v2015 = vpop.f32.mrb[0].mxu0
  %v2016 = vadd.f32 %v1829, %v2015
  %v2017 = vpop.f32.mrb[0].mxu0
  %2018 = vmatprep.mubr.f32.mxu0 0.0
  %v2019 = vand.u32 %v51, 4294901760
  %2020 = vmatmul.mubr.f32.gmra.mrb[0].mxu0 %v2019
  %v2021 = vpop.f32.mrb[0].mxu0
  %v2022 = vadd.f32 %v1839, %v2021
  %v2023 = vpop.f32.mrb[0].mxu0
  %2024 = vmatprep.mubr.f32.mxu0 0.0
  %v2025 = vand.u32 %v50, 4294901760
  %2026 = vmatmul.mubr.f32.gmra.mrb[0].mxu0 %v2025
  %v2027 = vpop.f32.mrb[0].mxu0
  %v2028 = vadd.f32 %v1849, %v2027
  %v2029 = vpop.f32.mrb[0].mxu0
  %2030 = vmatprep.mubr.f32.mxu0 0.0
  %v2031 = vand.u32 %v54, 4294901760
  %2032 = vmatmul.mubr.f32.gmra.mrb[0].mxu0 %v2031
  %v2033 = vpop.f32.mrb[0].mxu0
  %v2034 = vadd.f32 %v1859, %v2033
  %v2035 = vpop.f32.mrb[0].mxu0
  %2036 = vdwg.mxu0
  %2037 = vmatprep.subr.mxu0 0.0
  %v2038 = vand.u32 %v1715, 4294901760
  %v2039 = vsub.f32 %v1715, %v2038
  %2040 = vmatpush1.msra.mxu0 %v2039
  %2041 = vmatprep.subr.mxu0 0.0
  %v2042 = vand.u32 %v1716, 4294901760
  %v2043 = vsub.f32 %v1716, %v2042
  %2044 = vmatpush1.msra.mxu0 %v2043
  %2045 = vmatprep.subr.mxu0 0.0
  %v2046 = vand.u32 %v1717, 4294901760
  %v2047 = vsub.f32 %v1717, %v2046
  %2048 = vmatpush1.msra.mxu0 %v2047
  %2049 = vmatprep.subr.mxu0 0.0
  %v2050 = vand.u32 %v1718, 4294901760
  %v2051 = vsub.f32 %v1718, %v2050
  %2052 = vmatpush1.msra.mxu0 %v2051
  %2053 = vmatprep.subr.mxu0 0.0
  %v2054 = vand.u32 %v1719, 4294901760
  %v2055 = vsub.f32 %v1719, %v2054
  %2056 = vmatpush1.msra.mxu0 %v2055
  %2057 = vmatprep.subr.mxu0 0.0
  %v2058 = vand.u32 %v1720, 4294901760
  %v2059 = vsub.f32 %v1720, %v2058
  %2060 = vmatpush1.msra.mxu0 %v2059
  %2061 = vmatprep.subr.mxu0 0.0
  %v2062 = vand.u32 %v1721, 4294901760
  %v2063 = vsub.f32 %v1721, %v2062
  %2064 = vmatpush1.msra.mxu0 %v2063
  %2065 = vmatprep.subr.mxu0 0.0
  %v2066 = vand.u32 %v1722, 4294901760
  %v2067 = vsub.f32 %v1722, %v2066
  %2068 = vmatpush1.msra.mxu0 %v2067
  %2069 = vmatprep.subr.mxu0 0.0
  %v2070 = vand.u32 %v1723, 4294901760
  %v2071 = vsub.f32 %v1723, %v2070
  %2072 = vmatpush1.msra.mxu0 %v2071
  %2073 = vmatprep.subr.mxu0 0.0
  %v2074 = vand.u32 %v1724, 4294901760
  %v2075 = vsub.f32 %v1724, %v2074
  %2076 = vmatpush1.msra.mxu0 %v2075
  %2077 = vmatprep.subr.mxu0 0.0
  %v2078 = vand.u32 %v1725, 4294901760
  %v2079 = vsub.f32 %v1725, %v2078
  %2080 = vmatpush1.msra.mxu0 %v2079
  %2081 = vmatprep.subr.mxu0 0.0
  %v2082 = vand.u32 %v1726, 4294901760
  %v2083 = vsub.f32 %v1726, %v2082
  %2084 = vmatpush1.msra.mxu0 %v2083
  %2085 = vmatprep.subr.mxu0 0.0
  %v2086 = vand.u32 %v1727, 4294901760
  %v2087 = vsub.f32 %v1727, %v2086
  %2088 = vmatpush1.msra.mxu0 %v2087
  %2089 = vmatprep.subr.mxu0 0.0
  %v2090 = vand.u32 %v1728, 4294901760
  %v2091 = vsub.f32 %v1728, %v2090
  %2092 = vmatpush1.msra.mxu0 %v2091
  %2093 = vmatprep.subr.mxu0 0.0
  %v2094 = vand.u32 %v1729, 4294901760
  %v2095 = vsub.f32 %v1729, %v2094
  %2096 = vmatpush1.msra.mxu0 %v2095
  %2097 = vmatprep.subr.mxu0 0.0
  %v2098 = vand.u32 %v1730, 4294901760
  %v2099 = vsub.f32 %v1730, %v2098
  %2100 = vmatpush1.msra.mxu0 %v2099
  %2101 = vmatprep.subr.mxu0 0.0
  %2102 = vmatpush1.msra.mxu0 0.0
  %2103 = vmatprep.subr.mxu0 0.0
  %2104 = vmatpush1.msra.mxu0 0.0
  %2105 = vmatprep.subr.mxu0 0.0
  %2106 = vmatpush1.msra.mxu0 0.0
  %2107 = vmatprep.subr.mxu0 0.0
  %2108 = vmatpush1.msra.mxu0 0.0
  %2109 = vmatprep.subr.mxu0 0.0
  %2110 = vmatpush1.msra.mxu0 0.0
  %2111 = vmatprep.subr.mxu0 0.0
  %2112 = vmatpush1.msra.mxu0 0.0
  %2113 = vmatprep.subr.mxu0 0.0
  %2114 = vmatpush1.msra.mxu0 0.0
  %2115 = vmatprep.subr.mxu0 0.0
  %2116 = vmatpush1.msra.mxu0 0.0
  %2117 = vmatprep.subr.mxu0 0.0
  %2118 = vmatpush1.msra.mxu0 0.0
  %2119 = vmatprep.subr.mxu0 0.0
  %2120 = vmatpush1.msra.mxu0 0.0
  %2121 = vmatprep.subr.mxu0 0.0
  %2122 = vmatpush1.msra.mxu0 0.0
  %2123 = vmatprep.subr.mxu0 0.0
  %2124 = vmatpush1.msra.mxu0 0.0
  %2125 = vmatprep.subr.mxu0 0.0
  %2126 = vmatpush1.msra.mxu0 0.0
  %2127 = vmatprep.subr.mxu0 0.0
  %2128 = vmatpush1.msra.mxu0 0.0
  %2129 = vmatprep.subr.mxu0 0.0
  %2130 = vmatpush1.msra.mxu0 0.0
  %2131 = vmatprep.subr.mxu0 0.0
  %2132 = vmatpush1.msra.mxu0 0.0
  %2133 = vmatprep.mubr.f32.mxu0 0.0
  %v2134 = vand.u32 %v53, 4294901760
  %v2135 = vsub.f32 %v53, %v2134
  %2136 = vmatmul.mubr.f32.gmra.mrb[0].mxu0 %v2135
  %v2137 = vpop.f32.mrb[0].mxu0
  %v2138 = vadd.f32 %v2010, %v2137
  %v2139 = vpop.f32.mrb[0].mxu0
  %2140 = vmatprep.mubr.f32.mxu0 0.0
  %v2141 = vand.u32 %v52, 4294901760
  %v2142 = vsub.f32 %v52, %v2141
  %2143 = vmatmul.mubr.f32.gmra.mrb[0].mxu0 %v2142
  %v2144 = vpop.f32.mrb[0].mxu0
  %v2145 = vadd.f32 %v2016, %v2144
  %v2146 = vpop.f32.mrb[0].mxu0
  %2147 = vmatprep.mubr.f32.mxu0 0.0
  %v2148 = vand.u32 %v51, 4294901760
  %v2149 = vsub.f32 %v51, %v2148
  %2150 = vmatmul.mubr.f32.gmra.mrb[0].mxu0 %v2149
  %v2151 = vpop.f32.mrb[0].mxu0
  %v2152 = vadd.f32 %v2022, %v2151
  %v2153 = vpop.f32.mrb[0].mxu0
  %2154 = vmatprep.mubr.f32.mxu0 0.0
  %v2155 = vand.u32 %v50, 4294901760
  %v2156 = vsub.f32 %v50, %v2155
  %2157 = vmatmul.mubr.f32.gmra.mrb[0].mxu0 %v2156
  %v2158 = vpop.f32.mrb[0].mxu0
  %v2159 = vadd.f32 %v2028, %v2158
  %v2160 = vpop.f32.mrb[0].mxu0
  %2161 = vmatprep.mubr.f32.mxu0 0.0
  %v2162 = vand.u32 %v54, 4294901760
  %v2163 = vsub.f32 %v54, %v2162
  %2164 = vmatmul.mubr.f32.gmra.mrb[0].mxu0 %v2163
  %v2165 = vpop.f32.mrb[0].mxu0
  %v2166 = vadd.f32 %v2034, %v2165
  %v2167 = vpop.f32.mrb[0].mxu0
  %2168 = vdwg.mxu0
  %2169 = vmatprep.subr.mxu0 0.0
  %v2170 = vand.u32 %v1715, 4294901760
  %2171 = vmatpush1.msra.mxu0 %v2170
  %2172 = vmatprep.subr.mxu0 0.0
  %v2173 = vand.u32 %v1716, 4294901760
  %2174 = vmatpush1.msra.mxu0 %v2173
  %2175 = vmatprep.subr.mxu0 0.0
  %v2176 = vand.u32 %v1717, 4294901760
  %2177 = vmatpush1.msra.mxu0 %v2176
  %2178 = vmatprep.subr.mxu0 0.0
  %v2179 = vand.u32 %v1718, 4294901760
  %2180 = vmatpush1.msra.mxu0 %v2179
  %2181 = vmatprep.subr.mxu0 0.0
  %v2182 = vand.u32 %v1719, 4294901760
  %2183 = vmatpush1.msra.mxu0 %v2182
  %2184 = vmatprep.subr.mxu0 0.0
  %v2185 = vand.u32 %v1720, 4294901760
  %2186 = vmatpush1.msra.mxu0 %v2185
  %2187 = vmatprep.subr.mxu0 0.0
  %v2188 = vand.u32 %v1721, 4294901760
  %2189 = vmatpush1.msra.mxu0 %v2188
  %2190 = vmatprep.subr.mxu0 0.0
  %v2191 = vand.u32 %v1722, 4294901760
  %2192 = vmatpush1.msra.mxu0 %v2191
  %2193 = vmatprep.subr.mxu0 0.0
  %v2194 = vand.u32 %v1723, 4294901760
  %2195 = vmatpush1.msra.mxu0 %v2194
  %2196 = vmatprep.subr.mxu0 0.0
  %v2197 = vand.u32 %v1724, 4294901760
  %2198 = vmatpush1.msra.mxu0 %v2197
  %2199 = vmatprep.subr.mxu0 0.0
  %v2200 = vand.u32 %v1725, 4294901760
  %2201 = vmatpush1.msra.mxu0 %v2200
  %2202 = vmatprep.subr.mxu0 0.0
  %v2203 = vand.u32 %v1726, 4294901760
  %2204 = vmatpush1.msra.mxu0 %v2203
  %2205 = vmatprep.subr.mxu0 0.0
  %v2206 = vand.u32 %v1727, 4294901760
  %2207 = vmatpush1.msra.mxu0 %v2206
  %2208 = vmatprep.subr.mxu0 0.0
  %v2209 = vand.u32 %v1728, 4294901760
  %2210 = vmatpush1.msra.mxu0 %v2209
  %2211 = vmatprep.subr.mxu0 0.0
  %v2212 = vand.u32 %v1729, 4294901760
  %2213 = vmatpush1.msra.mxu0 %v2212
  %2214 = vmatprep.subr.mxu0 0.0
  %v2215 = vand.u32 %v1730, 4294901760
  %2216 = vmatpush1.msra.mxu0 %v2215
  %2217 = vmatprep.subr.mxu0 0.0
  %2218 = vmatpush1.msra.mxu0 0.0
  %2219 = vmatprep.subr.mxu0 0.0
  %2220 = vmatpush1.msra.mxu0 0.0
  %2221 = vmatprep.subr.mxu0 0.0
  %2222 = vmatpush1.msra.mxu0 0.0
  %2223 = vmatprep.subr.mxu0 0.0
  %2224 = vmatpush1.msra.mxu0 0.0
  %2225 = vmatprep.subr.mxu0 0.0
  %2226 = vmatpush1.msra.mxu0 0.0
  %2227 = vmatprep.subr.mxu0 0.0
  %2228 = vmatpush1.msra.mxu0 0.0
  %2229 = vmatprep.subr.mxu0 0.0
  %2230 = vmatpush1.msra.mxu0 0.0
  %2231 = vmatprep.subr.mxu0 0.0
  %2232 = vmatpush1.msra.mxu0 0.0
  %2233 = vmatprep.subr.mxu0 0.0
  %2234 = vmatpush1.msra.mxu0 0.0
  %2235 = vmatprep.subr.mxu0 0.0
  %2236 = vmatpush1.msra.mxu0 0.0
  %2237 = vmatprep.subr.mxu0 0.0
  %2238 = vmatpush1.msra.mxu0 0.0
  %2239 = vmatprep.subr.mxu0 0.0
  %2240 = vmatpush1.msra.mxu0 0.0
  %2241 = vmatprep.subr.mxu0 0.0
  %2242 = vmatpush1.msra.mxu0 0.0
  %2243 = vmatprep.subr.mxu0 0.0
  %2244 = vmatpush1.msra.mxu0 0.0
  %2245 = vmatprep.subr.mxu0 0.0
  %2246 = vmatpush1.msra.mxu0 0.0
  %2247 = vmatprep.subr.mxu0 0.0
  %2248 = vmatpush1.msra.mxu0 0.0
  %2249 = vmatprep.mubr.f32.mxu0 0.0
  %v2250 = vand.u32 %v53, 4294901760
  %v2251 = vsub.f32 %v53, %v2250
  %v2252 = vand.u32 %v2251, 4294901760
  %2253 = vmatmul.mubr.f32.gmra.mrb[0].mxu0 %v2252
  %v2254 = vpop.f32.mrb[0].mxu0
  %v2255 = vadd.f32 %v2138, %v2254
  %v2256 = vpop.f32.mrb[0].mxu0
  %2257 = vmatprep.mubr.f32.mxu0 0.0
  %v2258 = vand.u32 %v52, 4294901760
  %v2259 = vsub.f32 %v52, %v2258
  %v2260 = vand.u32 %v2259, 4294901760
  %2261 = vmatmul.mubr.f32.gmra.mrb[0].mxu0 %v2260
  %v2262 = vpop.f32.mrb[0].mxu0
  %v2263 = vadd.f32 %v2145, %v2262
  %v2264 = vpop.f32.mrb[0].mxu0
  %2265 = vmatprep.mubr.f32.mxu0 0.0
  %v2266 = vand.u32 %v51, 4294901760
  %v2267 = vsub.f32 %v51, %v2266
  %v2268 = vand.u32 %v2267, 4294901760
  %2269 = vmatmul.mubr.f32.gmra.mrb[0].mxu0 %v2268
  %v2270 = vpop.f32.mrb[0].mxu0
  %v2271 = vadd.f32 %v2152, %v2270
  %v2272 = vpop.f32.mrb[0].mxu0
  %2273 = vmatprep.mubr.f32.mxu0 0.0
  %v2274 = vand.u32 %v50, 4294901760
  %v2275 = vsub.f32 %v50, %v2274
  %v2276 = vand.u32 %v2275, 4294901760
  %2277 = vmatmul.mubr.f32.gmra.mrb[0].mxu0 %v2276
  %v2278 = vpop.f32.mrb[0].mxu0
  %v2279 = vadd.f32 %v2159, %v2278
  %v2280 = vpop.f32.mrb[0].mxu0
  %2281 = vmatprep.mubr.f32.mxu0 0.0
  %v2282 = vand.u32 %v54, 4294901760
  %v2283 = vsub.f32 %v54, %v2282
  %v2284 = vand.u32 %v2283, 4294901760
  %2285 = vmatmul.mubr.f32.gmra.mrb[0].mxu0 %v2284
  %v2286 = vpop.f32.mrb[0].mxu0
  %v2287 = vadd.f32 %v2166, %v2286
  %v2288 = vpop.f32.mrb[0].mxu0
  %2289 = vdwg.mxu0
  %2290 = vmatprep.subr.mxu0 0.0
  %v2291 = vand.u32 %v1715, 4294901760
  %v2292 = vsub.f32 %v1715, %v2291
  %v2293 = vand.u32 %v2292, 4294901760
  %2294 = vmatpush1.msra.mxu0 %v2293
  %2295 = vmatprep.subr.mxu0 0.0
  %v2296 = vand.u32 %v1716, 4294901760
  %v2297 = vsub.f32 %v1716, %v2296
  %v2298 = vand.u32 %v2297, 4294901760
  %2299 = vmatpush1.msra.mxu0 %v2298
  %2300 = vmatprep.subr.mxu0 0.0
  %v2301 = vand.u32 %v1717, 4294901760
  %v2302 = vsub.f32 %v1717, %v2301
  %v2303 = vand.u32 %v2302, 4294901760
  %2304 = vmatpush1.msra.mxu0 %v2303
  %2305 = vmatprep.subr.mxu0 0.0
  %v2306 = vand.u32 %v1718, 4294901760
  %v2307 = vsub.f32 %v1718, %v2306
  %v2308 = vand.u32 %v2307, 4294901760
  %2309 = vmatpush1.msra.mxu0 %v2308
  %2310 = vmatprep.subr.mxu0 0.0
  %v2311 = vand.u32 %v1719, 4294901760
  %v2312 = vsub.f32 %v1719, %v2311
  %v2313 = vand.u32 %v2312, 4294901760
  %2314 = vmatpush1.msra.mxu0 %v2313
  %2315 = vmatprep.subr.mxu0 0.0
  %v2316 = vand.u32 %v1720, 4294901760
  %v2317 = vsub.f32 %v1720, %v2316
  %v2318 = vand.u32 %v2317, 4294901760
  %2319 = vmatpush1.msra.mxu0 %v2318
  %2320 = vmatprep.subr.mxu0 0.0
  %v2321 = vand.u32 %v1721, 4294901760
  %v2322 = vsub.f32 %v1721, %v2321
  %v2323 = vand.u32 %v2322, 4294901760
  %2324 = vmatpush1.msra.mxu0 %v2323
  %2325 = vmatprep.subr.mxu0 0.0
  %v2326 = vand.u32 %v1722, 4294901760
  %v2327 = vsub.f32 %v1722, %v2326
  %v2328 = vand.u32 %v2327, 4294901760
  %2329 = vmatpush1.msra.mxu0 %v2328
  %2330 = vmatprep.subr.mxu0 0.0
  %v2331 = vand.u32 %v1723, 4294901760
  %v2332 = vsub.f32 %v1723, %v2331
  %v2333 = vand.u32 %v2332, 4294901760
  %2334 = vmatpush1.msra.mxu0 %v2333
  %2335 = vmatprep.subr.mxu0 0.0
  %v2336 = vand.u32 %v1724, 4294901760
  %v2337 = vsub.f32 %v1724, %v2336
  %v2338 = vand.u32 %v2337, 4294901760
  %2339 = vmatpush1.msra.mxu0 %v2338
  %2340 = vmatprep.subr.mxu0 0.0
  %v2341 = vand.u32 %v1725, 4294901760
  %v2342 = vsub.f32 %v1725, %v2341
  %v2343 = vand.u32 %v2342, 4294901760
  %2344 = vmatpush1.msra.mxu0 %v2343
  %2345 = vmatprep.subr.mxu0 0.0
  %v2346 = vand.u32 %v1726, 4294901760
  %v2347 = vsub.f32 %v1726, %v2346
  %v2348 = vand.u32 %v2347, 4294901760
  %2349 = vmatpush1.msra.mxu0 %v2348
  %2350 = vmatprep.subr.mxu0 0.0
  %v2351 = vand.u32 %v1727, 4294901760
  %v2352 = vsub.f32 %v1727, %v2351
  %v2353 = vand.u32 %v2352, 4294901760
  %2354 = vmatpush1.msra.mxu0 %v2353
  %2355 = vmatprep.subr.mxu0 0.0
  %v2356 = vand.u32 %v1728, 4294901760
  %v2357 = vsub.f32 %v1728, %v2356
  %v2358 = vand.u32 %v2357, 4294901760
  %2359 = vmatpush1.msra.mxu0 %v2358
  %2360 = vmatprep.subr.mxu0 0.0
  %v2361 = vand.u32 %v1729, 4294901760
  %v2362 = vsub.f32 %v1729, %v2361
  %v2363 = vand.u32 %v2362, 4294901760
  %2364 = vmatpush1.msra.mxu0 %v2363
  %2365 = vmatprep.subr.mxu0 0.0
  %v2366 = vand.u32 %v1730, 4294901760
  %v2367 = vsub.f32 %v1730, %v2366
  %v2368 = vand.u32 %v2367, 4294901760
  %2369 = vmatpush1.msra.mxu0 %v2368
  %2370 = vmatprep.subr.mxu0 0.0
  %2371 = vmatpush1.msra.mxu0 0.0
  %2372 = vmatprep.subr.mxu0 0.0
  %2373 = vmatpush1.msra.mxu0 0.0
  %2374 = vmatprep.subr.mxu0 0.0
  %2375 = vmatpush1.msra.mxu0 0.0
  %2376 = vmatprep.subr.mxu0 0.0
  %2377 = vmatpush1.msra.mxu0 0.0
  %2378 = vmatprep.subr.mxu0 0.0
  %2379 = vmatpush1.msra.mxu0 0.0
  %2380 = vmatprep.subr.mxu0 0.0
  %2381 = vmatpush1.msra.mxu0 0.0
  %2382 = vmatprep.subr.mxu0 0.0
  %2383 = vmatpush1.msra.mxu0 0.0
  %2384 = vmatprep.subr.mxu0 0.0
  %2385 = vmatpush1.msra.mxu0 0.0
  %2386 = vmatprep.subr.mxu0 0.0
  %2387 = vmatpush1.msra.mxu0 0.0
  %2388 = vmatprep.subr.mxu0 0.0
  %2389 = vmatpush1.msra.mxu0 0.0
  %2390 = vmatprep.subr.mxu0 0.0
  %2391 = vmatpush1.msra.mxu0 0.0
  %2392 = vmatprep.subr.mxu0 0.0
  %2393 = vmatpush1.msra.mxu0 0.0
  %2394 = vmatprep.subr.mxu0 0.0
  %2395 = vmatpush1.msra.mxu0 0.0
  %2396 = vmatprep.subr.mxu0 0.0
  %2397 = vmatpush1.msra.mxu0 0.0
  %2398 = vmatprep.subr.mxu0 0.0
  %2399 = vmatpush1.msra.mxu0 0.0
  %2400 = vmatprep.subr.mxu0 0.0
  %2401 = vmatpush1.msra.mxu0 0.0
  %2402 = vmatprep.mubr.f32.mxu0 0.0
  %v2403 = vand.u32 %v53, 4294901760
  %2404 = vmatmul.mubr.f32.gmra.mrb[0].mxu0 %v2403
  %v2405 = vpop.f32.mrb[0].mxu0
  %v2406 = vadd.f32 %v2255, %v2405
  %v2407 = vpop.f32.mrb[0].mxu0
  %2408 = vmatprep.mubr.f32.mxu0 0.0
  %v2409 = vand.u32 %v52, 4294901760
  %2410 = vmatmul.mubr.f32.gmra.mrb[0].mxu0 %v2409
  %v2411 = vpop.f32.mrb[0].mxu0
  %v2412 = vadd.f32 %v2263, %v2411
  %v2413 = vpop.f32.mrb[0].mxu0
  %2414 = vmatprep.mubr.f32.mxu0 0.0
  %v2415 = vand.u32 %v51, 4294901760
  %2416 = vmatmul.mubr.f32.gmra.mrb[0].mxu0 %v2415
  %v2417 = vpop.f32.mrb[0].mxu0
  %v2418 = vadd.f32 %v2271, %v2417
  %v2419 = vpop.f32.mrb[0].mxu0
  %2420 = vmatprep.mubr.f32.mxu0 0.0
  %v2421 = vand.u32 %v50, 4294901760
  %2422 = vmatmul.mubr.f32.gmra.mrb[0].mxu0 %v2421
  %v2423 = vpop.f32.mrb[0].mxu0
  %v2424 = vadd.f32 %v2279, %v2423
  %v2425 = vpop.f32.mrb[0].mxu0
  %2426 = vmatprep.mubr.f32.mxu0 0.0
  %v2427 = vand.u32 %v54, 4294901760
  %2428 = vmatmul.mubr.f32.gmra.mrb[0].mxu0 %v2427
  %v2429 = vpop.f32.mrb[0].mxu0
  %v2430 = vadd.f32 %v2287, %v2429
  %v2431 = vpop.f32.mrb[0].mxu0
  %2432 = vdwg.mxu0
  %2433 = vmatprep.subr.mxu0 0.0
  %v2434 = vand.u32 %v1715, 4294901760
  %2435 = vmatpush1.msra.mxu0 %v2434
  %2436 = vmatprep.subr.mxu0 0.0
  %v2437 = vand.u32 %v1716, 4294901760
  %2438 = vmatpush1.msra.mxu0 %v2437
  %2439 = vmatprep.subr.mxu0 0.0
  %v2440 = vand.u32 %v1717, 4294901760
  %2441 = vmatpush1.msra.mxu0 %v2440
  %2442 = vmatprep.subr.mxu0 0.0
  %v2443 = vand.u32 %v1718, 4294901760
  %2444 = vmatpush1.msra.mxu0 %v2443
  %2445 = vmatprep.subr.mxu0 0.0
  %v2446 = vand.u32 %v1719, 4294901760
  %2447 = vmatpush1.msra.mxu0 %v2446
  %2448 = vmatprep.subr.mxu0 0.0
  %v2449 = vand.u32 %v1720, 4294901760
  %2450 = vmatpush1.msra.mxu0 %v2449
  %2451 = vmatprep.subr.mxu0 0.0
  %v2452 = vand.u32 %v1721, 4294901760
  %2453 = vmatpush1.msra.mxu0 %v2452
  %2454 = vmatprep.subr.mxu0 0.0
  %v2455 = vand.u32 %v1722, 4294901760
  %2456 = vmatpush1.msra.mxu0 %v2455
  %2457 = vmatprep.subr.mxu0 0.0
  %v2458 = vand.u32 %v1723, 4294901760
  %2459 = vmatpush1.msra.mxu0 %v2458
  %2460 = vmatprep.subr.mxu0 0.0
  %v2461 = vand.u32 %v1724, 4294901760
  %2462 = vmatpush1.msra.mxu0 %v2461
  %2463 = vmatprep.subr.mxu0 0.0
  %v2464 = vand.u32 %v1725, 4294901760
  %2465 = vmatpush1.msra.mxu0 %v2464
  %2466 = vmatprep.subr.mxu0 0.0
  %v2467 = vand.u32 %v1726, 4294901760
  %2468 = vmatpush1.msra.mxu0 %v2467
  %2469 = vmatprep.subr.mxu0 0.0
  %v2470 = vand.u32 %v1727, 4294901760
  %2471 = vmatpush1.msra.mxu0 %v2470
  %2472 = vmatprep.subr.mxu0 0.0
  %v2473 = vand.u32 %v1728, 4294901760
  %2474 = vmatpush1.msra.mxu0 %v2473
  %2475 = vmatprep.subr.mxu0 0.0
  %v2476 = vand.u32 %v1729, 4294901760
  %2477 = vmatpush1.msra.mxu0 %v2476
  %2478 = vmatprep.subr.mxu0 0.0
  %v2479 = vand.u32 %v1730, 4294901760
  %2480 = vmatpush1.msra.mxu0 %v2479
  %2481 = vmatprep.subr.mxu0 0.0
  %2482 = vmatpush1.msra.mxu0 0.0
  %2483 = vmatprep.subr.mxu0 0.0
  %2484 = vmatpush1.msra.mxu0 0.0
  %2485 = vmatprep.subr.mxu0 0.0
  %2486 = vmatpush1.msra.mxu0 0.0
  %2487 = vmatprep.subr.mxu0 0.0
  %2488 = vmatpush1.msra.mxu0 0.0
  %2489 = vmatprep.subr.mxu0 0.0
  %2490 = vmatpush1.msra.mxu0 0.0
  %2491 = vmatprep.subr.mxu0 0.0
  %2492 = vmatpush1.msra.mxu0 0.0
  %2493 = vmatprep.subr.mxu0 0.0
  %2494 = vmatpush1.msra.mxu0 0.0
  %2495 = vmatprep.subr.mxu0 0.0
  %2496 = vmatpush1.msra.mxu0 0.0
  %2497 = vmatprep.subr.mxu0 0.0
  %2498 = vmatpush1.msra.mxu0 0.0
  %2499 = vmatprep.subr.mxu0 0.0
  %2500 = vmatpush1.msra.mxu0 0.0
  %2501 = vmatprep.subr.mxu0 0.0
  %2502 = vmatpush1.msra.mxu0 0.0
  %2503 = vmatprep.subr.mxu0 0.0
  %2504 = vmatpush1.msra.mxu0 0.0
  %2505 = vmatprep.subr.mxu0 0.0
  %2506 = vmatpush1.msra.mxu0 0.0
  %2507 = vmatprep.subr.mxu0 0.0
  %2508 = vmatpush1.msra.mxu0 0.0
  %2509 = vmatprep.subr.mxu0 0.0
  %2510 = vmatpush1.msra.mxu0 0.0
  %2511 = vmatprep.subr.mxu0 0.0
  %2512 = vmatpush1.msra.mxu0 0.0
  %2513 = vmatprep.mubr.f32.mxu0 0.0
  %v2514 = vand.u32 %v53, 4294901760
  %2515 = vmatmul.mubr.f32.gmra.mrb[0].mxu0 %v2514
  %v2516 = vpop.f32.mrb[0].mxu0
  %v2517 = vadd.f32 %v2406, %v2516
  %v2518 = vpop.f32.mrb[0].mxu0
  %2519 = vmatprep.mubr.f32.mxu0 0.0
  %v2520 = vand.u32 %v52, 4294901760
  %2521 = vmatmul.mubr.f32.gmra.mrb[0].mxu0 %v2520
  %v2522 = vpop.f32.mrb[0].mxu0
  %v2523 = vadd.f32 %v2412, %v2522
  %v2524 = vpop.f32.mrb[0].mxu0
  %2525 = vmatprep.mubr.f32.mxu0 0.0
  %v2526 = vand.u32 %v51, 4294901760
  %2527 = vmatmul.mubr.f32.gmra.mrb[0].mxu0 %v2526
  %v2528 = vpop.f32.mrb[0].mxu0
  %v2529 = vadd.f32 %v2418, %v2528
  %v2530 = vpop.f32.mrb[0].mxu0
  %2531 = vmatprep.mubr.f32.mxu0 0.0
  %v2532 = vand.u32 %v50, 4294901760
  %2533 = vmatmul.mubr.f32.gmra.mrb[0].mxu0 %v2532
  %v2534 = vpop.f32.mrb[0].mxu0
  %v2535 = vadd.f32 %v2424, %v2534
  %v2536 = vpop.f32.mrb[0].mxu0
  %2537 = vmatprep.mubr.f32.mxu0 0.0
  %v2538 = vand.u32 %v54, 4294901760
  %2539 = vmatmul.mubr.f32.gmra.mrb[0].mxu0 %v2538
  %v2540 = vpop.f32.mrb[0].mxu0
  %v2541 = vadd.f32 %v2430, %v2540
  %v2542 = vpop.f32.mrb[0].mxu0
  %2543 = vdwg.mxu0
  %v2544 = vadd.f32 %v1687, %v2517
  %v2545 = vadd.f32 %v1693, %v2523
  %v2546 = vadd.f32 %v1699, %v2529
  %v2547 = vadd.f32 %v1705, %v2535
  %v2548 = vadd.f32 %v1711, %v2541
  %v2549 = vlaneseq
  %v2550 = vshrl.u32 %v2549, 7
  %v2551 = vsub.s32 0, %v2550
  %v2552 = vrot.slane %v30, %v2551
  %v2553 = vadd.f32 %v2544, %v2552
  %v2554 = vadd.f32 %v2545, %v2552
  %v2555 = vadd.f32 %v2546, %v2552
  %v2556 = vadd.f32 %v2547, %v2552
  %v2557 = vadd.f32 %v2548, %v2552
  %v2558 = vmul.f32 %v2553, %v25
  %v2559 = vmul.f32 %v2554, %v26
  %v2560 = vmul.f32 %v2555, %v27
  %v2561 = vmul.f32 %v2556, %v28
  %v2562 = vmul.f32 %v2557, %v29
  %v2563 = vadd.f32 %v2558, %v2559
  %v2564 = vadd.f32 %v2563, %v2560
  %v2565 = vadd.f32 %v2564, %v2561
  %v2566 = vadd.f32 %v2565, %v2562
  %v2567 = vrot.slane %v2566, 4
  %v2568 = vadd.f32 %v2566, %v2567
  %v2569 = vrot.slane %v2568, 2
  %v2570 = vadd.f32 %v2568, %v2569
  %v2571 = vrot.slane %v2570, 1
  %v2572 = vadd.f32 %v2570, %v2571
  %v2573 = vmul.f32 %v2558, %v2558
  %v2574 = vmul.f32 %v2559, %v2559
  %v2575 = vmul.f32 %v2560, %v2560
  %v2576 = vmul.f32 %v2561, %v2561
  %v2577 = vmul.f32 %v2562, %v2562
  %v2578 = vadd.f32 %v2573, %v2574
  %v2579 = vadd.f32 %v2578, %v2575
  %v2580 = vadd.f32 %v2579, %v2576
  %v2581 = vadd.f32 %v2580, %v2577
  %v2582 = vrot.slane %v2581, 4
  %v2583 = vadd.f32 %v2581, %v2582
  %v2584 = vrot.slane %v2583, 2
  %v2585 = vadd.f32 %v2583, %v2584
  %v2586 = vrot.slane %v2585, 1
  %v2587 = vadd.f32 %v2585, %v2586
  %vm2588 = vcmask 1040384
  %v2589 = vsel %vm2588, %v2572, %v2587
  %2590 = vrot.lane.b32.xlu0 %v2589, 4
  %v2591 = vpop.permute.xlu0 %2590
  %v2592 = vadd.f32 %v2589, %v2591
  %2593 = vrot.lane.b32.xlu0 %v2592, 8
  %v2594 = vpop.permute.xlu0 %2593
  %v2595 = vadd.f32 %v2592, %v2594
  %2596 = vrot.lane.b32.xlu0 %v2595, 16
  %v2597 = vpop.permute.xlu0 %2596
  %v2598 = vadd.f32 %v2595, %v2597
  %2599 = vrot.lane.b32.xlu0 %v2598, 32
  %v2600 = vpop.permute.xlu0 %2599
  %v2601 = vadd.f32 %v2598, %v2600
  %2602 = vrot.lane.b32.xlu0 %v2601, 64
  %v2603 = vpop.permute.xlu0 %2602
  %v2604 = vadd.f32 %v2601, %v2603
  %v2605 = vmul.f32 %v2604, 0.001953125
  %v2606 = vmul.f32 %v2605, %v2605
  %v2608 = vrot.slane %v2606, 7
  %v2610 = vsub.f32 %v2605, %v2608
  %v2611 = vmax.f32 %v2610, 0.0
  %v2612 = vlaneseq
  %v2613 = vshrl.u32 %v2612, 7
  %v2614 = vsub.s32 0, %v2613
  %v2615 = vrot.slane %v2605, %v2614
  %v2616 = vsub.f32 %v2558, %v2615
  %v2617 = vsub.f32 %v2559, %v2615
  %v2618 = vsub.f32 %v2560, %v2615
  %v2619 = vsub.f32 %v2561, %v2615
  %v2620 = vsub.f32 %v2562, %v2615
  %v2621 = vadd.f32 %v2611, 1e-05
  %v2622 = vrsqrt.pop %v2621
  %v2623 = vlaneseq
  %v2624 = vshrl.u32 %v2623, 7
  %v2625 = vsub.s32 1, %v2624
  %v2626 = vrot.slane %v2622, %v2625
  %v2627 = vmul.f32 %v2616, %v2626
  %v2628 = vmul.f32 %v2617, %v2626
  %v2629 = vmul.f32 %v2618, %v2626
  %v2630 = vmul.f32 %v2619, %v2626
  %v2631 = vmul.f32 %v2620, %v2626
  %v2632 = vlaneseq
  %v2633 = vshrl.u32 %v2632, 7
  %v2634 = vsub.s32 1, %v2633
  %v2635 = vrot.slane %v30, %v2634
  %v2636 = vmul.f32 %v2627, %v2635
  %v2637 = vmul.f32 %v2628, %v2635
  %v2638 = vmul.f32 %v2629, %v2635
  %v2639 = vmul.f32 %v2630, %v2635
  %v2640 = vmul.f32 %v2631, %v2635
  %v2641 = vlaneseq
  %v2642 = vshrl.u32 %v2641, 7
  %v2643 = vsub.s32 2, %v2642
  %v2644 = vrot.slane %v30, %v2643
  %v2645 = vadd.f32 %v2636, %v2644
  %v2646 = vadd.f32 %v2637, %v2644
  %v2647 = vadd.f32 %v2638, %v2644
  %v2648 = vadd.f32 %v2639, %v2644
  %v2649 = vadd.f32 %v2640, %v2644
  %v2650 = vmax.f32 %v2645, 0.0
  %v2651 = vmax.f32 %v2646, 0.0
  %v2652 = vmax.f32 %v2647, 0.0
  %v2653 = vmax.f32 %v2648, 0.0
  %v2654 = vmax.f32 %v2649, 0.0
  %v2655 = vmul.f32 %v2650, %v25
  %v2656 = vmul.f32 %v2651, %v26
  %v2657 = vmul.f32 %v2652, %v27
  %v2658 = vmul.f32 %v2653, %v28
  %v2659 = vmul.f32 %v2654, %v29
  %v2660 = vrot.slane %v2655, 7
  %v2661 = vrot.slane %v2656, 7
  %v2662 = vrot.slane %v2657, 7
  %v2663 = vrot.slane %v2658, 7
  %v2664 = vrot.slane %v2659, 7
  %v2665 = vsel %vm38, %v2663, %v2664
  %v2666 = vsel %vm38, %v2662, %v2663
  %v2667 = vsel %vm38, %v2661, %v2662
  %v2668 = vsel %vm38, %v2660, %v2661
  %v2669 = vsel %vm38, %v2664, %v2660
  %v2670 = vrot.slane %v2655, 1
  %v2671 = vrot.slane %v2656, 1
  %v2672 = vrot.slane %v2657, 1
  %v2673 = vrot.slane %v2658, 1
  %v2674 = vrot.slane %v2659, 1
  %v2675 = vsel %vm49, %v2673, %v2674
  %v2676 = vsel %vm49, %v2672, %v2673
  %v2677 = vsel %vm49, %v2671, %v2672
  %v2678 = vsel %vm49, %v2670, %v2671
  %v2679 = vsel %vm49, %v2674, %v2670
  %v2680 = vld [vmem:[%s3] sm:$0xff]
  %v2681 = vld [vmem:[%s3 + $0x8] sm:$0xff]
  %v2682 = vld [vmem:[%s3 + $0x10] sm:$0xff]
  %v2683 = vld [vmem:[%s3 + $0x18] sm:$0xff]
  %v2684 = vld [vmem:[%s3 + $0x20] sm:$0xff]
  %v2685 = vld [vmem:[%s3 + $0x28] sm:$0xff]
  %v2686 = vld [vmem:[%s3 + $0x30] sm:$0xff]
  %v2687 = vld [vmem:[%s3 + $0x38] sm:$0xff]
  %v2688 = vld [vmem:[%s3 + $0x40] sm:$0xff]
  %v2689 = vld [vmem:[%s3 + $0x48] sm:$0xff]
  %v2690 = vld [vmem:[%s3 + $0x50] sm:$0xff]
  %v2691 = vld [vmem:[%s3 + $0x58] sm:$0xff]
  %v2692 = vld [vmem:[%s3 + $0x60] sm:$0xff]
  %v2693 = vld [vmem:[%s3 + $0x68] sm:$0xff]
  %v2694 = vld [vmem:[%s3 + $0x70] sm:$0xff]
  %v2695 = vld [vmem:[%s3 + $0x78] sm:$0xff]
  %s2696 = scalar_lea.vmem %s3, 128
  %v2697 = vld [vmem:[%s2696] sm:$0xff]
  %v2698 = vld [vmem:[%s2696 + $0x8] sm:$0xff]
  %v2699 = vld [vmem:[%s2696 + $0x10] sm:$0xff]
  %v2700 = vld [vmem:[%s2696 + $0x18] sm:$0xff]
  %v2701 = vld [vmem:[%s2696 + $0x20] sm:$0xff]
  %v2702 = vld [vmem:[%s2696 + $0x28] sm:$0xff]
  %v2703 = vld [vmem:[%s2696 + $0x30] sm:$0xff]
  %v2704 = vld [vmem:[%s2696 + $0x38] sm:$0xff]
  %v2705 = vld [vmem:[%s2696 + $0x40] sm:$0xff]
  %v2706 = vld [vmem:[%s2696 + $0x48] sm:$0xff]
  %v2707 = vld [vmem:[%s2696 + $0x50] sm:$0xff]
  %v2708 = vld [vmem:[%s2696 + $0x58] sm:$0xff]
  %v2709 = vld [vmem:[%s2696 + $0x60] sm:$0xff]
  %v2710 = vld [vmem:[%s2696 + $0x68] sm:$0xff]
  %v2711 = vld [vmem:[%s2696 + $0x70] sm:$0xff]
  %v2712 = vld [vmem:[%s2696 + $0x78] sm:$0xff]
  %2713 = vmatprep.subr.mxu0 0.0
  %v2714 = vand.u32 %v2697, 4294901760
  %2715 = vmatpush1.msra.mxu0 %v2714
  %2716 = vmatprep.subr.mxu0 0.0
  %v2717 = vand.u32 %v2698, 4294901760
  %2718 = vmatpush1.msra.mxu0 %v2717
  %2719 = vmatprep.subr.mxu0 0.0
  %v2720 = vand.u32 %v2699, 4294901760
  %2721 = vmatpush1.msra.mxu0 %v2720
  %2722 = vmatprep.subr.mxu0 0.0
  %v2723 = vand.u32 %v2700, 4294901760
  %2724 = vmatpush1.msra.mxu0 %v2723
  %2725 = vmatprep.subr.mxu0 0.0
  %v2726 = vand.u32 %v2701, 4294901760
  %2727 = vmatpush1.msra.mxu0 %v2726
  %2728 = vmatprep.subr.mxu0 0.0
  %v2729 = vand.u32 %v2702, 4294901760
  %2730 = vmatpush1.msra.mxu0 %v2729
  %2731 = vmatprep.subr.mxu0 0.0
  %v2732 = vand.u32 %v2703, 4294901760
  %2733 = vmatpush1.msra.mxu0 %v2732
  %2734 = vmatprep.subr.mxu0 0.0
  %v2735 = vand.u32 %v2704, 4294901760
  %2736 = vmatpush1.msra.mxu0 %v2735
  %2737 = vmatprep.subr.mxu0 0.0
  %v2738 = vand.u32 %v2705, 4294901760
  %2739 = vmatpush1.msra.mxu0 %v2738
  %2740 = vmatprep.subr.mxu0 0.0
  %v2741 = vand.u32 %v2706, 4294901760
  %2742 = vmatpush1.msra.mxu0 %v2741
  %2743 = vmatprep.subr.mxu0 0.0
  %v2744 = vand.u32 %v2707, 4294901760
  %2745 = vmatpush1.msra.mxu0 %v2744
  %2746 = vmatprep.subr.mxu0 0.0
  %v2747 = vand.u32 %v2708, 4294901760
  %2748 = vmatpush1.msra.mxu0 %v2747
  %2749 = vmatprep.subr.mxu0 0.0
  %v2750 = vand.u32 %v2709, 4294901760
  %2751 = vmatpush1.msra.mxu0 %v2750
  %2752 = vmatprep.subr.mxu0 0.0
  %v2753 = vand.u32 %v2710, 4294901760
  %2754 = vmatpush1.msra.mxu0 %v2753
  %2755 = vmatprep.subr.mxu0 0.0
  %v2756 = vand.u32 %v2711, 4294901760
  %2757 = vmatpush1.msra.mxu0 %v2756
  %2758 = vmatprep.subr.mxu0 0.0
  %v2759 = vand.u32 %v2712, 4294901760
  %2760 = vmatpush1.msra.mxu0 %v2759
  %2761 = vmatprep.subr.mxu0 0.0
  %2762 = vmatpush1.msra.mxu0 0.0
  %2763 = vmatprep.subr.mxu0 0.0
  %2764 = vmatpush1.msra.mxu0 0.0
  %2765 = vmatprep.subr.mxu0 0.0
  %2766 = vmatpush1.msra.mxu0 0.0
  %2767 = vmatprep.subr.mxu0 0.0
  %2768 = vmatpush1.msra.mxu0 0.0
  %2769 = vmatprep.subr.mxu0 0.0
  %2770 = vmatpush1.msra.mxu0 0.0
  %2771 = vmatprep.subr.mxu0 0.0
  %2772 = vmatpush1.msra.mxu0 0.0
  %2773 = vmatprep.subr.mxu0 0.0
  %2774 = vmatpush1.msra.mxu0 0.0
  %2775 = vmatprep.subr.mxu0 0.0
  %2776 = vmatpush1.msra.mxu0 0.0
  %2777 = vmatprep.subr.mxu0 0.0
  %2778 = vmatpush1.msra.mxu0 0.0
  %2779 = vmatprep.subr.mxu0 0.0
  %2780 = vmatpush1.msra.mxu0 0.0
  %2781 = vmatprep.subr.mxu0 0.0
  %2782 = vmatpush1.msra.mxu0 0.0
  %2783 = vmatprep.subr.mxu0 0.0
  %2784 = vmatpush1.msra.mxu0 0.0
  %2785 = vmatprep.subr.mxu0 0.0
  %2786 = vmatpush1.msra.mxu0 0.0
  %2787 = vmatprep.subr.mxu0 0.0
  %2788 = vmatpush1.msra.mxu0 0.0
  %2789 = vmatprep.subr.mxu0 0.0
  %2790 = vmatpush1.msra.mxu0 0.0
  %2791 = vmatprep.subr.mxu0 0.0
  %2792 = vmatpush1.msra.mxu0 0.0
  %2793 = vmatprep.mubr.f32.mxu0 0.0
  %v2794 = vand.u32 %v2655, 4294901760
  %v2795 = vsub.f32 %v2655, %v2794
  %v2796 = vand.u32 %v2795, 4294901760
  %v2797 = vsub.f32 %v2795, %v2796
  %v2798 = vand.u32 %v2797, 4294901760
  %2799 = vmatmul.mubr.f32.gmra.mrb[0].mxu0 %v2798
  %v2800 = vpop.f32.mrb[0].mxu0
  %v2801 = vadd.f32 0.0, %v2800
  %v2802 = vpop.f32.mrb[0].mxu0
  %2803 = vmatprep.mubr.f32.mxu0 0.0
  %v2804 = vand.u32 %v2656, 4294901760
  %v2805 = vsub.f32 %v2656, %v2804
  %v2806 = vand.u32 %v2805, 4294901760
  %v2807 = vsub.f32 %v2805, %v2806
  %v2808 = vand.u32 %v2807, 4294901760
  %2809 = vmatmul.mubr.f32.gmra.mrb[0].mxu0 %v2808
  %v2810 = vpop.f32.mrb[0].mxu0
  %v2811 = vadd.f32 0.0, %v2810
  %v2812 = vpop.f32.mrb[0].mxu0
  %2813 = vmatprep.mubr.f32.mxu0 0.0
  %v2814 = vand.u32 %v2657, 4294901760
  %v2815 = vsub.f32 %v2657, %v2814
  %v2816 = vand.u32 %v2815, 4294901760
  %v2817 = vsub.f32 %v2815, %v2816
  %v2818 = vand.u32 %v2817, 4294901760
  %2819 = vmatmul.mubr.f32.gmra.mrb[0].mxu0 %v2818
  %v2820 = vpop.f32.mrb[0].mxu0
  %v2821 = vadd.f32 0.0, %v2820
  %v2822 = vpop.f32.mrb[0].mxu0
  %2823 = vmatprep.mubr.f32.mxu0 0.0
  %v2824 = vand.u32 %v2658, 4294901760
  %v2825 = vsub.f32 %v2658, %v2824
  %v2826 = vand.u32 %v2825, 4294901760
  %v2827 = vsub.f32 %v2825, %v2826
  %v2828 = vand.u32 %v2827, 4294901760
  %2829 = vmatmul.mubr.f32.gmra.mrb[0].mxu0 %v2828
  %v2830 = vpop.f32.mrb[0].mxu0
  %v2831 = vadd.f32 0.0, %v2830
  %v2832 = vpop.f32.mrb[0].mxu0
  %2833 = vmatprep.mubr.f32.mxu0 0.0
  %v2834 = vand.u32 %v2659, 4294901760
  %v2835 = vsub.f32 %v2659, %v2834
  %v2836 = vand.u32 %v2835, 4294901760
  %v2837 = vsub.f32 %v2835, %v2836
  %v2838 = vand.u32 %v2837, 4294901760
  %2839 = vmatmul.mubr.f32.gmra.mrb[0].mxu0 %v2838
  %v2840 = vpop.f32.mrb[0].mxu0
  %v2841 = vadd.f32 0.0, %v2840
  %v2842 = vpop.f32.mrb[0].mxu0
  %2843 = vdwg.mxu0
  %2844 = vmatprep.subr.mxu0 0.0
  %v2845 = vand.u32 %v2697, 4294901760
  %v2846 = vsub.f32 %v2697, %v2845
  %v2847 = vand.u32 %v2846, 4294901760
  %v2848 = vsub.f32 %v2846, %v2847
  %v2849 = vand.u32 %v2848, 4294901760
  %2850 = vmatpush1.msra.mxu0 %v2849
  %2851 = vmatprep.subr.mxu0 0.0
  %v2852 = vand.u32 %v2698, 4294901760
  %v2853 = vsub.f32 %v2698, %v2852
  %v2854 = vand.u32 %v2853, 4294901760
  %v2855 = vsub.f32 %v2853, %v2854
  %v2856 = vand.u32 %v2855, 4294901760
  %2857 = vmatpush1.msra.mxu0 %v2856
  %2858 = vmatprep.subr.mxu0 0.0
  %v2859 = vand.u32 %v2699, 4294901760
  %v2860 = vsub.f32 %v2699, %v2859
  %v2861 = vand.u32 %v2860, 4294901760
  %v2862 = vsub.f32 %v2860, %v2861
  %v2863 = vand.u32 %v2862, 4294901760
  %2864 = vmatpush1.msra.mxu0 %v2863
  %2865 = vmatprep.subr.mxu0 0.0
  %v2866 = vand.u32 %v2700, 4294901760
  %v2867 = vsub.f32 %v2700, %v2866
  %v2868 = vand.u32 %v2867, 4294901760
  %v2869 = vsub.f32 %v2867, %v2868
  %v2870 = vand.u32 %v2869, 4294901760
  %2871 = vmatpush1.msra.mxu0 %v2870
  %2872 = vmatprep.subr.mxu0 0.0
  %v2873 = vand.u32 %v2701, 4294901760
  %v2874 = vsub.f32 %v2701, %v2873
  %v2875 = vand.u32 %v2874, 4294901760
  %v2876 = vsub.f32 %v2874, %v2875
  %v2877 = vand.u32 %v2876, 4294901760
  %2878 = vmatpush1.msra.mxu0 %v2877
  %2879 = vmatprep.subr.mxu0 0.0
  %v2880 = vand.u32 %v2702, 4294901760
  %v2881 = vsub.f32 %v2702, %v2880
  %v2882 = vand.u32 %v2881, 4294901760
  %v2883 = vsub.f32 %v2881, %v2882
  %v2884 = vand.u32 %v2883, 4294901760
  %2885 = vmatpush1.msra.mxu0 %v2884
  %2886 = vmatprep.subr.mxu0 0.0
  %v2887 = vand.u32 %v2703, 4294901760
  %v2888 = vsub.f32 %v2703, %v2887
  %v2889 = vand.u32 %v2888, 4294901760
  %v2890 = vsub.f32 %v2888, %v2889
  %v2891 = vand.u32 %v2890, 4294901760
  %2892 = vmatpush1.msra.mxu0 %v2891
  %2893 = vmatprep.subr.mxu0 0.0
  %v2894 = vand.u32 %v2704, 4294901760
  %v2895 = vsub.f32 %v2704, %v2894
  %v2896 = vand.u32 %v2895, 4294901760
  %v2897 = vsub.f32 %v2895, %v2896
  %v2898 = vand.u32 %v2897, 4294901760
  %2899 = vmatpush1.msra.mxu0 %v2898
  %2900 = vmatprep.subr.mxu0 0.0
  %v2901 = vand.u32 %v2705, 4294901760
  %v2902 = vsub.f32 %v2705, %v2901
  %v2903 = vand.u32 %v2902, 4294901760
  %v2904 = vsub.f32 %v2902, %v2903
  %v2905 = vand.u32 %v2904, 4294901760
  %2906 = vmatpush1.msra.mxu0 %v2905
  %2907 = vmatprep.subr.mxu0 0.0
  %v2908 = vand.u32 %v2706, 4294901760
  %v2909 = vsub.f32 %v2706, %v2908
  %v2910 = vand.u32 %v2909, 4294901760
  %v2911 = vsub.f32 %v2909, %v2910
  %v2912 = vand.u32 %v2911, 4294901760
  %2913 = vmatpush1.msra.mxu0 %v2912
  %2914 = vmatprep.subr.mxu0 0.0
  %v2915 = vand.u32 %v2707, 4294901760
  %v2916 = vsub.f32 %v2707, %v2915
  %v2917 = vand.u32 %v2916, 4294901760
  %v2918 = vsub.f32 %v2916, %v2917
  %v2919 = vand.u32 %v2918, 4294901760
  %2920 = vmatpush1.msra.mxu0 %v2919
  %2921 = vmatprep.subr.mxu0 0.0
  %v2922 = vand.u32 %v2708, 4294901760
  %v2923 = vsub.f32 %v2708, %v2922
  %v2924 = vand.u32 %v2923, 4294901760
  %v2925 = vsub.f32 %v2923, %v2924
  %v2926 = vand.u32 %v2925, 4294901760
  %2927 = vmatpush1.msra.mxu0 %v2926
  %2928 = vmatprep.subr.mxu0 0.0
  %v2929 = vand.u32 %v2709, 4294901760
  %v2930 = vsub.f32 %v2709, %v2929
  %v2931 = vand.u32 %v2930, 4294901760
  %v2932 = vsub.f32 %v2930, %v2931
  %v2933 = vand.u32 %v2932, 4294901760
  %2934 = vmatpush1.msra.mxu0 %v2933
  %2935 = vmatprep.subr.mxu0 0.0
  %v2936 = vand.u32 %v2710, 4294901760
  %v2937 = vsub.f32 %v2710, %v2936
  %v2938 = vand.u32 %v2937, 4294901760
  %v2939 = vsub.f32 %v2937, %v2938
  %v2940 = vand.u32 %v2939, 4294901760
  %2941 = vmatpush1.msra.mxu0 %v2940
  %2942 = vmatprep.subr.mxu0 0.0
  %v2943 = vand.u32 %v2711, 4294901760
  %v2944 = vsub.f32 %v2711, %v2943
  %v2945 = vand.u32 %v2944, 4294901760
  %v2946 = vsub.f32 %v2944, %v2945
  %v2947 = vand.u32 %v2946, 4294901760
  %2948 = vmatpush1.msra.mxu0 %v2947
  %2949 = vmatprep.subr.mxu0 0.0
  %v2950 = vand.u32 %v2712, 4294901760
  %v2951 = vsub.f32 %v2712, %v2950
  %v2952 = vand.u32 %v2951, 4294901760
  %v2953 = vsub.f32 %v2951, %v2952
  %v2954 = vand.u32 %v2953, 4294901760
  %2955 = vmatpush1.msra.mxu0 %v2954
  %2956 = vmatprep.subr.mxu0 0.0
  %2957 = vmatpush1.msra.mxu0 0.0
  %2958 = vmatprep.subr.mxu0 0.0
  %2959 = vmatpush1.msra.mxu0 0.0
  %2960 = vmatprep.subr.mxu0 0.0
  %2961 = vmatpush1.msra.mxu0 0.0
  %2962 = vmatprep.subr.mxu0 0.0
  %2963 = vmatpush1.msra.mxu0 0.0
  %2964 = vmatprep.subr.mxu0 0.0
  %2965 = vmatpush1.msra.mxu0 0.0
  %2966 = vmatprep.subr.mxu0 0.0
  %2967 = vmatpush1.msra.mxu0 0.0
  %2968 = vmatprep.subr.mxu0 0.0
  %2969 = vmatpush1.msra.mxu0 0.0
  %2970 = vmatprep.subr.mxu0 0.0
  %2971 = vmatpush1.msra.mxu0 0.0
  %2972 = vmatprep.subr.mxu0 0.0
  %2973 = vmatpush1.msra.mxu0 0.0
  %2974 = vmatprep.subr.mxu0 0.0
  %2975 = vmatpush1.msra.mxu0 0.0
  %2976 = vmatprep.subr.mxu0 0.0
  %2977 = vmatpush1.msra.mxu0 0.0
  %2978 = vmatprep.subr.mxu0 0.0
  %2979 = vmatpush1.msra.mxu0 0.0
  %2980 = vmatprep.subr.mxu0 0.0
  %2981 = vmatpush1.msra.mxu0 0.0
  %2982 = vmatprep.subr.mxu0 0.0
  %2983 = vmatpush1.msra.mxu0 0.0
  %2984 = vmatprep.subr.mxu0 0.0
  %2985 = vmatpush1.msra.mxu0 0.0
  %2986 = vmatprep.subr.mxu0 0.0
  %2987 = vmatpush1.msra.mxu0 0.0
  %2988 = vmatprep.mubr.f32.mxu0 0.0
  %v2989 = vand.u32 %v2655, 4294901760
  %2990 = vmatmul.mubr.f32.gmra.mrb[0].mxu0 %v2989
  %v2991 = vpop.f32.mrb[0].mxu0
  %v2992 = vadd.f32 %v2801, %v2991
  %v2993 = vpop.f32.mrb[0].mxu0
  %2994 = vmatprep.mubr.f32.mxu0 0.0
  %v2995 = vand.u32 %v2656, 4294901760
  %2996 = vmatmul.mubr.f32.gmra.mrb[0].mxu0 %v2995
  %v2997 = vpop.f32.mrb[0].mxu0
  %v2998 = vadd.f32 %v2811, %v2997
  %v2999 = vpop.f32.mrb[0].mxu0
  %3000 = vmatprep.mubr.f32.mxu0 0.0
  %v3001 = vand.u32 %v2657, 4294901760
  %3002 = vmatmul.mubr.f32.gmra.mrb[0].mxu0 %v3001
  %v3003 = vpop.f32.mrb[0].mxu0
  %v3004 = vadd.f32 %v2821, %v3003
  %v3005 = vpop.f32.mrb[0].mxu0
  %3006 = vmatprep.mubr.f32.mxu0 0.0
  %v3007 = vand.u32 %v2658, 4294901760
  %3008 = vmatmul.mubr.f32.gmra.mrb[0].mxu0 %v3007
  %v3009 = vpop.f32.mrb[0].mxu0
  %v3010 = vadd.f32 %v2831, %v3009
  %v3011 = vpop.f32.mrb[0].mxu0
  %3012 = vmatprep.mubr.f32.mxu0 0.0
  %v3013 = vand.u32 %v2659, 4294901760
  %3014 = vmatmul.mubr.f32.gmra.mrb[0].mxu0 %v3013
  %v3015 = vpop.f32.mrb[0].mxu0
  %v3016 = vadd.f32 %v2841, %v3015
  %v3017 = vpop.f32.mrb[0].mxu0
  %3018 = vdwg.mxu0
  %3019 = vmatprep.subr.mxu0 0.0
  %v3020 = vand.u32 %v2697, 4294901760
  %v3021 = vsub.f32 %v2697, %v3020
  %3022 = vmatpush1.msra.mxu0 %v3021
  %3023 = vmatprep.subr.mxu0 0.0
  %v3024 = vand.u32 %v2698, 4294901760
  %v3025 = vsub.f32 %v2698, %v3024
  %3026 = vmatpush1.msra.mxu0 %v3025
  %3027 = vmatprep.subr.mxu0 0.0
  %v3028 = vand.u32 %v2699, 4294901760
  %v3029 = vsub.f32 %v2699, %v3028
  %3030 = vmatpush1.msra.mxu0 %v3029
  %3031 = vmatprep.subr.mxu0 0.0
  %v3032 = vand.u32 %v2700, 4294901760
  %v3033 = vsub.f32 %v2700, %v3032
  %3034 = vmatpush1.msra.mxu0 %v3033
  %3035 = vmatprep.subr.mxu0 0.0
  %v3036 = vand.u32 %v2701, 4294901760
  %v3037 = vsub.f32 %v2701, %v3036
  %3038 = vmatpush1.msra.mxu0 %v3037
  %3039 = vmatprep.subr.mxu0 0.0
  %v3040 = vand.u32 %v2702, 4294901760
  %v3041 = vsub.f32 %v2702, %v3040
  %3042 = vmatpush1.msra.mxu0 %v3041
  %3043 = vmatprep.subr.mxu0 0.0
  %v3044 = vand.u32 %v2703, 4294901760
  %v3045 = vsub.f32 %v2703, %v3044
  %3046 = vmatpush1.msra.mxu0 %v3045
  %3047 = vmatprep.subr.mxu0 0.0
  %v3048 = vand.u32 %v2704, 4294901760
  %v3049 = vsub.f32 %v2704, %v3048
  %3050 = vmatpush1.msra.mxu0 %v3049
  %3051 = vmatprep.subr.mxu0 0.0
  %v3052 = vand.u32 %v2705, 4294901760
  %v3053 = vsub.f32 %v2705, %v3052
  %3054 = vmatpush1.msra.mxu0 %v3053
  %3055 = vmatprep.subr.mxu0 0.0
  %v3056 = vand.u32 %v2706, 4294901760
  %v3057 = vsub.f32 %v2706, %v3056
  %3058 = vmatpush1.msra.mxu0 %v3057
  %3059 = vmatprep.subr.mxu0 0.0
  %v3060 = vand.u32 %v2707, 4294901760
  %v3061 = vsub.f32 %v2707, %v3060
  %3062 = vmatpush1.msra.mxu0 %v3061
  %3063 = vmatprep.subr.mxu0 0.0
  %v3064 = vand.u32 %v2708, 4294901760
  %v3065 = vsub.f32 %v2708, %v3064
  %3066 = vmatpush1.msra.mxu0 %v3065
  %3067 = vmatprep.subr.mxu0 0.0
  %v3068 = vand.u32 %v2709, 4294901760
  %v3069 = vsub.f32 %v2709, %v3068
  %3070 = vmatpush1.msra.mxu0 %v3069
  %3071 = vmatprep.subr.mxu0 0.0
  %v3072 = vand.u32 %v2710, 4294901760
  %v3073 = vsub.f32 %v2710, %v3072
  %3074 = vmatpush1.msra.mxu0 %v3073
  %3075 = vmatprep.subr.mxu0 0.0
  %v3076 = vand.u32 %v2711, 4294901760
  %v3077 = vsub.f32 %v2711, %v3076
  %3078 = vmatpush1.msra.mxu0 %v3077
  %3079 = vmatprep.subr.mxu0 0.0
  %v3080 = vand.u32 %v2712, 4294901760
  %v3081 = vsub.f32 %v2712, %v3080
  %3082 = vmatpush1.msra.mxu0 %v3081
  %3083 = vmatprep.subr.mxu0 0.0
  %3084 = vmatpush1.msra.mxu0 0.0
  %3085 = vmatprep.subr.mxu0 0.0
  %3086 = vmatpush1.msra.mxu0 0.0
  %3087 = vmatprep.subr.mxu0 0.0
  %3088 = vmatpush1.msra.mxu0 0.0
  %3089 = vmatprep.subr.mxu0 0.0
  %3090 = vmatpush1.msra.mxu0 0.0
  %3091 = vmatprep.subr.mxu0 0.0
  %3092 = vmatpush1.msra.mxu0 0.0
  %3093 = vmatprep.subr.mxu0 0.0
  %3094 = vmatpush1.msra.mxu0 0.0
  %3095 = vmatprep.subr.mxu0 0.0
  %3096 = vmatpush1.msra.mxu0 0.0
  %3097 = vmatprep.subr.mxu0 0.0
  %3098 = vmatpush1.msra.mxu0 0.0
  %3099 = vmatprep.subr.mxu0 0.0
  %3100 = vmatpush1.msra.mxu0 0.0
  %3101 = vmatprep.subr.mxu0 0.0
  %3102 = vmatpush1.msra.mxu0 0.0
  %3103 = vmatprep.subr.mxu0 0.0
  %3104 = vmatpush1.msra.mxu0 0.0
  %3105 = vmatprep.subr.mxu0 0.0
  %3106 = vmatpush1.msra.mxu0 0.0
  %3107 = vmatprep.subr.mxu0 0.0
  %3108 = vmatpush1.msra.mxu0 0.0
  %3109 = vmatprep.subr.mxu0 0.0
  %3110 = vmatpush1.msra.mxu0 0.0
  %3111 = vmatprep.subr.mxu0 0.0
  %3112 = vmatpush1.msra.mxu0 0.0
  %3113 = vmatprep.subr.mxu0 0.0
  %3114 = vmatpush1.msra.mxu0 0.0
  %3115 = vmatprep.mubr.f32.mxu0 0.0
  %v3116 = vand.u32 %v2655, 4294901760
  %v3117 = vsub.f32 %v2655, %v3116
  %3118 = vmatmul.mubr.f32.gmra.mrb[0].mxu0 %v3117
  %v3119 = vpop.f32.mrb[0].mxu0
  %v3120 = vadd.f32 %v2992, %v3119
  %v3121 = vpop.f32.mrb[0].mxu0
  %3122 = vmatprep.mubr.f32.mxu0 0.0
  %v3123 = vand.u32 %v2656, 4294901760
  %v3124 = vsub.f32 %v2656, %v3123
  %3125 = vmatmul.mubr.f32.gmra.mrb[0].mxu0 %v3124
  %v3126 = vpop.f32.mrb[0].mxu0
  %v3127 = vadd.f32 %v2998, %v3126
  %v3128 = vpop.f32.mrb[0].mxu0
  %3129 = vmatprep.mubr.f32.mxu0 0.0
  %v3130 = vand.u32 %v2657, 4294901760
  %v3131 = vsub.f32 %v2657, %v3130
  %3132 = vmatmul.mubr.f32.gmra.mrb[0].mxu0 %v3131
  %v3133 = vpop.f32.mrb[0].mxu0
  %v3134 = vadd.f32 %v3004, %v3133
  %v3135 = vpop.f32.mrb[0].mxu0
  %3136 = vmatprep.mubr.f32.mxu0 0.0
  %v3137 = vand.u32 %v2658, 4294901760
  %v3138 = vsub.f32 %v2658, %v3137
  %3139 = vmatmul.mubr.f32.gmra.mrb[0].mxu0 %v3138
  %v3140 = vpop.f32.mrb[0].mxu0
  %v3141 = vadd.f32 %v3010, %v3140
  %v3142 = vpop.f32.mrb[0].mxu0
  %3143 = vmatprep.mubr.f32.mxu0 0.0
  %v3144 = vand.u32 %v2659, 4294901760
  %v3145 = vsub.f32 %v2659, %v3144
  %3146 = vmatmul.mubr.f32.gmra.mrb[0].mxu0 %v3145
  %v3147 = vpop.f32.mrb[0].mxu0
  %v3148 = vadd.f32 %v3016, %v3147
  %v3149 = vpop.f32.mrb[0].mxu0
  %3150 = vdwg.mxu0
  %3151 = vmatprep.subr.mxu0 0.0
  %v3152 = vand.u32 %v2697, 4294901760
  %3153 = vmatpush1.msra.mxu0 %v3152
  %3154 = vmatprep.subr.mxu0 0.0
  %v3155 = vand.u32 %v2698, 4294901760
  %3156 = vmatpush1.msra.mxu0 %v3155
  %3157 = vmatprep.subr.mxu0 0.0
  %v3158 = vand.u32 %v2699, 4294901760
  %3159 = vmatpush1.msra.mxu0 %v3158
  %3160 = vmatprep.subr.mxu0 0.0
  %v3161 = vand.u32 %v2700, 4294901760
  %3162 = vmatpush1.msra.mxu0 %v3161
  %3163 = vmatprep.subr.mxu0 0.0
  %v3164 = vand.u32 %v2701, 4294901760
  %3165 = vmatpush1.msra.mxu0 %v3164
  %3166 = vmatprep.subr.mxu0 0.0
  %v3167 = vand.u32 %v2702, 4294901760
  %3168 = vmatpush1.msra.mxu0 %v3167
  %3169 = vmatprep.subr.mxu0 0.0
  %v3170 = vand.u32 %v2703, 4294901760
  %3171 = vmatpush1.msra.mxu0 %v3170
  %3172 = vmatprep.subr.mxu0 0.0
  %v3173 = vand.u32 %v2704, 4294901760
  %3174 = vmatpush1.msra.mxu0 %v3173
  %3175 = vmatprep.subr.mxu0 0.0
  %v3176 = vand.u32 %v2705, 4294901760
  %3177 = vmatpush1.msra.mxu0 %v3176
  %3178 = vmatprep.subr.mxu0 0.0
  %v3179 = vand.u32 %v2706, 4294901760
  %3180 = vmatpush1.msra.mxu0 %v3179
  %3181 = vmatprep.subr.mxu0 0.0
  %v3182 = vand.u32 %v2707, 4294901760
  %3183 = vmatpush1.msra.mxu0 %v3182
  %3184 = vmatprep.subr.mxu0 0.0
  %v3185 = vand.u32 %v2708, 4294901760
  %3186 = vmatpush1.msra.mxu0 %v3185
  %3187 = vmatprep.subr.mxu0 0.0
  %v3188 = vand.u32 %v2709, 4294901760
  %3189 = vmatpush1.msra.mxu0 %v3188
  %3190 = vmatprep.subr.mxu0 0.0
  %v3191 = vand.u32 %v2710, 4294901760
  %3192 = vmatpush1.msra.mxu0 %v3191
  %3193 = vmatprep.subr.mxu0 0.0
  %v3194 = vand.u32 %v2711, 4294901760
  %3195 = vmatpush1.msra.mxu0 %v3194
  %3196 = vmatprep.subr.mxu0 0.0
  %v3197 = vand.u32 %v2712, 4294901760
  %3198 = vmatpush1.msra.mxu0 %v3197
  %3199 = vmatprep.subr.mxu0 0.0
  %3200 = vmatpush1.msra.mxu0 0.0
  %3201 = vmatprep.subr.mxu0 0.0
  %3202 = vmatpush1.msra.mxu0 0.0
  %3203 = vmatprep.subr.mxu0 0.0
  %3204 = vmatpush1.msra.mxu0 0.0
  %3205 = vmatprep.subr.mxu0 0.0
  %3206 = vmatpush1.msra.mxu0 0.0
  %3207 = vmatprep.subr.mxu0 0.0
  %3208 = vmatpush1.msra.mxu0 0.0
  %3209 = vmatprep.subr.mxu0 0.0
  %3210 = vmatpush1.msra.mxu0 0.0
  %3211 = vmatprep.subr.mxu0 0.0
  %3212 = vmatpush1.msra.mxu0 0.0
  %3213 = vmatprep.subr.mxu0 0.0
  %3214 = vmatpush1.msra.mxu0 0.0
  %3215 = vmatprep.subr.mxu0 0.0
  %3216 = vmatpush1.msra.mxu0 0.0
  %3217 = vmatprep.subr.mxu0 0.0
  %3218 = vmatpush1.msra.mxu0 0.0
  %3219 = vmatprep.subr.mxu0 0.0
  %3220 = vmatpush1.msra.mxu0 0.0
  %3221 = vmatprep.subr.mxu0 0.0
  %3222 = vmatpush1.msra.mxu0 0.0
  %3223 = vmatprep.subr.mxu0 0.0
  %3224 = vmatpush1.msra.mxu0 0.0
  %3225 = vmatprep.subr.mxu0 0.0
  %3226 = vmatpush1.msra.mxu0 0.0
  %3227 = vmatprep.subr.mxu0 0.0
  %3228 = vmatpush1.msra.mxu0 0.0
  %3229 = vmatprep.subr.mxu0 0.0
  %3230 = vmatpush1.msra.mxu0 0.0
  %3231 = vmatprep.mubr.f32.mxu0 0.0
  %v3232 = vand.u32 %v2655, 4294901760
  %v3233 = vsub.f32 %v2655, %v3232
  %v3234 = vand.u32 %v3233, 4294901760
  %3235 = vmatmul.mubr.f32.gmra.mrb[0].mxu0 %v3234
  %v3236 = vpop.f32.mrb[0].mxu0
  %v3237 = vadd.f32 %v3120, %v3236
  %v3238 = vpop.f32.mrb[0].mxu0
  %3239 = vmatprep.mubr.f32.mxu0 0.0
  %v3240 = vand.u32 %v2656, 4294901760
  %v3241 = vsub.f32 %v2656, %v3240
  %v3242 = vand.u32 %v3241, 4294901760
  %3243 = vmatmul.mubr.f32.gmra.mrb[0].mxu0 %v3242
  %v3244 = vpop.f32.mrb[0].mxu0
  %v3245 = vadd.f32 %v3127, %v3244
  %v3246 = vpop.f32.mrb[0].mxu0
  %3247 = vmatprep.mubr.f32.mxu0 0.0
  %v3248 = vand.u32 %v2657, 4294901760
  %v3249 = vsub.f32 %v2657, %v3248
  %v3250 = vand.u32 %v3249, 4294901760
  %3251 = vmatmul.mubr.f32.gmra.mrb[0].mxu0 %v3250
  %v3252 = vpop.f32.mrb[0].mxu0
  %v3253 = vadd.f32 %v3134, %v3252
  %v3254 = vpop.f32.mrb[0].mxu0
  %3255 = vmatprep.mubr.f32.mxu0 0.0
  %v3256 = vand.u32 %v2658, 4294901760
  %v3257 = vsub.f32 %v2658, %v3256
  %v3258 = vand.u32 %v3257, 4294901760
  %3259 = vmatmul.mubr.f32.gmra.mrb[0].mxu0 %v3258
  %v3260 = vpop.f32.mrb[0].mxu0
  %v3261 = vadd.f32 %v3141, %v3260
  %v3262 = vpop.f32.mrb[0].mxu0
  %3263 = vmatprep.mubr.f32.mxu0 0.0
  %v3264 = vand.u32 %v2659, 4294901760
  %v3265 = vsub.f32 %v2659, %v3264
  %v3266 = vand.u32 %v3265, 4294901760
  %3267 = vmatmul.mubr.f32.gmra.mrb[0].mxu0 %v3266
  %v3268 = vpop.f32.mrb[0].mxu0
  %v3269 = vadd.f32 %v3148, %v3268
  %v3270 = vpop.f32.mrb[0].mxu0
  %3271 = vdwg.mxu0
  %3272 = vmatprep.subr.mxu0 0.0
  %v3273 = vand.u32 %v2697, 4294901760
  %v3274 = vsub.f32 %v2697, %v3273
  %v3275 = vand.u32 %v3274, 4294901760
  %3276 = vmatpush1.msra.mxu0 %v3275
  %3277 = vmatprep.subr.mxu0 0.0
  %v3278 = vand.u32 %v2698, 4294901760
  %v3279 = vsub.f32 %v2698, %v3278
  %v3280 = vand.u32 %v3279, 4294901760
  %3281 = vmatpush1.msra.mxu0 %v3280
  %3282 = vmatprep.subr.mxu0 0.0
  %v3283 = vand.u32 %v2699, 4294901760
  %v3284 = vsub.f32 %v2699, %v3283
  %v3285 = vand.u32 %v3284, 4294901760
  %3286 = vmatpush1.msra.mxu0 %v3285
  %3287 = vmatprep.subr.mxu0 0.0
  %v3288 = vand.u32 %v2700, 4294901760
  %v3289 = vsub.f32 %v2700, %v3288
  %v3290 = vand.u32 %v3289, 4294901760
  %3291 = vmatpush1.msra.mxu0 %v3290
  %3292 = vmatprep.subr.mxu0 0.0
  %v3293 = vand.u32 %v2701, 4294901760
  %v3294 = vsub.f32 %v2701, %v3293
  %v3295 = vand.u32 %v3294, 4294901760
  %3296 = vmatpush1.msra.mxu0 %v3295
  %3297 = vmatprep.subr.mxu0 0.0
  %v3298 = vand.u32 %v2702, 4294901760
  %v3299 = vsub.f32 %v2702, %v3298
  %v3300 = vand.u32 %v3299, 4294901760
  %3301 = vmatpush1.msra.mxu0 %v3300
  %3302 = vmatprep.subr.mxu0 0.0
  %v3303 = vand.u32 %v2703, 4294901760
  %v3304 = vsub.f32 %v2703, %v3303
  %v3305 = vand.u32 %v3304, 4294901760
  %3306 = vmatpush1.msra.mxu0 %v3305
  %3307 = vmatprep.subr.mxu0 0.0
  %v3308 = vand.u32 %v2704, 4294901760
  %v3309 = vsub.f32 %v2704, %v3308
  %v3310 = vand.u32 %v3309, 4294901760
  %3311 = vmatpush1.msra.mxu0 %v3310
  %3312 = vmatprep.subr.mxu0 0.0
  %v3313 = vand.u32 %v2705, 4294901760
  %v3314 = vsub.f32 %v2705, %v3313
  %v3315 = vand.u32 %v3314, 4294901760
  %3316 = vmatpush1.msra.mxu0 %v3315
  %3317 = vmatprep.subr.mxu0 0.0
  %v3318 = vand.u32 %v2706, 4294901760
  %v3319 = vsub.f32 %v2706, %v3318
  %v3320 = vand.u32 %v3319, 4294901760
  %3321 = vmatpush1.msra.mxu0 %v3320
  %3322 = vmatprep.subr.mxu0 0.0
  %v3323 = vand.u32 %v2707, 4294901760
  %v3324 = vsub.f32 %v2707, %v3323
  %v3325 = vand.u32 %v3324, 4294901760
  %3326 = vmatpush1.msra.mxu0 %v3325
  %3327 = vmatprep.subr.mxu0 0.0
  %v3328 = vand.u32 %v2708, 4294901760
  %v3329 = vsub.f32 %v2708, %v3328
  %v3330 = vand.u32 %v3329, 4294901760
  %3331 = vmatpush1.msra.mxu0 %v3330
  %3332 = vmatprep.subr.mxu0 0.0
  %v3333 = vand.u32 %v2709, 4294901760
  %v3334 = vsub.f32 %v2709, %v3333
  %v3335 = vand.u32 %v3334, 4294901760
  %3336 = vmatpush1.msra.mxu0 %v3335
  %3337 = vmatprep.subr.mxu0 0.0
  %v3338 = vand.u32 %v2710, 4294901760
  %v3339 = vsub.f32 %v2710, %v3338
  %v3340 = vand.u32 %v3339, 4294901760
  %3341 = vmatpush1.msra.mxu0 %v3340
  %3342 = vmatprep.subr.mxu0 0.0
  %v3343 = vand.u32 %v2711, 4294901760
  %v3344 = vsub.f32 %v2711, %v3343
  %v3345 = vand.u32 %v3344, 4294901760
  %3346 = vmatpush1.msra.mxu0 %v3345
  %3347 = vmatprep.subr.mxu0 0.0
  %v3348 = vand.u32 %v2712, 4294901760
  %v3349 = vsub.f32 %v2712, %v3348
  %v3350 = vand.u32 %v3349, 4294901760
  %3351 = vmatpush1.msra.mxu0 %v3350
  %3352 = vmatprep.subr.mxu0 0.0
  %3353 = vmatpush1.msra.mxu0 0.0
  %3354 = vmatprep.subr.mxu0 0.0
  %3355 = vmatpush1.msra.mxu0 0.0
  %3356 = vmatprep.subr.mxu0 0.0
  %3357 = vmatpush1.msra.mxu0 0.0
  %3358 = vmatprep.subr.mxu0 0.0
  %3359 = vmatpush1.msra.mxu0 0.0
  %3360 = vmatprep.subr.mxu0 0.0
  %3361 = vmatpush1.msra.mxu0 0.0
  %3362 = vmatprep.subr.mxu0 0.0
  %3363 = vmatpush1.msra.mxu0 0.0
  %3364 = vmatprep.subr.mxu0 0.0
  %3365 = vmatpush1.msra.mxu0 0.0
  %3366 = vmatprep.subr.mxu0 0.0
  %3367 = vmatpush1.msra.mxu0 0.0
  %3368 = vmatprep.subr.mxu0 0.0
  %3369 = vmatpush1.msra.mxu0 0.0
  %3370 = vmatprep.subr.mxu0 0.0
  %3371 = vmatpush1.msra.mxu0 0.0
  %3372 = vmatprep.subr.mxu0 0.0
  %3373 = vmatpush1.msra.mxu0 0.0
  %3374 = vmatprep.subr.mxu0 0.0
  %3375 = vmatpush1.msra.mxu0 0.0
  %3376 = vmatprep.subr.mxu0 0.0
  %3377 = vmatpush1.msra.mxu0 0.0
  %3378 = vmatprep.subr.mxu0 0.0
  %3379 = vmatpush1.msra.mxu0 0.0
  %3380 = vmatprep.subr.mxu0 0.0
  %3381 = vmatpush1.msra.mxu0 0.0
  %3382 = vmatprep.subr.mxu0 0.0
  %3383 = vmatpush1.msra.mxu0 0.0
  %3384 = vmatprep.mubr.f32.mxu0 0.0
  %v3385 = vand.u32 %v2655, 4294901760
  %3386 = vmatmul.mubr.f32.gmra.mrb[0].mxu0 %v3385
  %v3387 = vpop.f32.mrb[0].mxu0
  %v3388 = vadd.f32 %v3237, %v3387
  %v3389 = vpop.f32.mrb[0].mxu0
  %3390 = vmatprep.mubr.f32.mxu0 0.0
  %v3391 = vand.u32 %v2656, 4294901760
  %3392 = vmatmul.mubr.f32.gmra.mrb[0].mxu0 %v3391
  %v3393 = vpop.f32.mrb[0].mxu0
  %v3394 = vadd.f32 %v3245, %v3393
  %v3395 = vpop.f32.mrb[0].mxu0
  %3396 = vmatprep.mubr.f32.mxu0 0.0
  %v3397 = vand.u32 %v2657, 4294901760
  %3398 = vmatmul.mubr.f32.gmra.mrb[0].mxu0 %v3397
  %v3399 = vpop.f32.mrb[0].mxu0
  %v3400 = vadd.f32 %v3253, %v3399
  %v3401 = vpop.f32.mrb[0].mxu0
  %3402 = vmatprep.mubr.f32.mxu0 0.0
  %v3403 = vand.u32 %v2658, 4294901760
  %3404 = vmatmul.mubr.f32.gmra.mrb[0].mxu0 %v3403
  %v3405 = vpop.f32.mrb[0].mxu0
  %v3406 = vadd.f32 %v3261, %v3405
  %v3407 = vpop.f32.mrb[0].mxu0
  %3408 = vmatprep.mubr.f32.mxu0 0.0
  %v3409 = vand.u32 %v2659, 4294901760
  %3410 = vmatmul.mubr.f32.gmra.mrb[0].mxu0 %v3409
  %v3411 = vpop.f32.mrb[0].mxu0
  %v3412 = vadd.f32 %v3269, %v3411
  %v3413 = vpop.f32.mrb[0].mxu0
  %3414 = vdwg.mxu0
  %3415 = vmatprep.subr.mxu0 0.0
  %v3416 = vand.u32 %v2697, 4294901760
  %3417 = vmatpush1.msra.mxu0 %v3416
  %3418 = vmatprep.subr.mxu0 0.0
  %v3419 = vand.u32 %v2698, 4294901760
  %3420 = vmatpush1.msra.mxu0 %v3419
  %3421 = vmatprep.subr.mxu0 0.0
  %v3422 = vand.u32 %v2699, 4294901760
  %3423 = vmatpush1.msra.mxu0 %v3422
  %3424 = vmatprep.subr.mxu0 0.0
  %v3425 = vand.u32 %v2700, 4294901760
  %3426 = vmatpush1.msra.mxu0 %v3425
  %3427 = vmatprep.subr.mxu0 0.0
  %v3428 = vand.u32 %v2701, 4294901760
  %3429 = vmatpush1.msra.mxu0 %v3428
  %3430 = vmatprep.subr.mxu0 0.0
  %v3431 = vand.u32 %v2702, 4294901760
  %3432 = vmatpush1.msra.mxu0 %v3431
  %3433 = vmatprep.subr.mxu0 0.0
  %v3434 = vand.u32 %v2703, 4294901760
  %3435 = vmatpush1.msra.mxu0 %v3434
  %3436 = vmatprep.subr.mxu0 0.0
  %v3437 = vand.u32 %v2704, 4294901760
  %3438 = vmatpush1.msra.mxu0 %v3437
  %3439 = vmatprep.subr.mxu0 0.0
  %v3440 = vand.u32 %v2705, 4294901760
  %3441 = vmatpush1.msra.mxu0 %v3440
  %3442 = vmatprep.subr.mxu0 0.0
  %v3443 = vand.u32 %v2706, 4294901760
  %3444 = vmatpush1.msra.mxu0 %v3443
  %3445 = vmatprep.subr.mxu0 0.0
  %v3446 = vand.u32 %v2707, 4294901760
  %3447 = vmatpush1.msra.mxu0 %v3446
  %3448 = vmatprep.subr.mxu0 0.0
  %v3449 = vand.u32 %v2708, 4294901760
  %3450 = vmatpush1.msra.mxu0 %v3449
  %3451 = vmatprep.subr.mxu0 0.0
  %v3452 = vand.u32 %v2709, 4294901760
  %3453 = vmatpush1.msra.mxu0 %v3452
  %3454 = vmatprep.subr.mxu0 0.0
  %v3455 = vand.u32 %v2710, 4294901760
  %3456 = vmatpush1.msra.mxu0 %v3455
  %3457 = vmatprep.subr.mxu0 0.0
  %v3458 = vand.u32 %v2711, 4294901760
  %3459 = vmatpush1.msra.mxu0 %v3458
  %3460 = vmatprep.subr.mxu0 0.0
  %v3461 = vand.u32 %v2712, 4294901760
  %3462 = vmatpush1.msra.mxu0 %v3461
  %3463 = vmatprep.subr.mxu0 0.0
  %3464 = vmatpush1.msra.mxu0 0.0
  %3465 = vmatprep.subr.mxu0 0.0
  %3466 = vmatpush1.msra.mxu0 0.0
  %3467 = vmatprep.subr.mxu0 0.0
  %3468 = vmatpush1.msra.mxu0 0.0
  %3469 = vmatprep.subr.mxu0 0.0
  %3470 = vmatpush1.msra.mxu0 0.0
  %3471 = vmatprep.subr.mxu0 0.0
  %3472 = vmatpush1.msra.mxu0 0.0
  %3473 = vmatprep.subr.mxu0 0.0
  %3474 = vmatpush1.msra.mxu0 0.0
  %3475 = vmatprep.subr.mxu0 0.0
  %3476 = vmatpush1.msra.mxu0 0.0
  %3477 = vmatprep.subr.mxu0 0.0
  %3478 = vmatpush1.msra.mxu0 0.0
  %3479 = vmatprep.subr.mxu0 0.0
  %3480 = vmatpush1.msra.mxu0 0.0
  %3481 = vmatprep.subr.mxu0 0.0
  %3482 = vmatpush1.msra.mxu0 0.0
  %3483 = vmatprep.subr.mxu0 0.0
  %3484 = vmatpush1.msra.mxu0 0.0
  %3485 = vmatprep.subr.mxu0 0.0
  %3486 = vmatpush1.msra.mxu0 0.0
  %3487 = vmatprep.subr.mxu0 0.0
  %3488 = vmatpush1.msra.mxu0 0.0
  %3489 = vmatprep.subr.mxu0 0.0
  %3490 = vmatpush1.msra.mxu0 0.0
  %3491 = vmatprep.subr.mxu0 0.0
  %3492 = vmatpush1.msra.mxu0 0.0
  %3493 = vmatprep.subr.mxu0 0.0
  %3494 = vmatpush1.msra.mxu0 0.0
  %3495 = vmatprep.mubr.f32.mxu0 0.0
  %v3496 = vand.u32 %v2655, 4294901760
  %3497 = vmatmul.mubr.f32.gmra.mrb[0].mxu0 %v3496
  %v3498 = vpop.f32.mrb[0].mxu0
  %v3499 = vadd.f32 %v3388, %v3498
  %v3500 = vpop.f32.mrb[0].mxu0
  %3501 = vmatprep.mubr.f32.mxu0 0.0
  %v3502 = vand.u32 %v2656, 4294901760
  %3503 = vmatmul.mubr.f32.gmra.mrb[0].mxu0 %v3502
  %v3504 = vpop.f32.mrb[0].mxu0
  %v3505 = vadd.f32 %v3394, %v3504
  %v3506 = vpop.f32.mrb[0].mxu0
  %3507 = vmatprep.mubr.f32.mxu0 0.0
  %v3508 = vand.u32 %v2657, 4294901760
  %3509 = vmatmul.mubr.f32.gmra.mrb[0].mxu0 %v3508
  %v3510 = vpop.f32.mrb[0].mxu0
  %v3511 = vadd.f32 %v3400, %v3510
  %v3512 = vpop.f32.mrb[0].mxu0
  %3513 = vmatprep.mubr.f32.mxu0 0.0
  %v3514 = vand.u32 %v2658, 4294901760
  %3515 = vmatmul.mubr.f32.gmra.mrb[0].mxu0 %v3514
  %v3516 = vpop.f32.mrb[0].mxu0
  %v3517 = vadd.f32 %v3406, %v3516
  %v3518 = vpop.f32.mrb[0].mxu0
  %3519 = vmatprep.mubr.f32.mxu0 0.0
  %v3520 = vand.u32 %v2659, 4294901760
  %3521 = vmatmul.mubr.f32.gmra.mrb[0].mxu0 %v3520
  %v3522 = vpop.f32.mrb[0].mxu0
  %v3523 = vadd.f32 %v3412, %v3522
  %v3524 = vpop.f32.mrb[0].mxu0
  %3525 = vdwg.mxu0
  %3526 = vmatprep.subr.mxu0 0.0
  %v3527 = vand.u32 %v2680, 4294901760
  %3528 = vmatpush1.msra.mxu0 %v3527
  %3529 = vmatprep.subr.mxu0 0.0
  %v3530 = vand.u32 %v2681, 4294901760
  %3531 = vmatpush1.msra.mxu0 %v3530
  %3532 = vmatprep.subr.mxu0 0.0
  %v3533 = vand.u32 %v2682, 4294901760
  %3534 = vmatpush1.msra.mxu0 %v3533
  %3535 = vmatprep.subr.mxu0 0.0
  %v3536 = vand.u32 %v2683, 4294901760
  %3537 = vmatpush1.msra.mxu0 %v3536
  %3538 = vmatprep.subr.mxu0 0.0
  %v3539 = vand.u32 %v2684, 4294901760
  %3540 = vmatpush1.msra.mxu0 %v3539
  %3541 = vmatprep.subr.mxu0 0.0
  %v3542 = vand.u32 %v2685, 4294901760
  %3543 = vmatpush1.msra.mxu0 %v3542
  %3544 = vmatprep.subr.mxu0 0.0
  %v3545 = vand.u32 %v2686, 4294901760
  %3546 = vmatpush1.msra.mxu0 %v3545
  %3547 = vmatprep.subr.mxu0 0.0
  %v3548 = vand.u32 %v2687, 4294901760
  %3549 = vmatpush1.msra.mxu0 %v3548
  %3550 = vmatprep.subr.mxu0 0.0
  %v3551 = vand.u32 %v2688, 4294901760
  %3552 = vmatpush1.msra.mxu0 %v3551
  %3553 = vmatprep.subr.mxu0 0.0
  %v3554 = vand.u32 %v2689, 4294901760
  %3555 = vmatpush1.msra.mxu0 %v3554
  %3556 = vmatprep.subr.mxu0 0.0
  %v3557 = vand.u32 %v2690, 4294901760
  %3558 = vmatpush1.msra.mxu0 %v3557
  %3559 = vmatprep.subr.mxu0 0.0
  %v3560 = vand.u32 %v2691, 4294901760
  %3561 = vmatpush1.msra.mxu0 %v3560
  %3562 = vmatprep.subr.mxu0 0.0
  %v3563 = vand.u32 %v2692, 4294901760
  %3564 = vmatpush1.msra.mxu0 %v3563
  %3565 = vmatprep.subr.mxu0 0.0
  %v3566 = vand.u32 %v2693, 4294901760
  %3567 = vmatpush1.msra.mxu0 %v3566
  %3568 = vmatprep.subr.mxu0 0.0
  %v3569 = vand.u32 %v2694, 4294901760
  %3570 = vmatpush1.msra.mxu0 %v3569
  %3571 = vmatprep.subr.mxu0 0.0
  %v3572 = vand.u32 %v2695, 4294901760
  %3573 = vmatpush1.msra.mxu0 %v3572
  %3574 = vmatprep.subr.mxu0 0.0
  %3575 = vmatpush1.msra.mxu0 0.0
  %3576 = vmatprep.subr.mxu0 0.0
  %3577 = vmatpush1.msra.mxu0 0.0
  %3578 = vmatprep.subr.mxu0 0.0
  %3579 = vmatpush1.msra.mxu0 0.0
  %3580 = vmatprep.subr.mxu0 0.0
  %3581 = vmatpush1.msra.mxu0 0.0
  %3582 = vmatprep.subr.mxu0 0.0
  %3583 = vmatpush1.msra.mxu0 0.0
  %3584 = vmatprep.subr.mxu0 0.0
  %3585 = vmatpush1.msra.mxu0 0.0
  %3586 = vmatprep.subr.mxu0 0.0
  %3587 = vmatpush1.msra.mxu0 0.0
  %3588 = vmatprep.subr.mxu0 0.0
  %3589 = vmatpush1.msra.mxu0 0.0
  %3590 = vmatprep.subr.mxu0 0.0
  %3591 = vmatpush1.msra.mxu0 0.0
  %3592 = vmatprep.subr.mxu0 0.0
  %3593 = vmatpush1.msra.mxu0 0.0
  %3594 = vmatprep.subr.mxu0 0.0
  %3595 = vmatpush1.msra.mxu0 0.0
  %3596 = vmatprep.subr.mxu0 0.0
  %3597 = vmatpush1.msra.mxu0 0.0
  %3598 = vmatprep.subr.mxu0 0.0
  %3599 = vmatpush1.msra.mxu0 0.0
  %3600 = vmatprep.subr.mxu0 0.0
  %3601 = vmatpush1.msra.mxu0 0.0
  %3602 = vmatprep.subr.mxu0 0.0
  %3603 = vmatpush1.msra.mxu0 0.0
  %3604 = vmatprep.subr.mxu0 0.0
  %3605 = vmatpush1.msra.mxu0 0.0
  %3606 = vmatprep.mubr.f32.mxu0 0.0
  %v3607 = vand.u32 %v2669, 4294901760
  %v3608 = vsub.f32 %v2669, %v3607
  %v3609 = vand.u32 %v3608, 4294901760
  %v3610 = vsub.f32 %v3608, %v3609
  %v3611 = vand.u32 %v3610, 4294901760
  %3612 = vmatmul.mubr.f32.gmra.mrb[0].mxu0 %v3611
  %v3613 = vpop.f32.mrb[0].mxu0
  %v3614 = vadd.f32 %v3499, %v3613
  %v3615 = vpop.f32.mrb[0].mxu0
  %3616 = vmatprep.mubr.f32.mxu0 0.0
  %v3617 = vand.u32 %v2668, 4294901760
  %v3618 = vsub.f32 %v2668, %v3617
  %v3619 = vand.u32 %v3618, 4294901760
  %v3620 = vsub.f32 %v3618, %v3619
  %v3621 = vand.u32 %v3620, 4294901760
  %3622 = vmatmul.mubr.f32.gmra.mrb[0].mxu0 %v3621
  %v3623 = vpop.f32.mrb[0].mxu0
  %v3624 = vadd.f32 %v3505, %v3623
  %v3625 = vpop.f32.mrb[0].mxu0
  %3626 = vmatprep.mubr.f32.mxu0 0.0
  %v3627 = vand.u32 %v2667, 4294901760
  %v3628 = vsub.f32 %v2667, %v3627
  %v3629 = vand.u32 %v3628, 4294901760
  %v3630 = vsub.f32 %v3628, %v3629
  %v3631 = vand.u32 %v3630, 4294901760
  %3632 = vmatmul.mubr.f32.gmra.mrb[0].mxu0 %v3631
  %v3633 = vpop.f32.mrb[0].mxu0
  %v3634 = vadd.f32 %v3511, %v3633
  %v3635 = vpop.f32.mrb[0].mxu0
  %3636 = vmatprep.mubr.f32.mxu0 0.0
  %v3637 = vand.u32 %v2666, 4294901760
  %v3638 = vsub.f32 %v2666, %v3637
  %v3639 = vand.u32 %v3638, 4294901760
  %v3640 = vsub.f32 %v3638, %v3639
  %v3641 = vand.u32 %v3640, 4294901760
  %3642 = vmatmul.mubr.f32.gmra.mrb[0].mxu0 %v3641
  %v3643 = vpop.f32.mrb[0].mxu0
  %v3644 = vadd.f32 %v3517, %v3643
  %v3645 = vpop.f32.mrb[0].mxu0
  %3646 = vmatprep.mubr.f32.mxu0 0.0
  %v3647 = vand.u32 %v2665, 4294901760
  %v3648 = vsub.f32 %v2665, %v3647
  %v3649 = vand.u32 %v3648, 4294901760
  %v3650 = vsub.f32 %v3648, %v3649
  %v3651 = vand.u32 %v3650, 4294901760
  %3652 = vmatmul.mubr.f32.gmra.mrb[0].mxu0 %v3651
  %v3653 = vpop.f32.mrb[0].mxu0
  %v3654 = vadd.f32 %v3523, %v3653
  %v3655 = vpop.f32.mrb[0].mxu0
  %3656 = vdwg.mxu0
  %3657 = vmatprep.subr.mxu0 0.0
  %v3658 = vand.u32 %v2680, 4294901760
  %v3659 = vsub.f32 %v2680, %v3658
  %v3660 = vand.u32 %v3659, 4294901760
  %v3661 = vsub.f32 %v3659, %v3660
  %v3662 = vand.u32 %v3661, 4294901760
  %3663 = vmatpush1.msra.mxu0 %v3662
  %3664 = vmatprep.subr.mxu0 0.0
  %v3665 = vand.u32 %v2681, 4294901760
  %v3666 = vsub.f32 %v2681, %v3665
  %v3667 = vand.u32 %v3666, 4294901760
  %v3668 = vsub.f32 %v3666, %v3667
  %v3669 = vand.u32 %v3668, 4294901760
  %3670 = vmatpush1.msra.mxu0 %v3669
  %3671 = vmatprep.subr.mxu0 0.0
  %v3672 = vand.u32 %v2682, 4294901760
  %v3673 = vsub.f32 %v2682, %v3672
  %v3674 = vand.u32 %v3673, 4294901760
  %v3675 = vsub.f32 %v3673, %v3674
  %v3676 = vand.u32 %v3675, 4294901760
  %3677 = vmatpush1.msra.mxu0 %v3676
  %3678 = vmatprep.subr.mxu0 0.0
  %v3679 = vand.u32 %v2683, 4294901760
  %v3680 = vsub.f32 %v2683, %v3679
  %v3681 = vand.u32 %v3680, 4294901760
  %v3682 = vsub.f32 %v3680, %v3681
  %v3683 = vand.u32 %v3682, 4294901760
  %3684 = vmatpush1.msra.mxu0 %v3683
  %3685 = vmatprep.subr.mxu0 0.0
  %v3686 = vand.u32 %v2684, 4294901760
  %v3687 = vsub.f32 %v2684, %v3686
  %v3688 = vand.u32 %v3687, 4294901760
  %v3689 = vsub.f32 %v3687, %v3688
  %v3690 = vand.u32 %v3689, 4294901760
  %3691 = vmatpush1.msra.mxu0 %v3690
  %3692 = vmatprep.subr.mxu0 0.0
  %v3693 = vand.u32 %v2685, 4294901760
  %v3694 = vsub.f32 %v2685, %v3693
  %v3695 = vand.u32 %v3694, 4294901760
  %v3696 = vsub.f32 %v3694, %v3695
  %v3697 = vand.u32 %v3696, 4294901760
  %3698 = vmatpush1.msra.mxu0 %v3697
  %3699 = vmatprep.subr.mxu0 0.0
  %v3700 = vand.u32 %v2686, 4294901760
  %v3701 = vsub.f32 %v2686, %v3700
  %v3702 = vand.u32 %v3701, 4294901760
  %v3703 = vsub.f32 %v3701, %v3702
  %v3704 = vand.u32 %v3703, 4294901760
  %3705 = vmatpush1.msra.mxu0 %v3704
  %3706 = vmatprep.subr.mxu0 0.0
  %v3707 = vand.u32 %v2687, 4294901760
  %v3708 = vsub.f32 %v2687, %v3707
  %v3709 = vand.u32 %v3708, 4294901760
  %v3710 = vsub.f32 %v3708, %v3709
  %v3711 = vand.u32 %v3710, 4294901760
  %3712 = vmatpush1.msra.mxu0 %v3711
  %3713 = vmatprep.subr.mxu0 0.0
  %v3714 = vand.u32 %v2688, 4294901760
  %v3715 = vsub.f32 %v2688, %v3714
  %v3716 = vand.u32 %v3715, 4294901760
  %v3717 = vsub.f32 %v3715, %v3716
  %v3718 = vand.u32 %v3717, 4294901760
  %3719 = vmatpush1.msra.mxu0 %v3718
  %3720 = vmatprep.subr.mxu0 0.0
  %v3721 = vand.u32 %v2689, 4294901760
  %v3722 = vsub.f32 %v2689, %v3721
  %v3723 = vand.u32 %v3722, 4294901760
  %v3724 = vsub.f32 %v3722, %v3723
  %v3725 = vand.u32 %v3724, 4294901760
  %3726 = vmatpush1.msra.mxu0 %v3725
  %3727 = vmatprep.subr.mxu0 0.0
  %v3728 = vand.u32 %v2690, 4294901760
  %v3729 = vsub.f32 %v2690, %v3728
  %v3730 = vand.u32 %v3729, 4294901760
  %v3731 = vsub.f32 %v3729, %v3730
  %v3732 = vand.u32 %v3731, 4294901760
  %3733 = vmatpush1.msra.mxu0 %v3732
  %3734 = vmatprep.subr.mxu0 0.0
  %v3735 = vand.u32 %v2691, 4294901760
  %v3736 = vsub.f32 %v2691, %v3735
  %v3737 = vand.u32 %v3736, 4294901760
  %v3738 = vsub.f32 %v3736, %v3737
  %v3739 = vand.u32 %v3738, 4294901760
  %3740 = vmatpush1.msra.mxu0 %v3739
  %3741 = vmatprep.subr.mxu0 0.0
  %v3742 = vand.u32 %v2692, 4294901760
  %v3743 = vsub.f32 %v2692, %v3742
  %v3744 = vand.u32 %v3743, 4294901760
  %v3745 = vsub.f32 %v3743, %v3744
  %v3746 = vand.u32 %v3745, 4294901760
  %3747 = vmatpush1.msra.mxu0 %v3746
  %3748 = vmatprep.subr.mxu0 0.0
  %v3749 = vand.u32 %v2693, 4294901760
  %v3750 = vsub.f32 %v2693, %v3749
  %v3751 = vand.u32 %v3750, 4294901760
  %v3752 = vsub.f32 %v3750, %v3751
  %v3753 = vand.u32 %v3752, 4294901760
  %3754 = vmatpush1.msra.mxu0 %v3753
  %3755 = vmatprep.subr.mxu0 0.0
  %v3756 = vand.u32 %v2694, 4294901760
  %v3757 = vsub.f32 %v2694, %v3756
  %v3758 = vand.u32 %v3757, 4294901760
  %v3759 = vsub.f32 %v3757, %v3758
  %v3760 = vand.u32 %v3759, 4294901760
  %3761 = vmatpush1.msra.mxu0 %v3760
  %3762 = vmatprep.subr.mxu0 0.0
  %v3763 = vand.u32 %v2695, 4294901760
  %v3764 = vsub.f32 %v2695, %v3763
  %v3765 = vand.u32 %v3764, 4294901760
  %v3766 = vsub.f32 %v3764, %v3765
  %v3767 = vand.u32 %v3766, 4294901760
  %3768 = vmatpush1.msra.mxu0 %v3767
  %3769 = vmatprep.subr.mxu0 0.0
  %3770 = vmatpush1.msra.mxu0 0.0
  %3771 = vmatprep.subr.mxu0 0.0
  %3772 = vmatpush1.msra.mxu0 0.0
  %3773 = vmatprep.subr.mxu0 0.0
  %3774 = vmatpush1.msra.mxu0 0.0
  %3775 = vmatprep.subr.mxu0 0.0
  %3776 = vmatpush1.msra.mxu0 0.0
  %3777 = vmatprep.subr.mxu0 0.0
  %3778 = vmatpush1.msra.mxu0 0.0
  %3779 = vmatprep.subr.mxu0 0.0
  %3780 = vmatpush1.msra.mxu0 0.0
  %3781 = vmatprep.subr.mxu0 0.0
  %3782 = vmatpush1.msra.mxu0 0.0
  %3783 = vmatprep.subr.mxu0 0.0
  %3784 = vmatpush1.msra.mxu0 0.0
  %3785 = vmatprep.subr.mxu0 0.0
  %3786 = vmatpush1.msra.mxu0 0.0
  %3787 = vmatprep.subr.mxu0 0.0
  %3788 = vmatpush1.msra.mxu0 0.0
  %3789 = vmatprep.subr.mxu0 0.0
  %3790 = vmatpush1.msra.mxu0 0.0
  %3791 = vmatprep.subr.mxu0 0.0
  %3792 = vmatpush1.msra.mxu0 0.0
  %3793 = vmatprep.subr.mxu0 0.0
  %3794 = vmatpush1.msra.mxu0 0.0
  %3795 = vmatprep.subr.mxu0 0.0
  %3796 = vmatpush1.msra.mxu0 0.0
  %3797 = vmatprep.subr.mxu0 0.0
  %3798 = vmatpush1.msra.mxu0 0.0
  %3799 = vmatprep.subr.mxu0 0.0
  %3800 = vmatpush1.msra.mxu0 0.0
  %3801 = vmatprep.mubr.f32.mxu0 0.0
  %v3802 = vand.u32 %v2669, 4294901760
  %3803 = vmatmul.mubr.f32.gmra.mrb[0].mxu0 %v3802
  %v3804 = vpop.f32.mrb[0].mxu0
  %v3805 = vadd.f32 %v3614, %v3804
  %v3806 = vpop.f32.mrb[0].mxu0
  %3807 = vmatprep.mubr.f32.mxu0 0.0
  %v3808 = vand.u32 %v2668, 4294901760
  %3809 = vmatmul.mubr.f32.gmra.mrb[0].mxu0 %v3808
  %v3810 = vpop.f32.mrb[0].mxu0
  %v3811 = vadd.f32 %v3624, %v3810
  %v3812 = vpop.f32.mrb[0].mxu0
  %3813 = vmatprep.mubr.f32.mxu0 0.0
  %v3814 = vand.u32 %v2667, 4294901760
  %3815 = vmatmul.mubr.f32.gmra.mrb[0].mxu0 %v3814
  %v3816 = vpop.f32.mrb[0].mxu0
  %v3817 = vadd.f32 %v3634, %v3816
  %v3818 = vpop.f32.mrb[0].mxu0
  %3819 = vmatprep.mubr.f32.mxu0 0.0
  %v3820 = vand.u32 %v2666, 4294901760
  %3821 = vmatmul.mubr.f32.gmra.mrb[0].mxu0 %v3820
  %v3822 = vpop.f32.mrb[0].mxu0
  %v3823 = vadd.f32 %v3644, %v3822
  %v3824 = vpop.f32.mrb[0].mxu0
  %3825 = vmatprep.mubr.f32.mxu0 0.0
  %v3826 = vand.u32 %v2665, 4294901760
  %3827 = vmatmul.mubr.f32.gmra.mrb[0].mxu0 %v3826
  %v3828 = vpop.f32.mrb[0].mxu0
  %v3829 = vadd.f32 %v3654, %v3828
  %v3830 = vpop.f32.mrb[0].mxu0
  %3831 = vdwg.mxu0
  %3832 = vmatprep.subr.mxu0 0.0
  %v3833 = vand.u32 %v2680, 4294901760
  %v3834 = vsub.f32 %v2680, %v3833
  %3835 = vmatpush1.msra.mxu0 %v3834
  %3836 = vmatprep.subr.mxu0 0.0
  %v3837 = vand.u32 %v2681, 4294901760
  %v3838 = vsub.f32 %v2681, %v3837
  %3839 = vmatpush1.msra.mxu0 %v3838
  %3840 = vmatprep.subr.mxu0 0.0
  %v3841 = vand.u32 %v2682, 4294901760
  %v3842 = vsub.f32 %v2682, %v3841
  %3843 = vmatpush1.msra.mxu0 %v3842
  %3844 = vmatprep.subr.mxu0 0.0
  %v3845 = vand.u32 %v2683, 4294901760
  %v3846 = vsub.f32 %v2683, %v3845
  %3847 = vmatpush1.msra.mxu0 %v3846
  %3848 = vmatprep.subr.mxu0 0.0
  %v3849 = vand.u32 %v2684, 4294901760
  %v3850 = vsub.f32 %v2684, %v3849
  %3851 = vmatpush1.msra.mxu0 %v3850
  %3852 = vmatprep.subr.mxu0 0.0
  %v3853 = vand.u32 %v2685, 4294901760
  %v3854 = vsub.f32 %v2685, %v3853
  %3855 = vmatpush1.msra.mxu0 %v3854
  %3856 = vmatprep.subr.mxu0 0.0
  %v3857 = vand.u32 %v2686, 4294901760
  %v3858 = vsub.f32 %v2686, %v3857
  %3859 = vmatpush1.msra.mxu0 %v3858
  %3860 = vmatprep.subr.mxu0 0.0
  %v3861 = vand.u32 %v2687, 4294901760
  %v3862 = vsub.f32 %v2687, %v3861
  %3863 = vmatpush1.msra.mxu0 %v3862
  %3864 = vmatprep.subr.mxu0 0.0
  %v3865 = vand.u32 %v2688, 4294901760
  %v3866 = vsub.f32 %v2688, %v3865
  %3867 = vmatpush1.msra.mxu0 %v3866
  %3868 = vmatprep.subr.mxu0 0.0
  %v3869 = vand.u32 %v2689, 4294901760
  %v3870 = vsub.f32 %v2689, %v3869
  %3871 = vmatpush1.msra.mxu0 %v3870
  %3872 = vmatprep.subr.mxu0 0.0
  %v3873 = vand.u32 %v2690, 4294901760
  %v3874 = vsub.f32 %v2690, %v3873
  %3875 = vmatpush1.msra.mxu0 %v3874
  %3876 = vmatprep.subr.mxu0 0.0
  %v3877 = vand.u32 %v2691, 4294901760
  %v3878 = vsub.f32 %v2691, %v3877
  %3879 = vmatpush1.msra.mxu0 %v3878
  %3880 = vmatprep.subr.mxu0 0.0
  %v3881 = vand.u32 %v2692, 4294901760
  %v3882 = vsub.f32 %v2692, %v3881
  %3883 = vmatpush1.msra.mxu0 %v3882
  %3884 = vmatprep.subr.mxu0 0.0
  %v3885 = vand.u32 %v2693, 4294901760
  %v3886 = vsub.f32 %v2693, %v3885
  %3887 = vmatpush1.msra.mxu0 %v3886
  %3888 = vmatprep.subr.mxu0 0.0
  %v3889 = vand.u32 %v2694, 4294901760
  %v3890 = vsub.f32 %v2694, %v3889
  %3891 = vmatpush1.msra.mxu0 %v3890
  %3892 = vmatprep.subr.mxu0 0.0
  %v3893 = vand.u32 %v2695, 4294901760
  %v3894 = vsub.f32 %v2695, %v3893
  %3895 = vmatpush1.msra.mxu0 %v3894
  %3896 = vmatprep.subr.mxu0 0.0
  %3897 = vmatpush1.msra.mxu0 0.0
  %3898 = vmatprep.subr.mxu0 0.0
  %3899 = vmatpush1.msra.mxu0 0.0
  %3900 = vmatprep.subr.mxu0 0.0
  %3901 = vmatpush1.msra.mxu0 0.0
  %3902 = vmatprep.subr.mxu0 0.0
  %3903 = vmatpush1.msra.mxu0 0.0
  %3904 = vmatprep.subr.mxu0 0.0
  %3905 = vmatpush1.msra.mxu0 0.0
  %3906 = vmatprep.subr.mxu0 0.0
  %3907 = vmatpush1.msra.mxu0 0.0
  %3908 = vmatprep.subr.mxu0 0.0
  %3909 = vmatpush1.msra.mxu0 0.0
  %3910 = vmatprep.subr.mxu0 0.0
  %3911 = vmatpush1.msra.mxu0 0.0
  %3912 = vmatprep.subr.mxu0 0.0
  %3913 = vmatpush1.msra.mxu0 0.0
  %3914 = vmatprep.subr.mxu0 0.0
  %3915 = vmatpush1.msra.mxu0 0.0
  %3916 = vmatprep.subr.mxu0 0.0
  %3917 = vmatpush1.msra.mxu0 0.0
  %3918 = vmatprep.subr.mxu0 0.0
  %3919 = vmatpush1.msra.mxu0 0.0
  %3920 = vmatprep.subr.mxu0 0.0
  %3921 = vmatpush1.msra.mxu0 0.0
  %3922 = vmatprep.subr.mxu0 0.0
  %3923 = vmatpush1.msra.mxu0 0.0
  %3924 = vmatprep.subr.mxu0 0.0
  %3925 = vmatpush1.msra.mxu0 0.0
  %3926 = vmatprep.subr.mxu0 0.0
  %3927 = vmatpush1.msra.mxu0 0.0
  %3928 = vmatprep.mubr.f32.mxu0 0.0
  %v3929 = vand.u32 %v2669, 4294901760
  %v3930 = vsub.f32 %v2669, %v3929
  %3931 = vmatmul.mubr.f32.gmra.mrb[0].mxu0 %v3930
  %v3932 = vpop.f32.mrb[0].mxu0
  %v3933 = vadd.f32 %v3805, %v3932
  %v3934 = vpop.f32.mrb[0].mxu0
  %3935 = vmatprep.mubr.f32.mxu0 0.0
  %v3936 = vand.u32 %v2668, 4294901760
  %v3937 = vsub.f32 %v2668, %v3936
  %3938 = vmatmul.mubr.f32.gmra.mrb[0].mxu0 %v3937
  %v3939 = vpop.f32.mrb[0].mxu0
  %v3940 = vadd.f32 %v3811, %v3939
  %v3941 = vpop.f32.mrb[0].mxu0
  %3942 = vmatprep.mubr.f32.mxu0 0.0
  %v3943 = vand.u32 %v2667, 4294901760
  %v3944 = vsub.f32 %v2667, %v3943
  %3945 = vmatmul.mubr.f32.gmra.mrb[0].mxu0 %v3944
  %v3946 = vpop.f32.mrb[0].mxu0
  %v3947 = vadd.f32 %v3817, %v3946
  %v3948 = vpop.f32.mrb[0].mxu0
  %3949 = vmatprep.mubr.f32.mxu0 0.0
  %v3950 = vand.u32 %v2666, 4294901760
  %v3951 = vsub.f32 %v2666, %v3950
  %3952 = vmatmul.mubr.f32.gmra.mrb[0].mxu0 %v3951
  %v3953 = vpop.f32.mrb[0].mxu0
  %v3954 = vadd.f32 %v3823, %v3953
  %v3955 = vpop.f32.mrb[0].mxu0
  %3956 = vmatprep.mubr.f32.mxu0 0.0
  %v3957 = vand.u32 %v2665, 4294901760
  %v3958 = vsub.f32 %v2665, %v3957
  %3959 = vmatmul.mubr.f32.gmra.mrb[0].mxu0 %v3958
  %v3960 = vpop.f32.mrb[0].mxu0
  %v3961 = vadd.f32 %v3829, %v3960
  %v3962 = vpop.f32.mrb[0].mxu0
  %3963 = vdwg.mxu0
  %3964 = vmatprep.subr.mxu0 0.0
  %v3965 = vand.u32 %v2680, 4294901760
  %3966 = vmatpush1.msra.mxu0 %v3965
  %3967 = vmatprep.subr.mxu0 0.0
  %v3968 = vand.u32 %v2681, 4294901760
  %3969 = vmatpush1.msra.mxu0 %v3968
  %3970 = vmatprep.subr.mxu0 0.0
  %v3971 = vand.u32 %v2682, 4294901760
  %3972 = vmatpush1.msra.mxu0 %v3971
  %3973 = vmatprep.subr.mxu0 0.0
  %v3974 = vand.u32 %v2683, 4294901760
  %3975 = vmatpush1.msra.mxu0 %v3974
  %3976 = vmatprep.subr.mxu0 0.0
  %v3977 = vand.u32 %v2684, 4294901760
  %3978 = vmatpush1.msra.mxu0 %v3977
  %3979 = vmatprep.subr.mxu0 0.0
  %v3980 = vand.u32 %v2685, 4294901760
  %3981 = vmatpush1.msra.mxu0 %v3980
  %3982 = vmatprep.subr.mxu0 0.0
  %v3983 = vand.u32 %v2686, 4294901760
  %3984 = vmatpush1.msra.mxu0 %v3983
  %3985 = vmatprep.subr.mxu0 0.0
  %v3986 = vand.u32 %v2687, 4294901760
  %3987 = vmatpush1.msra.mxu0 %v3986
  %3988 = vmatprep.subr.mxu0 0.0
  %v3989 = vand.u32 %v2688, 4294901760
  %3990 = vmatpush1.msra.mxu0 %v3989
  %3991 = vmatprep.subr.mxu0 0.0
  %v3992 = vand.u32 %v2689, 4294901760
  %3993 = vmatpush1.msra.mxu0 %v3992
  %3994 = vmatprep.subr.mxu0 0.0
  %v3995 = vand.u32 %v2690, 4294901760
  %3996 = vmatpush1.msra.mxu0 %v3995
  %3997 = vmatprep.subr.mxu0 0.0
  %v3998 = vand.u32 %v2691, 4294901760
  %3999 = vmatpush1.msra.mxu0 %v3998
  %4000 = vmatprep.subr.mxu0 0.0
  %v4001 = vand.u32 %v2692, 4294901760
  %4002 = vmatpush1.msra.mxu0 %v4001
  %4003 = vmatprep.subr.mxu0 0.0
  %v4004 = vand.u32 %v2693, 4294901760
  %4005 = vmatpush1.msra.mxu0 %v4004
  %4006 = vmatprep.subr.mxu0 0.0
  %v4007 = vand.u32 %v2694, 4294901760
  %4008 = vmatpush1.msra.mxu0 %v4007
  %4009 = vmatprep.subr.mxu0 0.0
  %v4010 = vand.u32 %v2695, 4294901760
  %4011 = vmatpush1.msra.mxu0 %v4010
  %4012 = vmatprep.subr.mxu0 0.0
  %4013 = vmatpush1.msra.mxu0 0.0
  %4014 = vmatprep.subr.mxu0 0.0
  %4015 = vmatpush1.msra.mxu0 0.0
  %4016 = vmatprep.subr.mxu0 0.0
  %4017 = vmatpush1.msra.mxu0 0.0
  %4018 = vmatprep.subr.mxu0 0.0
  %4019 = vmatpush1.msra.mxu0 0.0
  %4020 = vmatprep.subr.mxu0 0.0
  %4021 = vmatpush1.msra.mxu0 0.0
  %4022 = vmatprep.subr.mxu0 0.0
  %4023 = vmatpush1.msra.mxu0 0.0
  %4024 = vmatprep.subr.mxu0 0.0
  %4025 = vmatpush1.msra.mxu0 0.0
  %4026 = vmatprep.subr.mxu0 0.0
  %4027 = vmatpush1.msra.mxu0 0.0
  %4028 = vmatprep.subr.mxu0 0.0
  %4029 = vmatpush1.msra.mxu0 0.0
  %4030 = vmatprep.subr.mxu0 0.0
  %4031 = vmatpush1.msra.mxu0 0.0
  %4032 = vmatprep.subr.mxu0 0.0
  %4033 = vmatpush1.msra.mxu0 0.0
  %4034 = vmatprep.subr.mxu0 0.0
  %4035 = vmatpush1.msra.mxu0 0.0
  %4036 = vmatprep.subr.mxu0 0.0
  %4037 = vmatpush1.msra.mxu0 0.0
  %4038 = vmatprep.subr.mxu0 0.0
  %4039 = vmatpush1.msra.mxu0 0.0
  %4040 = vmatprep.subr.mxu0 0.0
  %4041 = vmatpush1.msra.mxu0 0.0
  %4042 = vmatprep.subr.mxu0 0.0
  %4043 = vmatpush1.msra.mxu0 0.0
  %4044 = vmatprep.mubr.f32.mxu0 0.0
  %v4045 = vand.u32 %v2669, 4294901760
  %v4046 = vsub.f32 %v2669, %v4045
  %v4047 = vand.u32 %v4046, 4294901760
  %4048 = vmatmul.mubr.f32.gmra.mrb[0].mxu0 %v4047
  %v4049 = vpop.f32.mrb[0].mxu0
  %v4050 = vadd.f32 %v3933, %v4049
  %v4051 = vpop.f32.mrb[0].mxu0
  %4052 = vmatprep.mubr.f32.mxu0 0.0
  %v4053 = vand.u32 %v2668, 4294901760
  %v4054 = vsub.f32 %v2668, %v4053
  %v4055 = vand.u32 %v4054, 4294901760
  %4056 = vmatmul.mubr.f32.gmra.mrb[0].mxu0 %v4055
  %v4057 = vpop.f32.mrb[0].mxu0
  %v4058 = vadd.f32 %v3940, %v4057
  %v4059 = vpop.f32.mrb[0].mxu0
  %4060 = vmatprep.mubr.f32.mxu0 0.0
  %v4061 = vand.u32 %v2667, 4294901760
  %v4062 = vsub.f32 %v2667, %v4061
  %v4063 = vand.u32 %v4062, 4294901760
  %4064 = vmatmul.mubr.f32.gmra.mrb[0].mxu0 %v4063
  %v4065 = vpop.f32.mrb[0].mxu0
  %v4066 = vadd.f32 %v3947, %v4065
  %v4067 = vpop.f32.mrb[0].mxu0
  %4068 = vmatprep.mubr.f32.mxu0 0.0
  %v4069 = vand.u32 %v2666, 4294901760
  %v4070 = vsub.f32 %v2666, %v4069
  %v4071 = vand.u32 %v4070, 4294901760
  %4072 = vmatmul.mubr.f32.gmra.mrb[0].mxu0 %v4071
  %v4073 = vpop.f32.mrb[0].mxu0
  %v4074 = vadd.f32 %v3954, %v4073
  %v4075 = vpop.f32.mrb[0].mxu0
  %4076 = vmatprep.mubr.f32.mxu0 0.0
  %v4077 = vand.u32 %v2665, 4294901760
  %v4078 = vsub.f32 %v2665, %v4077
  %v4079 = vand.u32 %v4078, 4294901760
  %4080 = vmatmul.mubr.f32.gmra.mrb[0].mxu0 %v4079
  %v4081 = vpop.f32.mrb[0].mxu0
  %v4082 = vadd.f32 %v3961, %v4081
  %v4083 = vpop.f32.mrb[0].mxu0
  %4084 = vdwg.mxu0
  %4085 = vmatprep.subr.mxu0 0.0
  %v4086 = vand.u32 %v2680, 4294901760
  %v4087 = vsub.f32 %v2680, %v4086
  %v4088 = vand.u32 %v4087, 4294901760
  %4089 = vmatpush1.msra.mxu0 %v4088
  %4090 = vmatprep.subr.mxu0 0.0
  %v4091 = vand.u32 %v2681, 4294901760
  %v4092 = vsub.f32 %v2681, %v4091
  %v4093 = vand.u32 %v4092, 4294901760
  %4094 = vmatpush1.msra.mxu0 %v4093
  %4095 = vmatprep.subr.mxu0 0.0
  %v4096 = vand.u32 %v2682, 4294901760
  %v4097 = vsub.f32 %v2682, %v4096
  %v4098 = vand.u32 %v4097, 4294901760
  %4099 = vmatpush1.msra.mxu0 %v4098
  %4100 = vmatprep.subr.mxu0 0.0
  %v4101 = vand.u32 %v2683, 4294901760
  %v4102 = vsub.f32 %v2683, %v4101
  %v4103 = vand.u32 %v4102, 4294901760
  %4104 = vmatpush1.msra.mxu0 %v4103
  %4105 = vmatprep.subr.mxu0 0.0
  %v4106 = vand.u32 %v2684, 4294901760
  %v4107 = vsub.f32 %v2684, %v4106
  %v4108 = vand.u32 %v4107, 4294901760
  %4109 = vmatpush1.msra.mxu0 %v4108
  %4110 = vmatprep.subr.mxu0 0.0
  %v4111 = vand.u32 %v2685, 4294901760
  %v4112 = vsub.f32 %v2685, %v4111
  %v4113 = vand.u32 %v4112, 4294901760
  %4114 = vmatpush1.msra.mxu0 %v4113
  %4115 = vmatprep.subr.mxu0 0.0
  %v4116 = vand.u32 %v2686, 4294901760
  %v4117 = vsub.f32 %v2686, %v4116
  %v4118 = vand.u32 %v4117, 4294901760
  %4119 = vmatpush1.msra.mxu0 %v4118
  %4120 = vmatprep.subr.mxu0 0.0
  %v4121 = vand.u32 %v2687, 4294901760
  %v4122 = vsub.f32 %v2687, %v4121
  %v4123 = vand.u32 %v4122, 4294901760
  %4124 = vmatpush1.msra.mxu0 %v4123
  %4125 = vmatprep.subr.mxu0 0.0
  %v4126 = vand.u32 %v2688, 4294901760
  %v4127 = vsub.f32 %v2688, %v4126
  %v4128 = vand.u32 %v4127, 4294901760
  %4129 = vmatpush1.msra.mxu0 %v4128
  %4130 = vmatprep.subr.mxu0 0.0
  %v4131 = vand.u32 %v2689, 4294901760
  %v4132 = vsub.f32 %v2689, %v4131
  %v4133 = vand.u32 %v4132, 4294901760
  %4134 = vmatpush1.msra.mxu0 %v4133
  %4135 = vmatprep.subr.mxu0 0.0
  %v4136 = vand.u32 %v2690, 4294901760
  %v4137 = vsub.f32 %v2690, %v4136
  %v4138 = vand.u32 %v4137, 4294901760
  %4139 = vmatpush1.msra.mxu0 %v4138
  %4140 = vmatprep.subr.mxu0 0.0
  %v4141 = vand.u32 %v2691, 4294901760
  %v4142 = vsub.f32 %v2691, %v4141
  %v4143 = vand.u32 %v4142, 4294901760
  %4144 = vmatpush1.msra.mxu0 %v4143
  %4145 = vmatprep.subr.mxu0 0.0
  %v4146 = vand.u32 %v2692, 4294901760
  %v4147 = vsub.f32 %v2692, %v4146
  %v4148 = vand.u32 %v4147, 4294901760
  %4149 = vmatpush1.msra.mxu0 %v4148
  %4150 = vmatprep.subr.mxu0 0.0
  %v4151 = vand.u32 %v2693, 4294901760
  %v4152 = vsub.f32 %v2693, %v4151
  %v4153 = vand.u32 %v4152, 4294901760
  %4154 = vmatpush1.msra.mxu0 %v4153
  %4155 = vmatprep.subr.mxu0 0.0
  %v4156 = vand.u32 %v2694, 4294901760
  %v4157 = vsub.f32 %v2694, %v4156
  %v4158 = vand.u32 %v4157, 4294901760
  %4159 = vmatpush1.msra.mxu0 %v4158
  %4160 = vmatprep.subr.mxu0 0.0
  %v4161 = vand.u32 %v2695, 4294901760
  %v4162 = vsub.f32 %v2695, %v4161
  %v4163 = vand.u32 %v4162, 4294901760
  %4164 = vmatpush1.msra.mxu0 %v4163
  %4165 = vmatprep.subr.mxu0 0.0
  %4166 = vmatpush1.msra.mxu0 0.0
  %4167 = vmatprep.subr.mxu0 0.0
  %4168 = vmatpush1.msra.mxu0 0.0
  %4169 = vmatprep.subr.mxu0 0.0
  %4170 = vmatpush1.msra.mxu0 0.0
  %4171 = vmatprep.subr.mxu0 0.0
  %4172 = vmatpush1.msra.mxu0 0.0
  %4173 = vmatprep.subr.mxu0 0.0
  %4174 = vmatpush1.msra.mxu0 0.0
  %4175 = vmatprep.subr.mxu0 0.0
  %4176 = vmatpush1.msra.mxu0 0.0
  %4177 = vmatprep.subr.mxu0 0.0
  %4178 = vmatpush1.msra.mxu0 0.0
  %4179 = vmatprep.subr.mxu0 0.0
  %4180 = vmatpush1.msra.mxu0 0.0
  %4181 = vmatprep.subr.mxu0 0.0
  %4182 = vmatpush1.msra.mxu0 0.0
  %4183 = vmatprep.subr.mxu0 0.0
  %4184 = vmatpush1.msra.mxu0 0.0
  %4185 = vmatprep.subr.mxu0 0.0
  %4186 = vmatpush1.msra.mxu0 0.0
  %4187 = vmatprep.subr.mxu0 0.0
  %4188 = vmatpush1.msra.mxu0 0.0
  %4189 = vmatprep.subr.mxu0 0.0
  %4190 = vmatpush1.msra.mxu0 0.0
  %4191 = vmatprep.subr.mxu0 0.0
  %4192 = vmatpush1.msra.mxu0 0.0
  %4193 = vmatprep.subr.mxu0 0.0
  %4194 = vmatpush1.msra.mxu0 0.0
  %4195 = vmatprep.subr.mxu0 0.0
  %4196 = vmatpush1.msra.mxu0 0.0
  %4197 = vmatprep.mubr.f32.mxu0 0.0
  %v4198 = vand.u32 %v2669, 4294901760
  %4199 = vmatmul.mubr.f32.gmra.mrb[0].mxu0 %v4198
  %v4200 = vpop.f32.mrb[0].mxu0
  %v4201 = vadd.f32 %v4050, %v4200
  %v4202 = vpop.f32.mrb[0].mxu0
  %4203 = vmatprep.mubr.f32.mxu0 0.0
  %v4204 = vand.u32 %v2668, 4294901760
  %4205 = vmatmul.mubr.f32.gmra.mrb[0].mxu0 %v4204
  %v4206 = vpop.f32.mrb[0].mxu0
  %v4207 = vadd.f32 %v4058, %v4206
  %v4208 = vpop.f32.mrb[0].mxu0
  %4209 = vmatprep.mubr.f32.mxu0 0.0
  %v4210 = vand.u32 %v2667, 4294901760
  %4211 = vmatmul.mubr.f32.gmra.mrb[0].mxu0 %v4210
  %v4212 = vpop.f32.mrb[0].mxu0
  %v4213 = vadd.f32 %v4066, %v4212
  %v4214 = vpop.f32.mrb[0].mxu0
  %4215 = vmatprep.mubr.f32.mxu0 0.0
  %v4216 = vand.u32 %v2666, 4294901760
  %4217 = vmatmul.mubr.f32.gmra.mrb[0].mxu0 %v4216
  %v4218 = vpop.f32.mrb[0].mxu0
  %v4219 = vadd.f32 %v4074, %v4218
  %v4220 = vpop.f32.mrb[0].mxu0
  %4221 = vmatprep.mubr.f32.mxu0 0.0
  %v4222 = vand.u32 %v2665, 4294901760
  %4223 = vmatmul.mubr.f32.gmra.mrb[0].mxu0 %v4222
  %v4224 = vpop.f32.mrb[0].mxu0
  %v4225 = vadd.f32 %v4082, %v4224
  %v4226 = vpop.f32.mrb[0].mxu0
  %4227 = vdwg.mxu0
  %4228 = vmatprep.subr.mxu0 0.0
  %v4229 = vand.u32 %v2680, 4294901760
  %4230 = vmatpush1.msra.mxu0 %v4229
  %4231 = vmatprep.subr.mxu0 0.0
  %v4232 = vand.u32 %v2681, 4294901760
  %4233 = vmatpush1.msra.mxu0 %v4232
  %4234 = vmatprep.subr.mxu0 0.0
  %v4235 = vand.u32 %v2682, 4294901760
  %4236 = vmatpush1.msra.mxu0 %v4235
  %4237 = vmatprep.subr.mxu0 0.0
  %v4238 = vand.u32 %v2683, 4294901760
  %4239 = vmatpush1.msra.mxu0 %v4238
  %4240 = vmatprep.subr.mxu0 0.0
  %v4241 = vand.u32 %v2684, 4294901760
  %4242 = vmatpush1.msra.mxu0 %v4241
  %4243 = vmatprep.subr.mxu0 0.0
  %v4244 = vand.u32 %v2685, 4294901760
  %4245 = vmatpush1.msra.mxu0 %v4244
  %4246 = vmatprep.subr.mxu0 0.0
  %v4247 = vand.u32 %v2686, 4294901760
  %4248 = vmatpush1.msra.mxu0 %v4247
  %4249 = vmatprep.subr.mxu0 0.0
  %v4250 = vand.u32 %v2687, 4294901760
  %4251 = vmatpush1.msra.mxu0 %v4250
  %4252 = vmatprep.subr.mxu0 0.0
  %v4253 = vand.u32 %v2688, 4294901760
  %4254 = vmatpush1.msra.mxu0 %v4253
  %4255 = vmatprep.subr.mxu0 0.0
  %v4256 = vand.u32 %v2689, 4294901760
  %4257 = vmatpush1.msra.mxu0 %v4256
  %4258 = vmatprep.subr.mxu0 0.0
  %v4259 = vand.u32 %v2690, 4294901760
  %4260 = vmatpush1.msra.mxu0 %v4259
  %4261 = vmatprep.subr.mxu0 0.0
  %v4262 = vand.u32 %v2691, 4294901760
  %4263 = vmatpush1.msra.mxu0 %v4262
  %4264 = vmatprep.subr.mxu0 0.0
  %v4265 = vand.u32 %v2692, 4294901760
  %4266 = vmatpush1.msra.mxu0 %v4265
  %4267 = vmatprep.subr.mxu0 0.0
  %v4268 = vand.u32 %v2693, 4294901760
  %4269 = vmatpush1.msra.mxu0 %v4268
  %4270 = vmatprep.subr.mxu0 0.0
  %v4271 = vand.u32 %v2694, 4294901760
  %4272 = vmatpush1.msra.mxu0 %v4271
  %4273 = vmatprep.subr.mxu0 0.0
  %v4274 = vand.u32 %v2695, 4294901760
  %4275 = vmatpush1.msra.mxu0 %v4274
  %4276 = vmatprep.subr.mxu0 0.0
  %4277 = vmatpush1.msra.mxu0 0.0
  %4278 = vmatprep.subr.mxu0 0.0
  %4279 = vmatpush1.msra.mxu0 0.0
  %4280 = vmatprep.subr.mxu0 0.0
  %4281 = vmatpush1.msra.mxu0 0.0
  %4282 = vmatprep.subr.mxu0 0.0
  %4283 = vmatpush1.msra.mxu0 0.0
  %4284 = vmatprep.subr.mxu0 0.0
  %4285 = vmatpush1.msra.mxu0 0.0
  %4286 = vmatprep.subr.mxu0 0.0
  %4287 = vmatpush1.msra.mxu0 0.0
  %4288 = vmatprep.subr.mxu0 0.0
  %4289 = vmatpush1.msra.mxu0 0.0
  %4290 = vmatprep.subr.mxu0 0.0
  %4291 = vmatpush1.msra.mxu0 0.0
  %4292 = vmatprep.subr.mxu0 0.0
  %4293 = vmatpush1.msra.mxu0 0.0
  %4294 = vmatprep.subr.mxu0 0.0
  %4295 = vmatpush1.msra.mxu0 0.0
  %4296 = vmatprep.subr.mxu0 0.0
  %4297 = vmatpush1.msra.mxu0 0.0
  %4298 = vmatprep.subr.mxu0 0.0
  %4299 = vmatpush1.msra.mxu0 0.0
  %4300 = vmatprep.subr.mxu0 0.0
  %4301 = vmatpush1.msra.mxu0 0.0
  %4302 = vmatprep.subr.mxu0 0.0
  %4303 = vmatpush1.msra.mxu0 0.0
  %4304 = vmatprep.subr.mxu0 0.0
  %4305 = vmatpush1.msra.mxu0 0.0
  %4306 = vmatprep.subr.mxu0 0.0
  %4307 = vmatpush1.msra.mxu0 0.0
  %4308 = vmatprep.mubr.f32.mxu0 0.0
  %v4309 = vand.u32 %v2669, 4294901760
  %4310 = vmatmul.mubr.f32.gmra.mrb[0].mxu0 %v4309
  %v4311 = vpop.f32.mrb[0].mxu0
  %v4312 = vadd.f32 %v4201, %v4311
  %v4313 = vpop.f32.mrb[0].mxu0
  %4314 = vmatprep.mubr.f32.mxu0 0.0
  %v4315 = vand.u32 %v2668, 4294901760
  %4316 = vmatmul.mubr.f32.gmra.mrb[0].mxu0 %v4315
  %v4317 = vpop.f32.mrb[0].mxu0
  %v4318 = vadd.f32 %v4207, %v4317
  %v4319 = vpop.f32.mrb[0].mxu0
  %4320 = vmatprep.mubr.f32.mxu0 0.0
  %v4321 = vand.u32 %v2667, 4294901760
  %4322 = vmatmul.mubr.f32.gmra.mrb[0].mxu0 %v4321
  %v4323 = vpop.f32.mrb[0].mxu0
  %v4324 = vadd.f32 %v4213, %v4323
  %v4325 = vpop.f32.mrb[0].mxu0
  %4326 = vmatprep.mubr.f32.mxu0 0.0
  %v4327 = vand.u32 %v2666, 4294901760
  %4328 = vmatmul.mubr.f32.gmra.mrb[0].mxu0 %v4327
  %v4329 = vpop.f32.mrb[0].mxu0
  %v4330 = vadd.f32 %v4219, %v4329
  %v4331 = vpop.f32.mrb[0].mxu0
  %4332 = vmatprep.mubr.f32.mxu0 0.0
  %v4333 = vand.u32 %v2665, 4294901760
  %4334 = vmatmul.mubr.f32.gmra.mrb[0].mxu0 %v4333
  %v4335 = vpop.f32.mrb[0].mxu0
  %v4336 = vadd.f32 %v4225, %v4335
  %v4337 = vpop.f32.mrb[0].mxu0
  %4338 = vdwg.mxu0
  %s4339 = scalar_lea.vmem %s3, 256
  %v4340 = vld [vmem:[%s4339] sm:$0xff]
  %v4341 = vld [vmem:[%s4339 + $0x8] sm:$0xff]
  %v4342 = vld [vmem:[%s4339 + $0x10] sm:$0xff]
  %v4343 = vld [vmem:[%s4339 + $0x18] sm:$0xff]
  %v4344 = vld [vmem:[%s4339 + $0x20] sm:$0xff]
  %v4345 = vld [vmem:[%s4339 + $0x28] sm:$0xff]
  %v4346 = vld [vmem:[%s4339 + $0x30] sm:$0xff]
  %v4347 = vld [vmem:[%s4339 + $0x38] sm:$0xff]
  %v4348 = vld [vmem:[%s4339 + $0x40] sm:$0xff]
  %v4349 = vld [vmem:[%s4339 + $0x48] sm:$0xff]
  %v4350 = vld [vmem:[%s4339 + $0x50] sm:$0xff]
  %v4351 = vld [vmem:[%s4339 + $0x58] sm:$0xff]
  %v4352 = vld [vmem:[%s4339 + $0x60] sm:$0xff]
  %v4353 = vld [vmem:[%s4339 + $0x68] sm:$0xff]
  %v4354 = vld [vmem:[%s4339 + $0x70] sm:$0xff]
  %v4355 = vld [vmem:[%s4339 + $0x78] sm:$0xff]
  %4356 = vmatprep.subr.mxu0 0.0
  %v4357 = vand.u32 %v4340, 4294901760
  %4358 = vmatpush1.msra.mxu0 %v4357
  %4359 = vmatprep.subr.mxu0 0.0
  %v4360 = vand.u32 %v4341, 4294901760
  %4361 = vmatpush1.msra.mxu0 %v4360
  %4362 = vmatprep.subr.mxu0 0.0
  %v4363 = vand.u32 %v4342, 4294901760
  %4364 = vmatpush1.msra.mxu0 %v4363
  %4365 = vmatprep.subr.mxu0 0.0
  %v4366 = vand.u32 %v4343, 4294901760
  %4367 = vmatpush1.msra.mxu0 %v4366
  %4368 = vmatprep.subr.mxu0 0.0
  %v4369 = vand.u32 %v4344, 4294901760
  %4370 = vmatpush1.msra.mxu0 %v4369
  %4371 = vmatprep.subr.mxu0 0.0
  %v4372 = vand.u32 %v4345, 4294901760
  %4373 = vmatpush1.msra.mxu0 %v4372
  %4374 = vmatprep.subr.mxu0 0.0
  %v4375 = vand.u32 %v4346, 4294901760
  %4376 = vmatpush1.msra.mxu0 %v4375
  %4377 = vmatprep.subr.mxu0 0.0
  %v4378 = vand.u32 %v4347, 4294901760
  %4379 = vmatpush1.msra.mxu0 %v4378
  %4380 = vmatprep.subr.mxu0 0.0
  %v4381 = vand.u32 %v4348, 4294901760
  %4382 = vmatpush1.msra.mxu0 %v4381
  %4383 = vmatprep.subr.mxu0 0.0
  %v4384 = vand.u32 %v4349, 4294901760
  %4385 = vmatpush1.msra.mxu0 %v4384
  %4386 = vmatprep.subr.mxu0 0.0
  %v4387 = vand.u32 %v4350, 4294901760
  %4388 = vmatpush1.msra.mxu0 %v4387
  %4389 = vmatprep.subr.mxu0 0.0
  %v4390 = vand.u32 %v4351, 4294901760
  %4391 = vmatpush1.msra.mxu0 %v4390
  %4392 = vmatprep.subr.mxu0 0.0
  %v4393 = vand.u32 %v4352, 4294901760
  %4394 = vmatpush1.msra.mxu0 %v4393
  %4395 = vmatprep.subr.mxu0 0.0
  %v4396 = vand.u32 %v4353, 4294901760
  %4397 = vmatpush1.msra.mxu0 %v4396
  %4398 = vmatprep.subr.mxu0 0.0
  %v4399 = vand.u32 %v4354, 4294901760
  %4400 = vmatpush1.msra.mxu0 %v4399
  %4401 = vmatprep.subr.mxu0 0.0
  %v4402 = vand.u32 %v4355, 4294901760
  %4403 = vmatpush1.msra.mxu0 %v4402
  %4404 = vmatprep.subr.mxu0 0.0
  %4405 = vmatpush1.msra.mxu0 0.0
  %4406 = vmatprep.subr.mxu0 0.0
  %4407 = vmatpush1.msra.mxu0 0.0
  %4408 = vmatprep.subr.mxu0 0.0
  %4409 = vmatpush1.msra.mxu0 0.0
  %4410 = vmatprep.subr.mxu0 0.0
  %4411 = vmatpush1.msra.mxu0 0.0
  %4412 = vmatprep.subr.mxu0 0.0
  %4413 = vmatpush1.msra.mxu0 0.0
  %4414 = vmatprep.subr.mxu0 0.0
  %4415 = vmatpush1.msra.mxu0 0.0
  %4416 = vmatprep.subr.mxu0 0.0
  %4417 = vmatpush1.msra.mxu0 0.0
  %4418 = vmatprep.subr.mxu0 0.0
  %4419 = vmatpush1.msra.mxu0 0.0
  %4420 = vmatprep.subr.mxu0 0.0
  %4421 = vmatpush1.msra.mxu0 0.0
  %4422 = vmatprep.subr.mxu0 0.0
  %4423 = vmatpush1.msra.mxu0 0.0
  %4424 = vmatprep.subr.mxu0 0.0
  %4425 = vmatpush1.msra.mxu0 0.0
  %4426 = vmatprep.subr.mxu0 0.0
  %4427 = vmatpush1.msra.mxu0 0.0
  %4428 = vmatprep.subr.mxu0 0.0
  %4429 = vmatpush1.msra.mxu0 0.0
  %4430 = vmatprep.subr.mxu0 0.0
  %4431 = vmatpush1.msra.mxu0 0.0
  %4432 = vmatprep.subr.mxu0 0.0
  %4433 = vmatpush1.msra.mxu0 0.0
  %4434 = vmatprep.subr.mxu0 0.0
  %4435 = vmatpush1.msra.mxu0 0.0
  %4436 = vmatprep.mubr.f32.mxu0 0.0
  %v4437 = vand.u32 %v2678, 4294901760
  %v4438 = vsub.f32 %v2678, %v4437
  %v4439 = vand.u32 %v4438, 4294901760
  %v4440 = vsub.f32 %v4438, %v4439
  %v4441 = vand.u32 %v4440, 4294901760
  %4442 = vmatmul.mubr.f32.gmra.mrb[0].mxu0 %v4441
  %v4443 = vpop.f32.mrb[0].mxu0
  %v4444 = vadd.f32 0.0, %v4443
  %v4445 = vpop.f32.mrb[0].mxu0
  %4446 = vmatprep.mubr.f32.mxu0 0.0
  %v4447 = vand.u32 %v2677, 4294901760
  %v4448 = vsub.f32 %v2677, %v4447
  %v4449 = vand.u32 %v4448, 4294901760
  %v4450 = vsub.f32 %v4448, %v4449
  %v4451 = vand.u32 %v4450, 4294901760
  %4452 = vmatmul.mubr.f32.gmra.mrb[0].mxu0 %v4451
  %v4453 = vpop.f32.mrb[0].mxu0
  %v4454 = vadd.f32 0.0, %v4453
  %v4455 = vpop.f32.mrb[0].mxu0
  %4456 = vmatprep.mubr.f32.mxu0 0.0
  %v4457 = vand.u32 %v2676, 4294901760
  %v4458 = vsub.f32 %v2676, %v4457
  %v4459 = vand.u32 %v4458, 4294901760
  %v4460 = vsub.f32 %v4458, %v4459
  %v4461 = vand.u32 %v4460, 4294901760
  %4462 = vmatmul.mubr.f32.gmra.mrb[0].mxu0 %v4461
  %v4463 = vpop.f32.mrb[0].mxu0
  %v4464 = vadd.f32 0.0, %v4463
  %v4465 = vpop.f32.mrb[0].mxu0
  %4466 = vmatprep.mubr.f32.mxu0 0.0
  %v4467 = vand.u32 %v2675, 4294901760
  %v4468 = vsub.f32 %v2675, %v4467
  %v4469 = vand.u32 %v4468, 4294901760
  %v4470 = vsub.f32 %v4468, %v4469
  %v4471 = vand.u32 %v4470, 4294901760
  %4472 = vmatmul.mubr.f32.gmra.mrb[0].mxu0 %v4471
  %v4473 = vpop.f32.mrb[0].mxu0
  %v4474 = vadd.f32 0.0, %v4473
  %v4475 = vpop.f32.mrb[0].mxu0
  %4476 = vmatprep.mubr.f32.mxu0 0.0
  %v4477 = vand.u32 %v2679, 4294901760
  %v4478 = vsub.f32 %v2679, %v4477
  %v4479 = vand.u32 %v4478, 4294901760
  %v4480 = vsub.f32 %v4478, %v4479
  %v4481 = vand.u32 %v4480, 4294901760
  %4482 = vmatmul.mubr.f32.gmra.mrb[0].mxu0 %v4481
  %v4483 = vpop.f32.mrb[0].mxu0
  %v4484 = vadd.f32 0.0, %v4483
  %v4485 = vpop.f32.mrb[0].mxu0
  %4486 = vdwg.mxu0
  %4487 = vmatprep.subr.mxu0 0.0
  %v4488 = vand.u32 %v4340, 4294901760
  %v4489 = vsub.f32 %v4340, %v4488
  %v4490 = vand.u32 %v4489, 4294901760
  %v4491 = vsub.f32 %v4489, %v4490
  %v4492 = vand.u32 %v4491, 4294901760
  %4493 = vmatpush1.msra.mxu0 %v4492
  %4494 = vmatprep.subr.mxu0 0.0
  %v4495 = vand.u32 %v4341, 4294901760
  %v4496 = vsub.f32 %v4341, %v4495
  %v4497 = vand.u32 %v4496, 4294901760
  %v4498 = vsub.f32 %v4496, %v4497
  %v4499 = vand.u32 %v4498, 4294901760
  %4500 = vmatpush1.msra.mxu0 %v4499
  %4501 = vmatprep.subr.mxu0 0.0
  %v4502 = vand.u32 %v4342, 4294901760
  %v4503 = vsub.f32 %v4342, %v4502
  %v4504 = vand.u32 %v4503, 4294901760
  %v4505 = vsub.f32 %v4503, %v4504
  %v4506 = vand.u32 %v4505, 4294901760
  %4507 = vmatpush1.msra.mxu0 %v4506
  %4508 = vmatprep.subr.mxu0 0.0
  %v4509 = vand.u32 %v4343, 4294901760
  %v4510 = vsub.f32 %v4343, %v4509
  %v4511 = vand.u32 %v4510, 4294901760
  %v4512 = vsub.f32 %v4510, %v4511
  %v4513 = vand.u32 %v4512, 4294901760
  %4514 = vmatpush1.msra.mxu0 %v4513
  %4515 = vmatprep.subr.mxu0 0.0
  %v4516 = vand.u32 %v4344, 4294901760
  %v4517 = vsub.f32 %v4344, %v4516
  %v4518 = vand.u32 %v4517, 4294901760
  %v4519 = vsub.f32 %v4517, %v4518
  %v4520 = vand.u32 %v4519, 4294901760
  %4521 = vmatpush1.msra.mxu0 %v4520
  %4522 = vmatprep.subr.mxu0 0.0
  %v4523 = vand.u32 %v4345, 4294901760
  %v4524 = vsub.f32 %v4345, %v4523
  %v4525 = vand.u32 %v4524, 4294901760
  %v4526 = vsub.f32 %v4524, %v4525
  %v4527 = vand.u32 %v4526, 4294901760
  %4528 = vmatpush1.msra.mxu0 %v4527
  %4529 = vmatprep.subr.mxu0 0.0
  %v4530 = vand.u32 %v4346, 4294901760
  %v4531 = vsub.f32 %v4346, %v4530
  %v4532 = vand.u32 %v4531, 4294901760
  %v4533 = vsub.f32 %v4531, %v4532
  %v4534 = vand.u32 %v4533, 4294901760
  %4535 = vmatpush1.msra.mxu0 %v4534
  %4536 = vmatprep.subr.mxu0 0.0
  %v4537 = vand.u32 %v4347, 4294901760
  %v4538 = vsub.f32 %v4347, %v4537
  %v4539 = vand.u32 %v4538, 4294901760
  %v4540 = vsub.f32 %v4538, %v4539
  %v4541 = vand.u32 %v4540, 4294901760
  %4542 = vmatpush1.msra.mxu0 %v4541
  %4543 = vmatprep.subr.mxu0 0.0
  %v4544 = vand.u32 %v4348, 4294901760
  %v4545 = vsub.f32 %v4348, %v4544
  %v4546 = vand.u32 %v4545, 4294901760
  %v4547 = vsub.f32 %v4545, %v4546
  %v4548 = vand.u32 %v4547, 4294901760
  %4549 = vmatpush1.msra.mxu0 %v4548
  %4550 = vmatprep.subr.mxu0 0.0
  %v4551 = vand.u32 %v4349, 4294901760
  %v4552 = vsub.f32 %v4349, %v4551
  %v4553 = vand.u32 %v4552, 4294901760
  %v4554 = vsub.f32 %v4552, %v4553
  %v4555 = vand.u32 %v4554, 4294901760
  %4556 = vmatpush1.msra.mxu0 %v4555
  %4557 = vmatprep.subr.mxu0 0.0
  %v4558 = vand.u32 %v4350, 4294901760
  %v4559 = vsub.f32 %v4350, %v4558
  %v4560 = vand.u32 %v4559, 4294901760
  %v4561 = vsub.f32 %v4559, %v4560
  %v4562 = vand.u32 %v4561, 4294901760
  %4563 = vmatpush1.msra.mxu0 %v4562
  %4564 = vmatprep.subr.mxu0 0.0
  %v4565 = vand.u32 %v4351, 4294901760
  %v4566 = vsub.f32 %v4351, %v4565
  %v4567 = vand.u32 %v4566, 4294901760
  %v4568 = vsub.f32 %v4566, %v4567
  %v4569 = vand.u32 %v4568, 4294901760
  %4570 = vmatpush1.msra.mxu0 %v4569
  %4571 = vmatprep.subr.mxu0 0.0
  %v4572 = vand.u32 %v4352, 4294901760
  %v4573 = vsub.f32 %v4352, %v4572
  %v4574 = vand.u32 %v4573, 4294901760
  %v4575 = vsub.f32 %v4573, %v4574
  %v4576 = vand.u32 %v4575, 4294901760
  %4577 = vmatpush1.msra.mxu0 %v4576
  %4578 = vmatprep.subr.mxu0 0.0
  %v4579 = vand.u32 %v4353, 4294901760
  %v4580 = vsub.f32 %v4353, %v4579
  %v4581 = vand.u32 %v4580, 4294901760
  %v4582 = vsub.f32 %v4580, %v4581
  %v4583 = vand.u32 %v4582, 4294901760
  %4584 = vmatpush1.msra.mxu0 %v4583
  %4585 = vmatprep.subr.mxu0 0.0
  %v4586 = vand.u32 %v4354, 4294901760
  %v4587 = vsub.f32 %v4354, %v4586
  %v4588 = vand.u32 %v4587, 4294901760
  %v4589 = vsub.f32 %v4587, %v4588
  %v4590 = vand.u32 %v4589, 4294901760
  %4591 = vmatpush1.msra.mxu0 %v4590
  %4592 = vmatprep.subr.mxu0 0.0
  %v4593 = vand.u32 %v4355, 4294901760
  %v4594 = vsub.f32 %v4355, %v4593
  %v4595 = vand.u32 %v4594, 4294901760
  %v4596 = vsub.f32 %v4594, %v4595
  %v4597 = vand.u32 %v4596, 4294901760
  %4598 = vmatpush1.msra.mxu0 %v4597
  %4599 = vmatprep.subr.mxu0 0.0
  %4600 = vmatpush1.msra.mxu0 0.0
  %4601 = vmatprep.subr.mxu0 0.0
  %4602 = vmatpush1.msra.mxu0 0.0
  %4603 = vmatprep.subr.mxu0 0.0
  %4604 = vmatpush1.msra.mxu0 0.0
  %4605 = vmatprep.subr.mxu0 0.0
  %4606 = vmatpush1.msra.mxu0 0.0
  %4607 = vmatprep.subr.mxu0 0.0
  %4608 = vmatpush1.msra.mxu0 0.0
  %4609 = vmatprep.subr.mxu0 0.0
  %4610 = vmatpush1.msra.mxu0 0.0
  %4611 = vmatprep.subr.mxu0 0.0
  %4612 = vmatpush1.msra.mxu0 0.0
  %4613 = vmatprep.subr.mxu0 0.0
  %4614 = vmatpush1.msra.mxu0 0.0
  %4615 = vmatprep.subr.mxu0 0.0
  %4616 = vmatpush1.msra.mxu0 0.0
  %4617 = vmatprep.subr.mxu0 0.0
  %4618 = vmatpush1.msra.mxu0 0.0
  %4619 = vmatprep.subr.mxu0 0.0
  %4620 = vmatpush1.msra.mxu0 0.0
  %4621 = vmatprep.subr.mxu0 0.0
  %4622 = vmatpush1.msra.mxu0 0.0
  %4623 = vmatprep.subr.mxu0 0.0
  %4624 = vmatpush1.msra.mxu0 0.0
  %4625 = vmatprep.subr.mxu0 0.0
  %4626 = vmatpush1.msra.mxu0 0.0
  %4627 = vmatprep.subr.mxu0 0.0
  %4628 = vmatpush1.msra.mxu0 0.0
  %4629 = vmatprep.subr.mxu0 0.0
  %4630 = vmatpush1.msra.mxu0 0.0
  %4631 = vmatprep.mubr.f32.mxu0 0.0
  %v4632 = vand.u32 %v2678, 4294901760
  %4633 = vmatmul.mubr.f32.gmra.mrb[0].mxu0 %v4632
  %v4634 = vpop.f32.mrb[0].mxu0
  %v4635 = vadd.f32 %v4444, %v4634
  %v4636 = vpop.f32.mrb[0].mxu0
  %4637 = vmatprep.mubr.f32.mxu0 0.0
  %v4638 = vand.u32 %v2677, 4294901760
  %4639 = vmatmul.mubr.f32.gmra.mrb[0].mxu0 %v4638
  %v4640 = vpop.f32.mrb[0].mxu0
  %v4641 = vadd.f32 %v4454, %v4640
  %v4642 = vpop.f32.mrb[0].mxu0
  %4643 = vmatprep.mubr.f32.mxu0 0.0
  %v4644 = vand.u32 %v2676, 4294901760
  %4645 = vmatmul.mubr.f32.gmra.mrb[0].mxu0 %v4644
  %v4646 = vpop.f32.mrb[0].mxu0
  %v4647 = vadd.f32 %v4464, %v4646
  %v4648 = vpop.f32.mrb[0].mxu0
  %4649 = vmatprep.mubr.f32.mxu0 0.0
  %v4650 = vand.u32 %v2675, 4294901760
  %4651 = vmatmul.mubr.f32.gmra.mrb[0].mxu0 %v4650
  %v4652 = vpop.f32.mrb[0].mxu0
  %v4653 = vadd.f32 %v4474, %v4652
  %v4654 = vpop.f32.mrb[0].mxu0
  %4655 = vmatprep.mubr.f32.mxu0 0.0
  %v4656 = vand.u32 %v2679, 4294901760
  %4657 = vmatmul.mubr.f32.gmra.mrb[0].mxu0 %v4656
  %v4658 = vpop.f32.mrb[0].mxu0
  %v4659 = vadd.f32 %v4484, %v4658
  %v4660 = vpop.f32.mrb[0].mxu0
  %4661 = vdwg.mxu0
  %4662 = vmatprep.subr.mxu0 0.0
  %v4663 = vand.u32 %v4340, 4294901760
  %v4664 = vsub.f32 %v4340, %v4663
  %4665 = vmatpush1.msra.mxu0 %v4664
  %4666 = vmatprep.subr.mxu0 0.0
  %v4667 = vand.u32 %v4341, 4294901760
  %v4668 = vsub.f32 %v4341, %v4667
  %4669 = vmatpush1.msra.mxu0 %v4668
  %4670 = vmatprep.subr.mxu0 0.0
  %v4671 = vand.u32 %v4342, 4294901760
  %v4672 = vsub.f32 %v4342, %v4671
  %4673 = vmatpush1.msra.mxu0 %v4672
  %4674 = vmatprep.subr.mxu0 0.0
  %v4675 = vand.u32 %v4343, 4294901760
  %v4676 = vsub.f32 %v4343, %v4675
  %4677 = vmatpush1.msra.mxu0 %v4676
  %4678 = vmatprep.subr.mxu0 0.0
  %v4679 = vand.u32 %v4344, 4294901760
  %v4680 = vsub.f32 %v4344, %v4679
  %4681 = vmatpush1.msra.mxu0 %v4680
  %4682 = vmatprep.subr.mxu0 0.0
  %v4683 = vand.u32 %v4345, 4294901760
  %v4684 = vsub.f32 %v4345, %v4683
  %4685 = vmatpush1.msra.mxu0 %v4684
  %4686 = vmatprep.subr.mxu0 0.0
  %v4687 = vand.u32 %v4346, 4294901760
  %v4688 = vsub.f32 %v4346, %v4687
  %4689 = vmatpush1.msra.mxu0 %v4688
  %4690 = vmatprep.subr.mxu0 0.0
  %v4691 = vand.u32 %v4347, 4294901760
  %v4692 = vsub.f32 %v4347, %v4691
  %4693 = vmatpush1.msra.mxu0 %v4692
  %4694 = vmatprep.subr.mxu0 0.0
  %v4695 = vand.u32 %v4348, 4294901760
  %v4696 = vsub.f32 %v4348, %v4695
  %4697 = vmatpush1.msra.mxu0 %v4696
  %4698 = vmatprep.subr.mxu0 0.0
  %v4699 = vand.u32 %v4349, 4294901760
  %v4700 = vsub.f32 %v4349, %v4699
  %4701 = vmatpush1.msra.mxu0 %v4700
  %4702 = vmatprep.subr.mxu0 0.0
  %v4703 = vand.u32 %v4350, 4294901760
  %v4704 = vsub.f32 %v4350, %v4703
  %4705 = vmatpush1.msra.mxu0 %v4704
  %4706 = vmatprep.subr.mxu0 0.0
  %v4707 = vand.u32 %v4351, 4294901760
  %v4708 = vsub.f32 %v4351, %v4707
  %4709 = vmatpush1.msra.mxu0 %v4708
  %4710 = vmatprep.subr.mxu0 0.0
  %v4711 = vand.u32 %v4352, 4294901760
  %v4712 = vsub.f32 %v4352, %v4711
  %4713 = vmatpush1.msra.mxu0 %v4712
  %4714 = vmatprep.subr.mxu0 0.0
  %v4715 = vand.u32 %v4353, 4294901760
  %v4716 = vsub.f32 %v4353, %v4715
  %4717 = vmatpush1.msra.mxu0 %v4716
  %4718 = vmatprep.subr.mxu0 0.0
  %v4719 = vand.u32 %v4354, 4294901760
  %v4720 = vsub.f32 %v4354, %v4719
  %4721 = vmatpush1.msra.mxu0 %v4720
  %4722 = vmatprep.subr.mxu0 0.0
  %v4723 = vand.u32 %v4355, 4294901760
  %v4724 = vsub.f32 %v4355, %v4723
  %4725 = vmatpush1.msra.mxu0 %v4724
  %4726 = vmatprep.subr.mxu0 0.0
  %4727 = vmatpush1.msra.mxu0 0.0
  %4728 = vmatprep.subr.mxu0 0.0
  %4729 = vmatpush1.msra.mxu0 0.0
  %4730 = vmatprep.subr.mxu0 0.0
  %4731 = vmatpush1.msra.mxu0 0.0
  %4732 = vmatprep.subr.mxu0 0.0
  %4733 = vmatpush1.msra.mxu0 0.0
  %4734 = vmatprep.subr.mxu0 0.0
  %4735 = vmatpush1.msra.mxu0 0.0
  %4736 = vmatprep.subr.mxu0 0.0
  %4737 = vmatpush1.msra.mxu0 0.0
  %4738 = vmatprep.subr.mxu0 0.0
  %4739 = vmatpush1.msra.mxu0 0.0
  %4740 = vmatprep.subr.mxu0 0.0
  %4741 = vmatpush1.msra.mxu0 0.0
  %4742 = vmatprep.subr.mxu0 0.0
  %4743 = vmatpush1.msra.mxu0 0.0
  %4744 = vmatprep.subr.mxu0 0.0
  %4745 = vmatpush1.msra.mxu0 0.0
  %4746 = vmatprep.subr.mxu0 0.0
  %4747 = vmatpush1.msra.mxu0 0.0
  %4748 = vmatprep.subr.mxu0 0.0
  %4749 = vmatpush1.msra.mxu0 0.0
  %4750 = vmatprep.subr.mxu0 0.0
  %4751 = vmatpush1.msra.mxu0 0.0
  %4752 = vmatprep.subr.mxu0 0.0
  %4753 = vmatpush1.msra.mxu0 0.0
  %4754 = vmatprep.subr.mxu0 0.0
  %4755 = vmatpush1.msra.mxu0 0.0
  %4756 = vmatprep.subr.mxu0 0.0
  %4757 = vmatpush1.msra.mxu0 0.0
  %4758 = vmatprep.mubr.f32.mxu0 0.0
  %v4759 = vand.u32 %v2678, 4294901760
  %v4760 = vsub.f32 %v2678, %v4759
  %4761 = vmatmul.mubr.f32.gmra.mrb[0].mxu0 %v4760
  %v4762 = vpop.f32.mrb[0].mxu0
  %v4763 = vadd.f32 %v4635, %v4762
  %v4764 = vpop.f32.mrb[0].mxu0
  %4765 = vmatprep.mubr.f32.mxu0 0.0
  %v4766 = vand.u32 %v2677, 4294901760
  %v4767 = vsub.f32 %v2677, %v4766
  %4768 = vmatmul.mubr.f32.gmra.mrb[0].mxu0 %v4767
  %v4769 = vpop.f32.mrb[0].mxu0
  %v4770 = vadd.f32 %v4641, %v4769
  %v4771 = vpop.f32.mrb[0].mxu0
  %4772 = vmatprep.mubr.f32.mxu0 0.0
  %v4773 = vand.u32 %v2676, 4294901760
  %v4774 = vsub.f32 %v2676, %v4773
  %4775 = vmatmul.mubr.f32.gmra.mrb[0].mxu0 %v4774
  %v4776 = vpop.f32.mrb[0].mxu0
  %v4777 = vadd.f32 %v4647, %v4776
  %v4778 = vpop.f32.mrb[0].mxu0
  %4779 = vmatprep.mubr.f32.mxu0 0.0
  %v4780 = vand.u32 %v2675, 4294901760
  %v4781 = vsub.f32 %v2675, %v4780
  %4782 = vmatmul.mubr.f32.gmra.mrb[0].mxu0 %v4781
  %v4783 = vpop.f32.mrb[0].mxu0
  %v4784 = vadd.f32 %v4653, %v4783
  %v4785 = vpop.f32.mrb[0].mxu0
  %4786 = vmatprep.mubr.f32.mxu0 0.0
  %v4787 = vand.u32 %v2679, 4294901760
  %v4788 = vsub.f32 %v2679, %v4787
  %4789 = vmatmul.mubr.f32.gmra.mrb[0].mxu0 %v4788
  %v4790 = vpop.f32.mrb[0].mxu0
  %v4791 = vadd.f32 %v4659, %v4790
  %v4792 = vpop.f32.mrb[0].mxu0
  %4793 = vdwg.mxu0
  %4794 = vmatprep.subr.mxu0 0.0
  %v4795 = vand.u32 %v4340, 4294901760
  %4796 = vmatpush1.msra.mxu0 %v4795
  %4797 = vmatprep.subr.mxu0 0.0
  %v4798 = vand.u32 %v4341, 4294901760
  %4799 = vmatpush1.msra.mxu0 %v4798
  %4800 = vmatprep.subr.mxu0 0.0
  %v4801 = vand.u32 %v4342, 4294901760
  %4802 = vmatpush1.msra.mxu0 %v4801
  %4803 = vmatprep.subr.mxu0 0.0
  %v4804 = vand.u32 %v4343, 4294901760
  %4805 = vmatpush1.msra.mxu0 %v4804
  %4806 = vmatprep.subr.mxu0 0.0
  %v4807 = vand.u32 %v4344, 4294901760
  %4808 = vmatpush1.msra.mxu0 %v4807
  %4809 = vmatprep.subr.mxu0 0.0
  %v4810 = vand.u32 %v4345, 4294901760
  %4811 = vmatpush1.msra.mxu0 %v4810
  %4812 = vmatprep.subr.mxu0 0.0
  %v4813 = vand.u32 %v4346, 4294901760
  %4814 = vmatpush1.msra.mxu0 %v4813
  %4815 = vmatprep.subr.mxu0 0.0
  %v4816 = vand.u32 %v4347, 4294901760
  %4817 = vmatpush1.msra.mxu0 %v4816
  %4818 = vmatprep.subr.mxu0 0.0
  %v4819 = vand.u32 %v4348, 4294901760
  %4820 = vmatpush1.msra.mxu0 %v4819
  %4821 = vmatprep.subr.mxu0 0.0
  %v4822 = vand.u32 %v4349, 4294901760
  %4823 = vmatpush1.msra.mxu0 %v4822
  %4824 = vmatprep.subr.mxu0 0.0
  %v4825 = vand.u32 %v4350, 4294901760
  %4826 = vmatpush1.msra.mxu0 %v4825
  %4827 = vmatprep.subr.mxu0 0.0
  %v4828 = vand.u32 %v4351, 4294901760
  %4829 = vmatpush1.msra.mxu0 %v4828
  %4830 = vmatprep.subr.mxu0 0.0
  %v4831 = vand.u32 %v4352, 4294901760
  %4832 = vmatpush1.msra.mxu0 %v4831
  %4833 = vmatprep.subr.mxu0 0.0
  %v4834 = vand.u32 %v4353, 4294901760
  %4835 = vmatpush1.msra.mxu0 %v4834
  %4836 = vmatprep.subr.mxu0 0.0
  %v4837 = vand.u32 %v4354, 4294901760
  %4838 = vmatpush1.msra.mxu0 %v4837
  %4839 = vmatprep.subr.mxu0 0.0
  %v4840 = vand.u32 %v4355, 4294901760
  %4841 = vmatpush1.msra.mxu0 %v4840
  %4842 = vmatprep.subr.mxu0 0.0
  %4843 = vmatpush1.msra.mxu0 0.0
  %4844 = vmatprep.subr.mxu0 0.0
  %4845 = vmatpush1.msra.mxu0 0.0
  %4846 = vmatprep.subr.mxu0 0.0
  %4847 = vmatpush1.msra.mxu0 0.0
  %4848 = vmatprep.subr.mxu0 0.0
  %4849 = vmatpush1.msra.mxu0 0.0
  %4850 = vmatprep.subr.mxu0 0.0
  %4851 = vmatpush1.msra.mxu0 0.0
  %4852 = vmatprep.subr.mxu0 0.0
  %4853 = vmatpush1.msra.mxu0 0.0
  %4854 = vmatprep.subr.mxu0 0.0
  %4855 = vmatpush1.msra.mxu0 0.0
  %4856 = vmatprep.subr.mxu0 0.0
  %4857 = vmatpush1.msra.mxu0 0.0
  %4858 = vmatprep.subr.mxu0 0.0
  %4859 = vmatpush1.msra.mxu0 0.0
  %4860 = vmatprep.subr.mxu0 0.0
  %4861 = vmatpush1.msra.mxu0 0.0
  %4862 = vmatprep.subr.mxu0 0.0
  %4863 = vmatpush1.msra.mxu0 0.0
  %4864 = vmatprep.subr.mxu0 0.0
  %4865 = vmatpush1.msra.mxu0 0.0
  %4866 = vmatprep.subr.mxu0 0.0
  %4867 = vmatpush1.msra.mxu0 0.0
  %4868 = vmatprep.subr.mxu0 0.0
  %4869 = vmatpush1.msra.mxu0 0.0
  %4870 = vmatprep.subr.mxu0 0.0
  %4871 = vmatpush1.msra.mxu0 0.0
  %4872 = vmatprep.subr.mxu0 0.0
  %4873 = vmatpush1.msra.mxu0 0.0
  %4874 = vmatprep.mubr.f32.mxu0 0.0
  %v4875 = vand.u32 %v2678, 4294901760
  %v4876 = vsub.f32 %v2678, %v4875
  %v4877 = vand.u32 %v4876, 4294901760
  %4878 = vmatmul.mubr.f32.gmra.mrb[0].mxu0 %v4877
  %v4879 = vpop.f32.mrb[0].mxu0
  %v4880 = vadd.f32 %v4763, %v4879
  %v4881 = vpop.f32.mrb[0].mxu0
  %4882 = vmatprep.mubr.f32.mxu0 0.0
  %v4883 = vand.u32 %v2677, 4294901760
  %v4884 = vsub.f32 %v2677, %v4883
  %v4885 = vand.u32 %v4884, 4294901760
  %4886 = vmatmul.mubr.f32.gmra.mrb[0].mxu0 %v4885
  %v4887 = vpop.f32.mrb[0].mxu0
  %v4888 = vadd.f32 %v4770, %v4887
  %v4889 = vpop.f32.mrb[0].mxu0
  %4890 = vmatprep.mubr.f32.mxu0 0.0
  %v4891 = vand.u32 %v2676, 4294901760
  %v4892 = vsub.f32 %v2676, %v4891
  %v4893 = vand.u32 %v4892, 4294901760
  %4894 = vmatmul.mubr.f32.gmra.mrb[0].mxu0 %v4893
  %v4895 = vpop.f32.mrb[0].mxu0
  %v4896 = vadd.f32 %v4777, %v4895
  %v4897 = vpop.f32.mrb[0].mxu0
  %4898 = vmatprep.mubr.f32.mxu0 0.0
  %v4899 = vand.u32 %v2675, 4294901760
  %v4900 = vsub.f32 %v2675, %v4899
  %v4901 = vand.u32 %v4900, 4294901760
  %4902 = vmatmul.mubr.f32.gmra.mrb[0].mxu0 %v4901
  %v4903 = vpop.f32.mrb[0].mxu0
  %v4904 = vadd.f32 %v4784, %v4903
  %v4905 = vpop.f32.mrb[0].mxu0
  %4906 = vmatprep.mubr.f32.mxu0 0.0
  %v4907 = vand.u32 %v2679, 4294901760
  %v4908 = vsub.f32 %v2679, %v4907
  %v4909 = vand.u32 %v4908, 4294901760
  %4910 = vmatmul.mubr.f32.gmra.mrb[0].mxu0 %v4909
  %v4911 = vpop.f32.mrb[0].mxu0
  %v4912 = vadd.f32 %v4791, %v4911
  %v4913 = vpop.f32.mrb[0].mxu0
  %4914 = vdwg.mxu0
  %4915 = vmatprep.subr.mxu0 0.0
  %v4916 = vand.u32 %v4340, 4294901760
  %v4917 = vsub.f32 %v4340, %v4916
  %v4918 = vand.u32 %v4917, 4294901760
  %4919 = vmatpush1.msra.mxu0 %v4918
  %4920 = vmatprep.subr.mxu0 0.0
  %v4921 = vand.u32 %v4341, 4294901760
  %v4922 = vsub.f32 %v4341, %v4921
  %v4923 = vand.u32 %v4922, 4294901760
  %4924 = vmatpush1.msra.mxu0 %v4923
  %4925 = vmatprep.subr.mxu0 0.0
  %v4926 = vand.u32 %v4342, 4294901760
  %v4927 = vsub.f32 %v4342, %v4926
  %v4928 = vand.u32 %v4927, 4294901760
  %4929 = vmatpush1.msra.mxu0 %v4928
  %4930 = vmatprep.subr.mxu0 0.0
  %v4931 = vand.u32 %v4343, 4294901760
  %v4932 = vsub.f32 %v4343, %v4931
  %v4933 = vand.u32 %v4932, 4294901760
  %4934 = vmatpush1.msra.mxu0 %v4933
  %4935 = vmatprep.subr.mxu0 0.0
  %v4936 = vand.u32 %v4344, 4294901760
  %v4937 = vsub.f32 %v4344, %v4936
  %v4938 = vand.u32 %v4937, 4294901760
  %4939 = vmatpush1.msra.mxu0 %v4938
  %4940 = vmatprep.subr.mxu0 0.0
  %v4941 = vand.u32 %v4345, 4294901760
  %v4942 = vsub.f32 %v4345, %v4941
  %v4943 = vand.u32 %v4942, 4294901760
  %4944 = vmatpush1.msra.mxu0 %v4943
  %4945 = vmatprep.subr.mxu0 0.0
  %v4946 = vand.u32 %v4346, 4294901760
  %v4947 = vsub.f32 %v4346, %v4946
  %v4948 = vand.u32 %v4947, 4294901760
  %4949 = vmatpush1.msra.mxu0 %v4948
  %4950 = vmatprep.subr.mxu0 0.0
  %v4951 = vand.u32 %v4347, 4294901760
  %v4952 = vsub.f32 %v4347, %v4951
  %v4953 = vand.u32 %v4952, 4294901760
  %4954 = vmatpush1.msra.mxu0 %v4953
  %4955 = vmatprep.subr.mxu0 0.0
  %v4956 = vand.u32 %v4348, 4294901760
  %v4957 = vsub.f32 %v4348, %v4956
  %v4958 = vand.u32 %v4957, 4294901760
  %4959 = vmatpush1.msra.mxu0 %v4958
  %4960 = vmatprep.subr.mxu0 0.0
  %v4961 = vand.u32 %v4349, 4294901760
  %v4962 = vsub.f32 %v4349, %v4961
  %v4963 = vand.u32 %v4962, 4294901760
  %4964 = vmatpush1.msra.mxu0 %v4963
  %4965 = vmatprep.subr.mxu0 0.0
  %v4966 = vand.u32 %v4350, 4294901760
  %v4967 = vsub.f32 %v4350, %v4966
  %v4968 = vand.u32 %v4967, 4294901760
  %4969 = vmatpush1.msra.mxu0 %v4968
  %4970 = vmatprep.subr.mxu0 0.0
  %v4971 = vand.u32 %v4351, 4294901760
  %v4972 = vsub.f32 %v4351, %v4971
  %v4973 = vand.u32 %v4972, 4294901760
  %4974 = vmatpush1.msra.mxu0 %v4973
  %4975 = vmatprep.subr.mxu0 0.0
  %v4976 = vand.u32 %v4352, 4294901760
  %v4977 = vsub.f32 %v4352, %v4976
  %v4978 = vand.u32 %v4977, 4294901760
  %4979 = vmatpush1.msra.mxu0 %v4978
  %4980 = vmatprep.subr.mxu0 0.0
  %v4981 = vand.u32 %v4353, 4294901760
  %v4982 = vsub.f32 %v4353, %v4981
  %v4983 = vand.u32 %v4982, 4294901760
  %4984 = vmatpush1.msra.mxu0 %v4983
  %4985 = vmatprep.subr.mxu0 0.0
  %v4986 = vand.u32 %v4354, 4294901760
  %v4987 = vsub.f32 %v4354, %v4986
  %v4988 = vand.u32 %v4987, 4294901760
  %4989 = vmatpush1.msra.mxu0 %v4988
  %4990 = vmatprep.subr.mxu0 0.0
  %v4991 = vand.u32 %v4355, 4294901760
  %v4992 = vsub.f32 %v4355, %v4991
  %v4993 = vand.u32 %v4992, 4294901760
  %4994 = vmatpush1.msra.mxu0 %v4993
  %4995 = vmatprep.subr.mxu0 0.0
  %4996 = vmatpush1.msra.mxu0 0.0
  %4997 = vmatprep.subr.mxu0 0.0
  %4998 = vmatpush1.msra.mxu0 0.0
  %4999 = vmatprep.subr.mxu0 0.0
  %5000 = vmatpush1.msra.mxu0 0.0
  %5001 = vmatprep.subr.mxu0 0.0
  %5002 = vmatpush1.msra.mxu0 0.0
  %5003 = vmatprep.subr.mxu0 0.0
  %5004 = vmatpush1.msra.mxu0 0.0
  %5005 = vmatprep.subr.mxu0 0.0
  %5006 = vmatpush1.msra.mxu0 0.0
  %5007 = vmatprep.subr.mxu0 0.0
  %5008 = vmatpush1.msra.mxu0 0.0
  %5009 = vmatprep.subr.mxu0 0.0
  %5010 = vmatpush1.msra.mxu0 0.0
  %5011 = vmatprep.subr.mxu0 0.0
  %5012 = vmatpush1.msra.mxu0 0.0
  %5013 = vmatprep.subr.mxu0 0.0
  %5014 = vmatpush1.msra.mxu0 0.0
  %5015 = vmatprep.subr.mxu0 0.0
  %5016 = vmatpush1.msra.mxu0 0.0
  %5017 = vmatprep.subr.mxu0 0.0
  %5018 = vmatpush1.msra.mxu0 0.0
  %5019 = vmatprep.subr.mxu0 0.0
  %5020 = vmatpush1.msra.mxu0 0.0
  %5021 = vmatprep.subr.mxu0 0.0
  %5022 = vmatpush1.msra.mxu0 0.0
  %5023 = vmatprep.subr.mxu0 0.0
  %5024 = vmatpush1.msra.mxu0 0.0
  %5025 = vmatprep.subr.mxu0 0.0
  %5026 = vmatpush1.msra.mxu0 0.0
  %5027 = vmatprep.mubr.f32.mxu0 0.0
  %v5028 = vand.u32 %v2678, 4294901760
  %5029 = vmatmul.mubr.f32.gmra.mrb[0].mxu0 %v5028
  %v5030 = vpop.f32.mrb[0].mxu0
  %v5031 = vadd.f32 %v4880, %v5030
  %v5032 = vpop.f32.mrb[0].mxu0
  %5033 = vmatprep.mubr.f32.mxu0 0.0
  %v5034 = vand.u32 %v2677, 4294901760
  %5035 = vmatmul.mubr.f32.gmra.mrb[0].mxu0 %v5034
  %v5036 = vpop.f32.mrb[0].mxu0
  %v5037 = vadd.f32 %v4888, %v5036
  %v5038 = vpop.f32.mrb[0].mxu0
  %5039 = vmatprep.mubr.f32.mxu0 0.0
  %v5040 = vand.u32 %v2676, 4294901760
  %5041 = vmatmul.mubr.f32.gmra.mrb[0].mxu0 %v5040
  %v5042 = vpop.f32.mrb[0].mxu0
  %v5043 = vadd.f32 %v4896, %v5042
  %v5044 = vpop.f32.mrb[0].mxu0
  %5045 = vmatprep.mubr.f32.mxu0 0.0
  %v5046 = vand.u32 %v2675, 4294901760
  %5047 = vmatmul.mubr.f32.gmra.mrb[0].mxu0 %v5046
  %v5048 = vpop.f32.mrb[0].mxu0
  %v5049 = vadd.f32 %v4904, %v5048
  %v5050 = vpop.f32.mrb[0].mxu0
  %5051 = vmatprep.mubr.f32.mxu0 0.0
  %v5052 = vand.u32 %v2679, 4294901760
  %5053 = vmatmul.mubr.f32.gmra.mrb[0].mxu0 %v5052
  %v5054 = vpop.f32.mrb[0].mxu0
  %v5055 = vadd.f32 %v4912, %v5054
  %v5056 = vpop.f32.mrb[0].mxu0
  %5057 = vdwg.mxu0
  %5058 = vmatprep.subr.mxu0 0.0
  %v5059 = vand.u32 %v4340, 4294901760
  %5060 = vmatpush1.msra.mxu0 %v5059
  %5061 = vmatprep.subr.mxu0 0.0
  %v5062 = vand.u32 %v4341, 4294901760
  %5063 = vmatpush1.msra.mxu0 %v5062
  %5064 = vmatprep.subr.mxu0 0.0
  %v5065 = vand.u32 %v4342, 4294901760
  %5066 = vmatpush1.msra.mxu0 %v5065
  %5067 = vmatprep.subr.mxu0 0.0
  %v5068 = vand.u32 %v4343, 4294901760
  %5069 = vmatpush1.msra.mxu0 %v5068
  %5070 = vmatprep.subr.mxu0 0.0
  %v5071 = vand.u32 %v4344, 4294901760
  %5072 = vmatpush1.msra.mxu0 %v5071
  %5073 = vmatprep.subr.mxu0 0.0
  %v5074 = vand.u32 %v4345, 4294901760
  %5075 = vmatpush1.msra.mxu0 %v5074
  %5076 = vmatprep.subr.mxu0 0.0
  %v5077 = vand.u32 %v4346, 4294901760
  %5078 = vmatpush1.msra.mxu0 %v5077
  %5079 = vmatprep.subr.mxu0 0.0
  %v5080 = vand.u32 %v4347, 4294901760
  %5081 = vmatpush1.msra.mxu0 %v5080
  %5082 = vmatprep.subr.mxu0 0.0
  %v5083 = vand.u32 %v4348, 4294901760
  %5084 = vmatpush1.msra.mxu0 %v5083
  %5085 = vmatprep.subr.mxu0 0.0
  %v5086 = vand.u32 %v4349, 4294901760
  %5087 = vmatpush1.msra.mxu0 %v5086
  %5088 = vmatprep.subr.mxu0 0.0
  %v5089 = vand.u32 %v4350, 4294901760
  %5090 = vmatpush1.msra.mxu0 %v5089
  %5091 = vmatprep.subr.mxu0 0.0
  %v5092 = vand.u32 %v4351, 4294901760
  %5093 = vmatpush1.msra.mxu0 %v5092
  %5094 = vmatprep.subr.mxu0 0.0
  %v5095 = vand.u32 %v4352, 4294901760
  %5096 = vmatpush1.msra.mxu0 %v5095
  %5097 = vmatprep.subr.mxu0 0.0
  %v5098 = vand.u32 %v4353, 4294901760
  %5099 = vmatpush1.msra.mxu0 %v5098
  %5100 = vmatprep.subr.mxu0 0.0
  %v5101 = vand.u32 %v4354, 4294901760
  %5102 = vmatpush1.msra.mxu0 %v5101
  %5103 = vmatprep.subr.mxu0 0.0
  %v5104 = vand.u32 %v4355, 4294901760
  %5105 = vmatpush1.msra.mxu0 %v5104
  %5106 = vmatprep.subr.mxu0 0.0
  %5107 = vmatpush1.msra.mxu0 0.0
  %5108 = vmatprep.subr.mxu0 0.0
  %5109 = vmatpush1.msra.mxu0 0.0
  %5110 = vmatprep.subr.mxu0 0.0
  %5111 = vmatpush1.msra.mxu0 0.0
  %5112 = vmatprep.subr.mxu0 0.0
  %5113 = vmatpush1.msra.mxu0 0.0
  %5114 = vmatprep.subr.mxu0 0.0
  %5115 = vmatpush1.msra.mxu0 0.0
  %5116 = vmatprep.subr.mxu0 0.0
  %5117 = vmatpush1.msra.mxu0 0.0
  %5118 = vmatprep.subr.mxu0 0.0
  %5119 = vmatpush1.msra.mxu0 0.0
  %5120 = vmatprep.subr.mxu0 0.0
  %5121 = vmatpush1.msra.mxu0 0.0
  %5122 = vmatprep.subr.mxu0 0.0
  %5123 = vmatpush1.msra.mxu0 0.0
  %5124 = vmatprep.subr.mxu0 0.0
  %5125 = vmatpush1.msra.mxu0 0.0
  %5126 = vmatprep.subr.mxu0 0.0
  %5127 = vmatpush1.msra.mxu0 0.0
  %5128 = vmatprep.subr.mxu0 0.0
  %5129 = vmatpush1.msra.mxu0 0.0
  %5130 = vmatprep.subr.mxu0 0.0
  %5131 = vmatpush1.msra.mxu0 0.0
  %5132 = vmatprep.subr.mxu0 0.0
  %5133 = vmatpush1.msra.mxu0 0.0
  %5134 = vmatprep.subr.mxu0 0.0
  %5135 = vmatpush1.msra.mxu0 0.0
  %5136 = vmatprep.subr.mxu0 0.0
  %5137 = vmatpush1.msra.mxu0 0.0
  %5138 = vmatprep.mubr.f32.mxu0 0.0
  %v5139 = vand.u32 %v2678, 4294901760
  %5140 = vmatmul.mubr.f32.gmra.mrb[0].mxu0 %v5139
  %v5141 = vpop.f32.mrb[0].mxu0
  %v5142 = vadd.f32 %v5031, %v5141
  %v5143 = vpop.f32.mrb[0].mxu0
  %5144 = vmatprep.mubr.f32.mxu0 0.0
  %v5145 = vand.u32 %v2677, 4294901760
  %5146 = vmatmul.mubr.f32.gmra.mrb[0].mxu0 %v5145
  %v5147 = vpop.f32.mrb[0].mxu0
  %v5148 = vadd.f32 %v5037, %v5147
  %v5149 = vpop.f32.mrb[0].mxu0
  %5150 = vmatprep.mubr.f32.mxu0 0.0
  %v5151 = vand.u32 %v2676, 4294901760
  %5152 = vmatmul.mubr.f32.gmra.mrb[0].mxu0 %v5151
  %v5153 = vpop.f32.mrb[0].mxu0
  %v5154 = vadd.f32 %v5043, %v5153
  %v5155 = vpop.f32.mrb[0].mxu0
  %5156 = vmatprep.mubr.f32.mxu0 0.0
  %v5157 = vand.u32 %v2675, 4294901760
  %5158 = vmatmul.mubr.f32.gmra.mrb[0].mxu0 %v5157
  %v5159 = vpop.f32.mrb[0].mxu0
  %v5160 = vadd.f32 %v5049, %v5159
  %v5161 = vpop.f32.mrb[0].mxu0
  %5162 = vmatprep.mubr.f32.mxu0 0.0
  %v5163 = vand.u32 %v2679, 4294901760
  %5164 = vmatmul.mubr.f32.gmra.mrb[0].mxu0 %v5163
  %v5165 = vpop.f32.mrb[0].mxu0
  %v5166 = vadd.f32 %v5055, %v5165
  %v5167 = vpop.f32.mrb[0].mxu0
  %5168 = vdwg.mxu0
  %v5169 = vadd.f32 %v4312, %v5142
  %v5170 = vadd.f32 %v4318, %v5148
  %v5171 = vadd.f32 %v4324, %v5154
  %v5172 = vadd.f32 %v4330, %v5160
  %v5173 = vadd.f32 %v4336, %v5166
  %v5174 = vlaneseq
  %v5175 = vshrl.u32 %v5174, 7
  %v5176 = vsub.s32 3, %v5175
  %v5177 = vrot.slane %v30, %v5176
  %v5178 = vadd.f32 %v5169, %v5177
  %v5179 = vadd.f32 %v5170, %v5177
  %v5180 = vadd.f32 %v5171, %v5177
  %v5181 = vadd.f32 %v5172, %v5177
  %v5182 = vadd.f32 %v5173, %v5177
  %v5183 = vadd.f32 %v5178, %v20
  %v5184 = vadd.f32 %v5179, %v21
  %v5185 = vadd.f32 %v5180, %v22
  %v5186 = vadd.f32 %v5181, %v23
  %v5187 = vadd.f32 %v5182, %v24
  %v5188 = vmul.f32 %v5183, %v25
  %v5189 = vmul.f32 %v5184, %v26
  %v5190 = vmul.f32 %v5185, %v27
  %v5191 = vmul.f32 %v5186, %v28
  %v5192 = vmul.f32 %v5187, %v29
  %v5193 = vadd.f32 %v5188, %v5189
  %v5194 = vadd.f32 %v5193, %v5190
  %v5195 = vadd.f32 %v5194, %v5191
  %v5196 = vadd.f32 %v5195, %v5192
  %v5197 = vrot.slane %v5196, 4
  %v5198 = vadd.f32 %v5196, %v5197
  %v5199 = vrot.slane %v5198, 2
  %v5200 = vadd.f32 %v5198, %v5199
  %v5201 = vrot.slane %v5200, 1
  %v5202 = vadd.f32 %v5200, %v5201
  %v5203 = vmul.f32 %v5188, %v5188
  %v5204 = vmul.f32 %v5189, %v5189
  %v5205 = vmul.f32 %v5190, %v5190
  %v5206 = vmul.f32 %v5191, %v5191
  %v5207 = vmul.f32 %v5192, %v5192
  %v5208 = vadd.f32 %v5203, %v5204
  %v5209 = vadd.f32 %v5208, %v5205
  %v5210 = vadd.f32 %v5209, %v5206
  %v5211 = vadd.f32 %v5210, %v5207
  %v5212 = vrot.slane %v5211, 4
  %v5213 = vadd.f32 %v5211, %v5212
  %v5214 = vrot.slane %v5213, 2
  %v5215 = vadd.f32 %v5213, %v5214
  %v5216 = vrot.slane %v5215, 1
  %v5217 = vadd.f32 %v5215, %v5216
  %v5218 = vsel %vm2588, %v5202, %v5217
  %5219 = vrot.lane.b32.xlu0 %v5218, 4
  %v5220 = vpop.permute.xlu0 %5219
  %v5221 = vadd.f32 %v5218, %v5220
  %5222 = vrot.lane.b32.xlu0 %v5221, 8
  %v5223 = vpop.permute.xlu0 %5222
  %v5224 = vadd.f32 %v5221, %v5223
  %5225 = vrot.lane.b32.xlu0 %v5224, 16
  %v5226 = vpop.permute.xlu0 %5225
  %v5227 = vadd.f32 %v5224, %v5226
  %5228 = vrot.lane.b32.xlu0 %v5227, 32
  %v5229 = vpop.permute.xlu0 %5228
  %v5230 = vadd.f32 %v5227, %v5229
  %5231 = vrot.lane.b32.xlu0 %v5230, 64
  %v5232 = vpop.permute.xlu0 %5231
  %v5233 = vadd.f32 %v5230, %v5232
  %v5234 = vmul.f32 %v5233, 0.001953125
  %v5235 = vmul.f32 %v5234, %v5234
  %v5237 = vrot.slane %v5235, 7
  %v5239 = vsub.f32 %v5234, %v5237
  %v5240 = vmax.f32 %v5239, 0.0
  %v5241 = vlaneseq
  %v5242 = vshrl.u32 %v5241, 7
  %v5243 = vsub.s32 0, %v5242
  %v5244 = vrot.slane %v5234, %v5243
  %v5245 = vsub.f32 %v5188, %v5244
  %v5246 = vsub.f32 %v5189, %v5244
  %v5247 = vsub.f32 %v5190, %v5244
  %v5248 = vsub.f32 %v5191, %v5244
  %v5249 = vsub.f32 %v5192, %v5244
  %v5250 = vadd.f32 %v5240, 1e-05
  %v5251 = vrsqrt.pop %v5250
  %v5252 = vlaneseq
  %v5253 = vshrl.u32 %v5252, 7
  %v5254 = vsub.s32 1, %v5253
  %v5255 = vrot.slane %v5251, %v5254
  %v5256 = vmul.f32 %v5245, %v5255
  %v5257 = vmul.f32 %v5246, %v5255
  %v5258 = vmul.f32 %v5247, %v5255
  %v5259 = vmul.f32 %v5248, %v5255
  %v5260 = vmul.f32 %v5249, %v5255
  %v5261 = vlaneseq
  %v5262 = vshrl.u32 %v5261, 7
  %v5263 = vsub.s32 4, %v5262
  %v5264 = vrot.slane %v30, %v5263
  %v5265 = vmul.f32 %v5256, %v5264
  %v5266 = vmul.f32 %v5257, %v5264
  %v5267 = vmul.f32 %v5258, %v5264
  %v5268 = vmul.f32 %v5259, %v5264
  %v5269 = vmul.f32 %v5260, %v5264
  %v5270 = vlaneseq
  %v5271 = vshrl.u32 %v5270, 7
  %v5272 = vsub.s32 5, %v5271
  %v5273 = vrot.slane %v30, %v5272
  %v5274 = vadd.f32 %v5265, %v5273
  %v5275 = vadd.f32 %v5266, %v5273
  %v5276 = vadd.f32 %v5267, %v5273
  %v5277 = vadd.f32 %v5268, %v5273
  %v5278 = vadd.f32 %v5269, %v5273
  %v5279 = vmax.f32 %v5274, 0.0
  %v5280 = vmax.f32 %v5275, 0.0
  %v5281 = vmax.f32 %v5276, 0.0
  %v5282 = vmax.f32 %v5277, 0.0
  %v5283 = vmax.f32 %v5278, 0.0
  %v5284 = vmul.f32 %v5279, %v25
  %v5285 = vmul.f32 %v5280, %v26
  %v5286 = vmul.f32 %v5281, %v27
  %v5287 = vmul.f32 %v5282, %v28
  %v5288 = vmul.f32 %v5283, %v29
  %5289 = vst [vmem:[%s5] sm:$0xff] %v5284
  %5290 = vst [vmem:[%s5 + $0x8] sm:$0xff] %v5285
  %5291 = vst [vmem:[%s5 + $0x10] sm:$0xff] %v5286
  %5292 = vst [vmem:[%s5 + $0x18] sm:$0xff] %v5287
  %5293 = vst [vmem:[%s5 + $0x20] sm:$0xff] %v5288
  // Predicated region
  $region22: #{forward.1} parent=0 // pred_check
    _
  $region23: #{forward.1} parent=0 // pred_check_branch
    %5295 = sbr.rel (0) target = $region25
  $region24: #{forward.1} parent=0 // pred_region
    _
  $region25: #{forward.1} parent=0 // pred_fallthru
    _
  // Predicated region
  $region26: #{forward.1} parent=0 // pred_check
    _
  $region27: #{forward.1} parent=0 // pred_check_branch
    %5297 = sbr.rel (0) target = $region29
  $region28: #{forward.1} parent=0 // pred_region
    _
  $region29: #{forward.1} parent=0 // pred_fallthru
    _

</llo_original>
